<compile_context>
chip_gen: v5e
topology: v5e:2x2
jax: 0.10.0
libtpu: 0.0.40
codegen_flags: <defaults>
</compile_context>

<pallas_src>
import jax
import jax.numpy as jnp
import numpy as np
from jax.experimental import pallas as pl
from jax.experimental.pallas import tpu as pltpu

NUM_LAYERS = 10
RANGE_ADJUSTED = 60.0


def _qfunction_kernel(x_ref, wih0_ref, wih_rest_ref, whh_ref, b_ref, out_ref):
    # x_ref:        (T, D, B)        time-major concat(state, action), D in sublanes, B in lanes
    # wih0_ref:     (4, D)           layer-0 input weights (gate order i, f, g, o)
    # wih_rest_ref: (4, L-1)         layers 1..9 input weights (input size 1), gate-major
    # whh_ref:      (4, L)           recurrent weights (hidden size 1), gate-major
    # b_ref:        (4, L)           b_ih + b_hh, gate-major
    # out_ref:      (T, B)           sigmoid(lstm_out) * 60
    T, D, B = x_ref.shape

    x = x_ref[...]                                   # (T, D, B)
    w0 = wih0_ref[...]                               # (4, D)
    wih_rest = wih_rest_ref[...]                     # (4, L-1)
    whh = whh_ref[...]                               # (4, L)
    bias = b_ref[...]                                # (4, L)

    # ---- layer-0 input projection: D broadcast FMAs per step on the VPU (no MXU) ----
    w0_cols = [w0[:, d:d + 1] for d in range(D)]     # (4, 1) each, hoisted
    proj0 = []
    for t in range(T):
        xt = x[t]                                    # (D, B)
        p = w0_cols[0] * xt[0:1, :]
        for d in range(1, D):
            p = p + w0_cols[d] * xt[d:d + 1, :]
        proj0.append(p)                              # (4, B)

    def run_layer(in_proj, whh_col, b_col):
        # Fully unrolled time recurrence, h/c carried as values (register-resident).
        h = jnp.zeros((1, B), jnp.float32)
        c = jnp.zeros((1, B), jnp.float32)
        outs = []
        for t in range(T):
            gates = in_proj(t) + whh_col * h + b_col     # (4, B), gate-major i,f,g,o
            sg = jax.nn.sigmoid(gates)                   # one EUP pass -> i, f, o
            th = jnp.tanh(gates)                         # one EUP pass -> g
            c = sg[1:2, :] * c + sg[0:1, :] * th[2:3, :]
            h = sg[3:4, :] * jnp.tanh(c)
            outs.append(h)                               # (1, B)
        return outs

    # layer 0 (static indexing of per-layer constants: layer loop is unrolled)
    seq = run_layer(lambda t: proj0[t], whh[:, 0:1], bias[:, 0:1])

    # layers 1..9: input size 1 -> projection is a single FMA folded into the step
    for layer in range(1, NUM_LAYERS):
        prev = seq
        wih_col = wih_rest[:, layer - 1:layer]           # (4, 1)
        seq = run_layer(lambda t, p=prev, w=wih_col: w * p[t],
                        whh[:, layer:layer + 1], bias[:, layer:layer + 1])

    out = jnp.concatenate(seq, axis=0)                   # (T, B), single store
    out_ref[...] = jax.nn.sigmoid(out) * RANGE_ADJUSTED


def qfunction_forward(state, action, params):
    """Equivalent of QFunction.forward(state, action)."""
    wih0, wih_rest, whh, b = params
    x = jnp.concatenate([state, action], axis=2).astype(jnp.float32)  # (B, T, D)
    B, T, D = x.shape
    x_tdb = jnp.transpose(x, (1, 2, 0))                               # (T, D, B)

    out_tb = pl.pallas_call(
        _qfunction_kernel,
        out_shape=jax.ShapeDtypeStruct((T, B), jnp.float32),
        grid=(1,),
        in_specs=[
            pl.BlockSpec((T, D, B), lambda i: (0, 0, 0)),
            pl.BlockSpec((4, D), lambda i: (0, 0)),
            pl.BlockSpec((4, NUM_LAYERS - 1), lambda i: (0, 0)),
            pl.BlockSpec((4, NUM_LAYERS), lambda i: (0, 0)),
            pl.BlockSpec((4, NUM_LAYERS), lambda i: (0, 0)),
        ],
        out_specs=pl.BlockSpec((T, B), lambda i: (0, 0)),
        compiler_params=pltpu.CompilerParams(
            dimension_semantics=("arbitrary",)),
    )(x_tdb, wih0, wih_rest.T, whh.T, b.T)

    # matches torch.squeeze(lstm_out): (B, T, 1) -> (B, T)  (valid for B>1, T>1)
    # TODO(synk): torch.squeeze also drops B==1 / T==1 dims; this wrapper keeps (B, T).
    return out_tb.T


def init_params(key, state_dim, action_dim):
    """Deterministic synthetic LSTM parameters (PyTorch nn.LSTM shapes)."""
    D = state_dim + action_dim
    ks = jax.random.split(key, 4 * NUM_LAYERS)

    def u(k, shape):
        return jax.random.uniform(k, shape, jnp.float32, -0.5, 0.5)

    # PyTorch: weight_ih_l0 (4, D); weight_ih_l{k>0} (4, 1); weight_hh (4, 1);
    # bias_ih (4,); bias_hh (4,)  -- hidden_size = 1, gate order i, f, g, o.
    wih0 = u(ks[0], (4, D))
    wih_rest = jnp.stack([u(ks[4 * l], (4,)) for l in range(1, NUM_LAYERS)])  # (9, 4)
    whh = jnp.stack([u(ks[4 * l + 1], (4,)) for l in range(NUM_LAYERS)])      # (10, 4)
    b_ih = jnp.stack([u(ks[4 * l + 2], (4,)) for l in range(NUM_LAYERS)])
    b_hh = jnp.stack([u(ks[4 * l + 3], (4,)) for l in range(NUM_LAYERS)])
    return wih0, wih_rest, whh, b_ih + b_hh


def qfunction_ref(state, action, params):
    """Pure-JAX reference of the PyTorch forward (for correctness check)."""
    wih0, wih_rest, whh, b = params
    x = jnp.concatenate([state, action], axis=2)   # (B, T, D)
    B, T, _ = x.shape
    seq = x
    for l in range(NUM_LAYERS):
        wih = wih0 if l == 0 else wih_rest[l - 1][:, None]   # (4, in)
        w_hh = whh[l][:, None]                               # (4, 1)
        bias = b[l]                                          # (4,)
        h = jnp.zeros((B, 1), jnp.float32)
        c = jnp.zeros((B, 1), jnp.float32)
        outs = []
        for t in range(T):
            gates = seq[:, t, :] @ wih.T + h @ w_hh.T + bias
            i = jax.nn.sigmoid(gates[:, 0:1])
            f = jax.nn.sigmoid(gates[:, 1:2])
            g = jnp.tanh(gates[:, 2:3])
            o = jax.nn.sigmoid(gates[:, 3:4])
            c = f * c + i * g
            h = o * jnp.tanh(c)
            outs.append(h)
        seq = jnp.stack(outs, axis=1)                        # (B, T, 1)
    return jax.nn.sigmoid(seq[:, :, 0]) * RANGE_ADJUSTED


if __name__ == "__main__":
    B, T = 2, 8
    state_dim, action_dim = 6, 2

    key = jax.random.PRNGKey(0)
    k1, k2, k3 = jax.random.split(key, 3)
    state = jax.random.normal(k1, (B, T, state_dim), jnp.float32)
    action = jax.random.normal(k2, (B, T, action_dim), jnp.float32)
    params = init_params(k3, state_dim, action_dim)

    out = qfunction_forward(state, action, params)
    out = jax.block_until_ready(out)

    ref = qfunction_ref(state, action, params)
    np.testing.assert_allclose(np.asarray(out), np.asarray(ref), rtol=1e-4, atol=1e-3)
    assert out.shape == (B, T)
    print("KERNEL_OK")
</pallas_src>

<mosaic_0001>
module attributes {stable_mosaic.version = 11 : i64} {
  func.func @_qfunction_kernel(%arg0: i32, %arg1: memref<8x8x2xf32, #tpu.memory_space<vmem>>, %arg2: memref<4x8xf32, #tpu.memory_space<vmem>>, %arg3: memref<4x9xf32, #tpu.memory_space<vmem>>, %arg4: memref<4x10xf32, #tpu.memory_space<vmem>>, %arg5: memref<4x10xf32, #tpu.memory_space<vmem>>, %arg6: memref<8x2xf32, #tpu.memory_space<vmem>>) attributes {dimension_semantics = [#tpu.dimension_semantics<arbitrary>], iteration_bounds = array<i64: 1>, scalar_prefetch = 0 : i64, scratch_operands = 0 : i64, tpu.core_type = #tpu.core_type<tc>, window_params = [{pipeline_mode = #tpu.pipeline_mode<synchronous>, transform_indices = @transform_0, window_bounds = array<i64: 8, 8, 2>}, {pipeline_mode = #tpu.pipeline_mode<synchronous>, transform_indices = @transform_1, window_bounds = array<i64: 4, 8>}, {pipeline_mode = #tpu.pipeline_mode<synchronous>, transform_indices = @transform_2, window_bounds = array<i64: 4, 9>}, {pipeline_mode = #tpu.pipeline_mode<synchronous>, transform_indices = @transform_3, window_bounds = array<i64: 4, 10>}, {pipeline_mode = #tpu.pipeline_mode<synchronous>, transform_indices = @transform_4, window_bounds = array<i64: 4, 10>}, {pipeline_mode = #tpu.pipeline_mode<synchronous>, transform_indices = @transform_5, window_bounds = array<i64: 8, 2>}]} {
    %c0 = arith.constant 0 : index
    %c0_0 = arith.constant 0 : index
    %c0_1 = arith.constant 0 : index
    %0 = vector.load %arg1[%c0, %c0_0, %c0_1] : memref<8x8x2xf32, #tpu.memory_space<vmem>>, vector<8x8x2xf32>
    %c0_2 = arith.constant 0 : index
    %c0_3 = arith.constant 0 : index
    %1 = vector.load %arg2[%c0_2, %c0_3] : memref<4x8xf32, #tpu.memory_space<vmem>>, vector<4x8xf32>
    %c0_4 = arith.constant 0 : index
    %c0_5 = arith.constant 0 : index
    %2 = vector.load %arg3[%c0_4, %c0_5] : memref<4x9xf32, #tpu.memory_space<vmem>>, vector<4x9xf32>
    %c0_6 = arith.constant 0 : index
    %c0_7 = arith.constant 0 : index
    %3 = vector.load %arg4[%c0_6, %c0_7] : memref<4x10xf32, #tpu.memory_space<vmem>>, vector<4x10xf32>
    %c0_8 = arith.constant 0 : index
    %c0_9 = arith.constant 0 : index
    %4 = vector.load %arg5[%c0_8, %c0_9] : memref<4x10xf32, #tpu.memory_space<vmem>>, vector<4x10xf32>
    %5 = vector.extract_strided_slice %1 {offsets = [0, 0], sizes = [4, 1], strides = [1, 1]} : vector<4x8xf32> to vector<4x1xf32>
    %6 = vector.extract_strided_slice %1 {offsets = [0, 1], sizes = [4, 1], strides = [1, 1]} : vector<4x8xf32> to vector<4x1xf32>
    %7 = vector.extract_strided_slice %1 {offsets = [0, 2], sizes = [4, 1], strides = [1, 1]} : vector<4x8xf32> to vector<4x1xf32>
    %8 = vector.extract_strided_slice %1 {offsets = [0, 3], sizes = [4, 1], strides = [1, 1]} : vector<4x8xf32> to vector<4x1xf32>
    %9 = vector.extract_strided_slice %1 {offsets = [0, 4], sizes = [4, 1], strides = [1, 1]} : vector<4x8xf32> to vector<4x1xf32>
    %10 = vector.extract_strided_slice %1 {offsets = [0, 5], sizes = [4, 1], strides = [1, 1]} : vector<4x8xf32> to vector<4x1xf32>
    %11 = vector.extract_strided_slice %1 {offsets = [0, 6], sizes = [4, 1], strides = [1, 1]} : vector<4x8xf32> to vector<4x1xf32>
    %12 = vector.extract_strided_slice %1 {offsets = [0, 7], sizes = [4, 1], strides = [1, 1]} : vector<4x8xf32> to vector<4x1xf32>
    %13 = vector.extract_strided_slice %0 {offsets = [0, 0, 0], sizes = [1, 8, 2], strides = [1, 1, 1]} : vector<8x8x2xf32> to vector<1x8x2xf32>
    %14 = vector.shape_cast %13 : vector<1x8x2xf32> to vector<8x2xf32>
    %15 = vector.extract_strided_slice %14 {offsets = [0, 0], sizes = [1, 2], strides = [1, 1]} : vector<8x2xf32> to vector<1x2xf32>
    %16 = vector.broadcast %5 : vector<4x1xf32> to vector<4x2xf32>
    %17 = vector.broadcast %15 : vector<1x2xf32> to vector<4x2xf32>
    %18 = arith.mulf %16, %17 : vector<4x2xf32>
    %19 = vector.extract_strided_slice %14 {offsets = [1, 0], sizes = [1, 2], strides = [1, 1]} : vector<8x2xf32> to vector<1x2xf32>
    %20 = vector.broadcast %6 : vector<4x1xf32> to vector<4x2xf32>
    %21 = vector.broadcast %19 : vector<1x2xf32> to vector<4x2xf32>
    %22 = arith.mulf %20, %21 : vector<4x2xf32>
    %23 = arith.addf %18, %22 : vector<4x2xf32>
    %24 = vector.extract_strided_slice %14 {offsets = [2, 0], sizes = [1, 2], strides = [1, 1]} : vector<8x2xf32> to vector<1x2xf32>
    %25 = vector.broadcast %7 : vector<4x1xf32> to vector<4x2xf32>
    %26 = vector.broadcast %24 : vector<1x2xf32> to vector<4x2xf32>
    %27 = arith.mulf %25, %26 : vector<4x2xf32>
    %28 = arith.addf %23, %27 : vector<4x2xf32>
    %29 = vector.extract_strided_slice %14 {offsets = [3, 0], sizes = [1, 2], strides = [1, 1]} : vector<8x2xf32> to vector<1x2xf32>
    %30 = vector.broadcast %8 : vector<4x1xf32> to vector<4x2xf32>
    %31 = vector.broadcast %29 : vector<1x2xf32> to vector<4x2xf32>
    %32 = arith.mulf %30, %31 : vector<4x2xf32>
    %33 = arith.addf %28, %32 : vector<4x2xf32>
    %34 = vector.extract_strided_slice %14 {offsets = [4, 0], sizes = [1, 2], strides = [1, 1]} : vector<8x2xf32> to vector<1x2xf32>
    %35 = vector.broadcast %9 : vector<4x1xf32> to vector<4x2xf32>
    %36 = vector.broadcast %34 : vector<1x2xf32> to vector<4x2xf32>
    %37 = arith.mulf %35, %36 : vector<4x2xf32>
    %38 = arith.addf %33, %37 : vector<4x2xf32>
    %39 = vector.extract_strided_slice %14 {offsets = [5, 0], sizes = [1, 2], strides = [1, 1]} : vector<8x2xf32> to vector<1x2xf32>
    %40 = vector.broadcast %10 : vector<4x1xf32> to vector<4x2xf32>
    %41 = vector.broadcast %39 : vector<1x2xf32> to vector<4x2xf32>
    %42 = arith.mulf %40, %41 : vector<4x2xf32>
    %43 = arith.addf %38, %42 : vector<4x2xf32>
    %44 = vector.extract_strided_slice %14 {offsets = [6, 0], sizes = [1, 2], strides = [1, 1]} : vector<8x2xf32> to vector<1x2xf32>
    %45 = vector.broadcast %11 : vector<4x1xf32> to vector<4x2xf32>
    %46 = vector.broadcast %44 : vector<1x2xf32> to vector<4x2xf32>
    %47 = arith.mulf %45, %46 : vector<4x2xf32>
    %48 = arith.addf %43, %47 : vector<4x2xf32>
    %49 = vector.extract_strided_slice %14 {offsets = [7, 0], sizes = [1, 2], strides = [1, 1]} : vector<8x2xf32> to vector<1x2xf32>
    %50 = vector.broadcast %12 : vector<4x1xf32> to vector<4x2xf32>
    %51 = vector.broadcast %49 : vector<1x2xf32> to vector<4x2xf32>
    %52 = arith.mulf %50, %51 : vector<4x2xf32>
    %53 = arith.addf %48, %52 : vector<4x2xf32>
    %54 = vector.extract_strided_slice %0 {offsets = [1, 0, 0], sizes = [1, 8, 2], strides = [1, 1, 1]} : vector<8x8x2xf32> to vector<1x8x2xf32>
    %55 = vector.shape_cast %54 : vector<1x8x2xf32> to vector<8x2xf32>
    %56 = vector.extract_strided_slice %55 {offsets = [0, 0], sizes = [1, 2], strides = [1, 1]} : vector<8x2xf32> to vector<1x2xf32>
    %57 = vector.broadcast %5 : vector<4x1xf32> to vector<4x2xf32>
    %58 = vector.broadcast %56 : vector<1x2xf32> to vector<4x2xf32>
    %59 = arith.mulf %57, %58 : vector<4x2xf32>
    %60 = vector.extract_strided_slice %55 {offsets = [1, 0], sizes = [1, 2], strides = [1, 1]} : vector<8x2xf32> to vector<1x2xf32>
    %61 = vector.broadcast %6 : vector<4x1xf32> to vector<4x2xf32>
    %62 = vector.broadcast %60 : vector<1x2xf32> to vector<4x2xf32>
    %63 = arith.mulf %61, %62 : vector<4x2xf32>
    %64 = arith.addf %59, %63 : vector<4x2xf32>
    %65 = vector.extract_strided_slice %55 {offsets = [2, 0], sizes = [1, 2], strides = [1, 1]} : vector<8x2xf32> to vector<1x2xf32>
    %66 = vector.broadcast %7 : vector<4x1xf32> to vector<4x2xf32>
    %67 = vector.broadcast %65 : vector<1x2xf32> to vector<4x2xf32>
    %68 = arith.mulf %66, %67 : vector<4x2xf32>
    %69 = arith.addf %64, %68 : vector<4x2xf32>
    %70 = vector.extract_strided_slice %55 {offsets = [3, 0], sizes = [1, 2], strides = [1, 1]} : vector<8x2xf32> to vector<1x2xf32>
    %71 = vector.broadcast %8 : vector<4x1xf32> to vector<4x2xf32>
    %72 = vector.broadcast %70 : vector<1x2xf32> to vector<4x2xf32>
    %73 = arith.mulf %71, %72 : vector<4x2xf32>
    %74 = arith.addf %69, %73 : vector<4x2xf32>
    %75 = vector.extract_strided_slice %55 {offsets = [4, 0], sizes = [1, 2], strides = [1, 1]} : vector<8x2xf32> to vector<1x2xf32>
    %76 = vector.broadcast %9 : vector<4x1xf32> to vector<4x2xf32>
    %77 = vector.broadcast %75 : vector<1x2xf32> to vector<4x2xf32>
    %78 = arith.mulf %76, %77 : vector<4x2xf32>
    %79 = arith.addf %74, %78 : vector<4x2xf32>
    %80 = vector.extract_strided_slice %55 {offsets = [5, 0], sizes = [1, 2], strides = [1, 1]} : vector<8x2xf32> to vector<1x2xf32>
    %81 = vector.broadcast %10 : vector<4x1xf32> to vector<4x2xf32>
    %82 = vector.broadcast %80 : vector<1x2xf32> to vector<4x2xf32>
    %83 = arith.mulf %81, %82 : vector<4x2xf32>
    %84 = arith.addf %79, %83 : vector<4x2xf32>
    %85 = vector.extract_strided_slice %55 {offsets = [6, 0], sizes = [1, 2], strides = [1, 1]} : vector<8x2xf32> to vector<1x2xf32>
    %86 = vector.broadcast %11 : vector<4x1xf32> to vector<4x2xf32>
    %87 = vector.broadcast %85 : vector<1x2xf32> to vector<4x2xf32>
    %88 = arith.mulf %86, %87 : vector<4x2xf32>
    %89 = arith.addf %84, %88 : vector<4x2xf32>
    %90 = vector.extract_strided_slice %55 {offsets = [7, 0], sizes = [1, 2], strides = [1, 1]} : vector<8x2xf32> to vector<1x2xf32>
    %91 = vector.broadcast %12 : vector<4x1xf32> to vector<4x2xf32>
    %92 = vector.broadcast %90 : vector<1x2xf32> to vector<4x2xf32>
    %93 = arith.mulf %91, %92 : vector<4x2xf32>
    %94 = arith.addf %89, %93 : vector<4x2xf32>
    %95 = vector.extract_strided_slice %0 {offsets = [2, 0, 0], sizes = [1, 8, 2], strides = [1, 1, 1]} : vector<8x8x2xf32> to vector<1x8x2xf32>
    %96 = vector.shape_cast %95 : vector<1x8x2xf32> to vector<8x2xf32>
    %97 = vector.extract_strided_slice %96 {offsets = [0, 0], sizes = [1, 2], strides = [1, 1]} : vector<8x2xf32> to vector<1x2xf32>
    %98 = vector.broadcast %5 : vector<4x1xf32> to vector<4x2xf32>
    %99 = vector.broadcast %97 : vector<1x2xf32> to vector<4x2xf32>
    %100 = arith.mulf %98, %99 : vector<4x2xf32>
    %101 = vector.extract_strided_slice %96 {offsets = [1, 0], sizes = [1, 2], strides = [1, 1]} : vector<8x2xf32> to vector<1x2xf32>
    %102 = vector.broadcast %6 : vector<4x1xf32> to vector<4x2xf32>
    %103 = vector.broadcast %101 : vector<1x2xf32> to vector<4x2xf32>
    %104 = arith.mulf %102, %103 : vector<4x2xf32>
    %105 = arith.addf %100, %104 : vector<4x2xf32>
    %106 = vector.extract_strided_slice %96 {offsets = [2, 0], sizes = [1, 2], strides = [1, 1]} : vector<8x2xf32> to vector<1x2xf32>
    %107 = vector.broadcast %7 : vector<4x1xf32> to vector<4x2xf32>
    %108 = vector.broadcast %106 : vector<1x2xf32> to vector<4x2xf32>
    %109 = arith.mulf %107, %108 : vector<4x2xf32>
    %110 = arith.addf %105, %109 : vector<4x2xf32>
    %111 = vector.extract_strided_slice %96 {offsets = [3, 0], sizes = [1, 2], strides = [1, 1]} : vector<8x2xf32> to vector<1x2xf32>
    %112 = vector.broadcast %8 : vector<4x1xf32> to vector<4x2xf32>
    %113 = vector.broadcast %111 : vector<1x2xf32> to vector<4x2xf32>
    %114 = arith.mulf %112, %113 : vector<4x2xf32>
    %115 = arith.addf %110, %114 : vector<4x2xf32>
    %116 = vector.extract_strided_slice %96 {offsets = [4, 0], sizes = [1, 2], strides = [1, 1]} : vector<8x2xf32> to vector<1x2xf32>
    %117 = vector.broadcast %9 : vector<4x1xf32> to vector<4x2xf32>
    %118 = vector.broadcast %116 : vector<1x2xf32> to vector<4x2xf32>
    %119 = arith.mulf %117, %118 : vector<4x2xf32>
    %120 = arith.addf %115, %119 : vector<4x2xf32>
    %121 = vector.extract_strided_slice %96 {offsets = [5, 0], sizes = [1, 2], strides = [1, 1]} : vector<8x2xf32> to vector<1x2xf32>
    %122 = vector.broadcast %10 : vector<4x1xf32> to vector<4x2xf32>
    %123 = vector.broadcast %121 : vector<1x2xf32> to vector<4x2xf32>
    %124 = arith.mulf %122, %123 : vector<4x2xf32>
    %125 = arith.addf %120, %124 : vector<4x2xf32>
    %126 = vector.extract_strided_slice %96 {offsets = [6, 0], sizes = [1, 2], strides = [1, 1]} : vector<8x2xf32> to vector<1x2xf32>
    %127 = vector.broadcast %11 : vector<4x1xf32> to vector<4x2xf32>
    %128 = vector.broadcast %126 : vector<1x2xf32> to vector<4x2xf32>
    %129 = arith.mulf %127, %128 : vector<4x2xf32>
    %130 = arith.addf %125, %129 : vector<4x2xf32>
    %131 = vector.extract_strided_slice %96 {offsets = [7, 0], sizes = [1, 2], strides = [1, 1]} : vector<8x2xf32> to vector<1x2xf32>
    %132 = vector.broadcast %12 : vector<4x1xf32> to vector<4x2xf32>
    %133 = vector.broadcast %131 : vector<1x2xf32> to vector<4x2xf32>
    %134 = arith.mulf %132, %133 : vector<4x2xf32>
    %135 = arith.addf %130, %134 : vector<4x2xf32>
    %136 = vector.extract_strided_slice %0 {offsets = [3, 0, 0], sizes = [1, 8, 2], strides = [1, 1, 1]} : vector<8x8x2xf32> to vector<1x8x2xf32>
    %137 = vector.shape_cast %136 : vector<1x8x2xf32> to vector<8x2xf32>
    %138 = vector.extract_strided_slice %137 {offsets = [0, 0], sizes = [1, 2], strides = [1, 1]} : vector<8x2xf32> to vector<1x2xf32>
    %139 = vector.broadcast %5 : vector<4x1xf32> to vector<4x2xf32>
    %140 = vector.broadcast %138 : vector<1x2xf32> to vector<4x2xf32>
    %141 = arith.mulf %139, %140 : vector<4x2xf32>
    %142 = vector.extract_strided_slice %137 {offsets = [1, 0], sizes = [1, 2], strides = [1, 1]} : vector<8x2xf32> to vector<1x2xf32>
    %143 = vector.broadcast %6 : vector<4x1xf32> to vector<4x2xf32>
    %144 = vector.broadcast %142 : vector<1x2xf32> to vector<4x2xf32>
    %145 = arith.mulf %143, %144 : vector<4x2xf32>
    %146 = arith.addf %141, %145 : vector<4x2xf32>
    %147 = vector.extract_strided_slice %137 {offsets = [2, 0], sizes = [1, 2], strides = [1, 1]} : vector<8x2xf32> to vector<1x2xf32>
    %148 = vector.broadcast %7 : vector<4x1xf32> to vector<4x2xf32>
    %149 = vector.broadcast %147 : vector<1x2xf32> to vector<4x2xf32>
    %150 = arith.mulf %148, %149 : vector<4x2xf32>
    %151 = arith.addf %146, %150 : vector<4x2xf32>
    %152 = vector.extract_strided_slice %137 {offsets = [3, 0], sizes = [1, 2], strides = [1, 1]} : vector<8x2xf32> to vector<1x2xf32>
    %153 = vector.broadcast %8 : vector<4x1xf32> to vector<4x2xf32>
    %154 = vector.broadcast %152 : vector<1x2xf32> to vector<4x2xf32>
    %155 = arith.mulf %153, %154 : vector<4x2xf32>
    %156 = arith.addf %151, %155 : vector<4x2xf32>
    %157 = vector.extract_strided_slice %137 {offsets = [4, 0], sizes = [1, 2], strides = [1, 1]} : vector<8x2xf32> to vector<1x2xf32>
    %158 = vector.broadcast %9 : vector<4x1xf32> to vector<4x2xf32>
    %159 = vector.broadcast %157 : vector<1x2xf32> to vector<4x2xf32>
    %160 = arith.mulf %158, %159 : vector<4x2xf32>
    %161 = arith.addf %156, %160 : vector<4x2xf32>
    %162 = vector.extract_strided_slice %137 {offsets = [5, 0], sizes = [1, 2], strides = [1, 1]} : vector<8x2xf32> to vector<1x2xf32>
    %163 = vector.broadcast %10 : vector<4x1xf32> to vector<4x2xf32>
    %164 = vector.broadcast %162 : vector<1x2xf32> to vector<4x2xf32>
    %165 = arith.mulf %163, %164 : vector<4x2xf32>
    %166 = arith.addf %161, %165 : vector<4x2xf32>
    %167 = vector.extract_strided_slice %137 {offsets = [6, 0], sizes = [1, 2], strides = [1, 1]} : vector<8x2xf32> to vector<1x2xf32>
    %168 = vector.broadcast %11 : vector<4x1xf32> to vector<4x2xf32>
    %169 = vector.broadcast %167 : vector<1x2xf32> to vector<4x2xf32>
    %170 = arith.mulf %168, %169 : vector<4x2xf32>
    %171 = arith.addf %166, %170 : vector<4x2xf32>
    %172 = vector.extract_strided_slice %137 {offsets = [7, 0], sizes = [1, 2], strides = [1, 1]} : vector<8x2xf32> to vector<1x2xf32>
    %173 = vector.broadcast %12 : vector<4x1xf32> to vector<4x2xf32>
    %174 = vector.broadcast %172 : vector<1x2xf32> to vector<4x2xf32>
    %175 = arith.mulf %173, %174 : vector<4x2xf32>
    %176 = arith.addf %171, %175 : vector<4x2xf32>
    %177 = vector.extract_strided_slice %0 {offsets = [4, 0, 0], sizes = [1, 8, 2], strides = [1, 1, 1]} : vector<8x8x2xf32> to vector<1x8x2xf32>
    %178 = vector.shape_cast %177 : vector<1x8x2xf32> to vector<8x2xf32>
    %179 = vector.extract_strided_slice %178 {offsets = [0, 0], sizes = [1, 2], strides = [1, 1]} : vector<8x2xf32> to vector<1x2xf32>
    %180 = vector.broadcast %5 : vector<4x1xf32> to vector<4x2xf32>
    %181 = vector.broadcast %179 : vector<1x2xf32> to vector<4x2xf32>
    %182 = arith.mulf %180, %181 : vector<4x2xf32>
    %183 = vector.extract_strided_slice %178 {offsets = [1, 0], sizes = [1, 2], strides = [1, 1]} : vector<8x2xf32> to vector<1x2xf32>
    %184 = vector.broadcast %6 : vector<4x1xf32> to vector<4x2xf32>
    %185 = vector.broadcast %183 : vector<1x2xf32> to vector<4x2xf32>
    %186 = arith.mulf %184, %185 : vector<4x2xf32>
    %187 = arith.addf %182, %186 : vector<4x2xf32>
    %188 = vector.extract_strided_slice %178 {offsets = [2, 0], sizes = [1, 2], strides = [1, 1]} : vector<8x2xf32> to vector<1x2xf32>
    %189 = vector.broadcast %7 : vector<4x1xf32> to vector<4x2xf32>
    %190 = vector.broadcast %188 : vector<1x2xf32> to vector<4x2xf32>
    %191 = arith.mulf %189, %190 : vector<4x2xf32>
    %192 = arith.addf %187, %191 : vector<4x2xf32>
    %193 = vector.extract_strided_slice %178 {offsets = [3, 0], sizes = [1, 2], strides = [1, 1]} : vector<8x2xf32> to vector<1x2xf32>
    %194 = vector.broadcast %8 : vector<4x1xf32> to vector<4x2xf32>
    %195 = vector.broadcast %193 : vector<1x2xf32> to vector<4x2xf32>
    %196 = arith.mulf %194, %195 : vector<4x2xf32>
    %197 = arith.addf %192, %196 : vector<4x2xf32>
    %198 = vector.extract_strided_slice %178 {offsets = [4, 0], sizes = [1, 2], strides = [1, 1]} : vector<8x2xf32> to vector<1x2xf32>
    %199 = vector.broadcast %9 : vector<4x1xf32> to vector<4x2xf32>
    %200 = vector.broadcast %198 : vector<1x2xf32> to vector<4x2xf32>
    %201 = arith.mulf %199, %200 : vector<4x2xf32>
    %202 = arith.addf %197, %201 : vector<4x2xf32>
    %203 = vector.extract_strided_slice %178 {offsets = [5, 0], sizes = [1, 2], strides = [1, 1]} : vector<8x2xf32> to vector<1x2xf32>
    %204 = vector.broadcast %10 : vector<4x1xf32> to vector<4x2xf32>
    %205 = vector.broadcast %203 : vector<1x2xf32> to vector<4x2xf32>
    %206 = arith.mulf %204, %205 : vector<4x2xf32>
    %207 = arith.addf %202, %206 : vector<4x2xf32>
    %208 = vector.extract_strided_slice %178 {offsets = [6, 0], sizes = [1, 2], strides = [1, 1]} : vector<8x2xf32> to vector<1x2xf32>
    %209 = vector.broadcast %11 : vector<4x1xf32> to vector<4x2xf32>
    %210 = vector.broadcast %208 : vector<1x2xf32> to vector<4x2xf32>
    %211 = arith.mulf %209, %210 : vector<4x2xf32>
    %212 = arith.addf %207, %211 : vector<4x2xf32>
    %213 = vector.extract_strided_slice %178 {offsets = [7, 0], sizes = [1, 2], strides = [1, 1]} : vector<8x2xf32> to vector<1x2xf32>
    %214 = vector.broadcast %12 : vector<4x1xf32> to vector<4x2xf32>
    %215 = vector.broadcast %213 : vector<1x2xf32> to vector<4x2xf32>
    %216 = arith.mulf %214, %215 : vector<4x2xf32>
    %217 = arith.addf %212, %216 : vector<4x2xf32>
    %218 = vector.extract_strided_slice %0 {offsets = [5, 0, 0], sizes = [1, 8, 2], strides = [1, 1, 1]} : vector<8x8x2xf32> to vector<1x8x2xf32>
    %219 = vector.shape_cast %218 : vector<1x8x2xf32> to vector<8x2xf32>
    %220 = vector.extract_strided_slice %219 {offsets = [0, 0], sizes = [1, 2], strides = [1, 1]} : vector<8x2xf32> to vector<1x2xf32>
    %221 = vector.broadcast %5 : vector<4x1xf32> to vector<4x2xf32>
    %222 = vector.broadcast %220 : vector<1x2xf32> to vector<4x2xf32>
    %223 = arith.mulf %221, %222 : vector<4x2xf32>
    %224 = vector.extract_strided_slice %219 {offsets = [1, 0], sizes = [1, 2], strides = [1, 1]} : vector<8x2xf32> to vector<1x2xf32>
    %225 = vector.broadcast %6 : vector<4x1xf32> to vector<4x2xf32>
    %226 = vector.broadcast %224 : vector<1x2xf32> to vector<4x2xf32>
    %227 = arith.mulf %225, %226 : vector<4x2xf32>
    %228 = arith.addf %223, %227 : vector<4x2xf32>
    %229 = vector.extract_strided_slice %219 {offsets = [2, 0], sizes = [1, 2], strides = [1, 1]} : vector<8x2xf32> to vector<1x2xf32>
    %230 = vector.broadcast %7 : vector<4x1xf32> to vector<4x2xf32>
    %231 = vector.broadcast %229 : vector<1x2xf32> to vector<4x2xf32>
    %232 = arith.mulf %230, %231 : vector<4x2xf32>
    %233 = arith.addf %228, %232 : vector<4x2xf32>
    %234 = vector.extract_strided_slice %219 {offsets = [3, 0], sizes = [1, 2], strides = [1, 1]} : vector<8x2xf32> to vector<1x2xf32>
    %235 = vector.broadcast %8 : vector<4x1xf32> to vector<4x2xf32>
    %236 = vector.broadcast %234 : vector<1x2xf32> to vector<4x2xf32>
    %237 = arith.mulf %235, %236 : vector<4x2xf32>
    %238 = arith.addf %233, %237 : vector<4x2xf32>
    %239 = vector.extract_strided_slice %219 {offsets = [4, 0], sizes = [1, 2], strides = [1, 1]} : vector<8x2xf32> to vector<1x2xf32>
    %240 = vector.broadcast %9 : vector<4x1xf32> to vector<4x2xf32>
    %241 = vector.broadcast %239 : vector<1x2xf32> to vector<4x2xf32>
    %242 = arith.mulf %240, %241 : vector<4x2xf32>
    %243 = arith.addf %238, %242 : vector<4x2xf32>
    %244 = vector.extract_strided_slice %219 {offsets = [5, 0], sizes = [1, 2], strides = [1, 1]} : vector<8x2xf32> to vector<1x2xf32>
    %245 = vector.broadcast %10 : vector<4x1xf32> to vector<4x2xf32>
    %246 = vector.broadcast %244 : vector<1x2xf32> to vector<4x2xf32>
    %247 = arith.mulf %245, %246 : vector<4x2xf32>
    %248 = arith.addf %243, %247 : vector<4x2xf32>
    %249 = vector.extract_strided_slice %219 {offsets = [6, 0], sizes = [1, 2], strides = [1, 1]} : vector<8x2xf32> to vector<1x2xf32>
    %250 = vector.broadcast %11 : vector<4x1xf32> to vector<4x2xf32>
    %251 = vector.broadcast %249 : vector<1x2xf32> to vector<4x2xf32>
    %252 = arith.mulf %250, %251 : vector<4x2xf32>
    %253 = arith.addf %248, %252 : vector<4x2xf32>
    %254 = vector.extract_strided_slice %219 {offsets = [7, 0], sizes = [1, 2], strides = [1, 1]} : vector<8x2xf32> to vector<1x2xf32>
    %255 = vector.broadcast %12 : vector<4x1xf32> to vector<4x2xf32>
    %256 = vector.broadcast %254 : vector<1x2xf32> to vector<4x2xf32>
    %257 = arith.mulf %255, %256 : vector<4x2xf32>
    %258 = arith.addf %253, %257 : vector<4x2xf32>
    %259 = vector.extract_strided_slice %0 {offsets = [6, 0, 0], sizes = [1, 8, 2], strides = [1, 1, 1]} : vector<8x8x2xf32> to vector<1x8x2xf32>
    %260 = vector.shape_cast %259 : vector<1x8x2xf32> to vector<8x2xf32>
    %261 = vector.extract_strided_slice %260 {offsets = [0, 0], sizes = [1, 2], strides = [1, 1]} : vector<8x2xf32> to vector<1x2xf32>
    %262 = vector.broadcast %5 : vector<4x1xf32> to vector<4x2xf32>
    %263 = vector.broadcast %261 : vector<1x2xf32> to vector<4x2xf32>
    %264 = arith.mulf %262, %263 : vector<4x2xf32>
    %265 = vector.extract_strided_slice %260 {offsets = [1, 0], sizes = [1, 2], strides = [1, 1]} : vector<8x2xf32> to vector<1x2xf32>
    %266 = vector.broadcast %6 : vector<4x1xf32> to vector<4x2xf32>
    %267 = vector.broadcast %265 : vector<1x2xf32> to vector<4x2xf32>
    %268 = arith.mulf %266, %267 : vector<4x2xf32>
    %269 = arith.addf %264, %268 : vector<4x2xf32>
    %270 = vector.extract_strided_slice %260 {offsets = [2, 0], sizes = [1, 2], strides = [1, 1]} : vector<8x2xf32> to vector<1x2xf32>
    %271 = vector.broadcast %7 : vector<4x1xf32> to vector<4x2xf32>
    %272 = vector.broadcast %270 : vector<1x2xf32> to vector<4x2xf32>
    %273 = arith.mulf %271, %272 : vector<4x2xf32>
    %274 = arith.addf %269, %273 : vector<4x2xf32>
    %275 = vector.extract_strided_slice %260 {offsets = [3, 0], sizes = [1, 2], strides = [1, 1]} : vector<8x2xf32> to vector<1x2xf32>
    %276 = vector.broadcast %8 : vector<4x1xf32> to vector<4x2xf32>
    %277 = vector.broadcast %275 : vector<1x2xf32> to vector<4x2xf32>
    %278 = arith.mulf %276, %277 : vector<4x2xf32>
    %279 = arith.addf %274, %278 : vector<4x2xf32>
    %280 = vector.extract_strided_slice %260 {offsets = [4, 0], sizes = [1, 2], strides = [1, 1]} : vector<8x2xf32> to vector<1x2xf32>
    %281 = vector.broadcast %9 : vector<4x1xf32> to vector<4x2xf32>
    %282 = vector.broadcast %280 : vector<1x2xf32> to vector<4x2xf32>
    %283 = arith.mulf %281, %282 : vector<4x2xf32>
    %284 = arith.addf %279, %283 : vector<4x2xf32>
    %285 = vector.extract_strided_slice %260 {offsets = [5, 0], sizes = [1, 2], strides = [1, 1]} : vector<8x2xf32> to vector<1x2xf32>
    %286 = vector.broadcast %10 : vector<4x1xf32> to vector<4x2xf32>
    %287 = vector.broadcast %285 : vector<1x2xf32> to vector<4x2xf32>
    %288 = arith.mulf %286, %287 : vector<4x2xf32>
    %289 = arith.addf %284, %288 : vector<4x2xf32>
    %290 = vector.extract_strided_slice %260 {offsets = [6, 0], sizes = [1, 2], strides = [1, 1]} : vector<8x2xf32> to vector<1x2xf32>
    %291 = vector.broadcast %11 : vector<4x1xf32> to vector<4x2xf32>
    %292 = vector.broadcast %290 : vector<1x2xf32> to vector<4x2xf32>
    %293 = arith.mulf %291, %292 : vector<4x2xf32>
    %294 = arith.addf %289, %293 : vector<4x2xf32>
    %295 = vector.extract_strided_slice %260 {offsets = [7, 0], sizes = [1, 2], strides = [1, 1]} : vector<8x2xf32> to vector<1x2xf32>
    %296 = vector.broadcast %12 : vector<4x1xf32> to vector<4x2xf32>
    %297 = vector.broadcast %295 : vector<1x2xf32> to vector<4x2xf32>
    %298 = arith.mulf %296, %297 : vector<4x2xf32>
    %299 = arith.addf %294, %298 : vector<4x2xf32>
    %300 = vector.extract_strided_slice %0 {offsets = [7, 0, 0], sizes = [1, 8, 2], strides = [1, 1, 1]} : vector<8x8x2xf32> to vector<1x8x2xf32>
    %301 = vector.shape_cast %300 : vector<1x8x2xf32> to vector<8x2xf32>
    %302 = vector.extract_strided_slice %301 {offsets = [0, 0], sizes = [1, 2], strides = [1, 1]} : vector<8x2xf32> to vector<1x2xf32>
    %303 = vector.broadcast %5 : vector<4x1xf32> to vector<4x2xf32>
    %304 = vector.broadcast %302 : vector<1x2xf32> to vector<4x2xf32>
    %305 = arith.mulf %303, %304 : vector<4x2xf32>
    %306 = vector.extract_strided_slice %301 {offsets = [1, 0], sizes = [1, 2], strides = [1, 1]} : vector<8x2xf32> to vector<1x2xf32>
    %307 = vector.broadcast %6 : vector<4x1xf32> to vector<4x2xf32>
    %308 = vector.broadcast %306 : vector<1x2xf32> to vector<4x2xf32>
    %309 = arith.mulf %307, %308 : vector<4x2xf32>
    %310 = arith.addf %305, %309 : vector<4x2xf32>
    %311 = vector.extract_strided_slice %301 {offsets = [2, 0], sizes = [1, 2], strides = [1, 1]} : vector<8x2xf32> to vector<1x2xf32>
    %312 = vector.broadcast %7 : vector<4x1xf32> to vector<4x2xf32>
    %313 = vector.broadcast %311 : vector<1x2xf32> to vector<4x2xf32>
    %314 = arith.mulf %312, %313 : vector<4x2xf32>
    %315 = arith.addf %310, %314 : vector<4x2xf32>
    %316 = vector.extract_strided_slice %301 {offsets = [3, 0], sizes = [1, 2], strides = [1, 1]} : vector<8x2xf32> to vector<1x2xf32>
    %317 = vector.broadcast %8 : vector<4x1xf32> to vector<4x2xf32>
    %318 = vector.broadcast %316 : vector<1x2xf32> to vector<4x2xf32>
    %319 = arith.mulf %317, %318 : vector<4x2xf32>
    %320 = arith.addf %315, %319 : vector<4x2xf32>
    %321 = vector.extract_strided_slice %301 {offsets = [4, 0], sizes = [1, 2], strides = [1, 1]} : vector<8x2xf32> to vector<1x2xf32>
    %322 = vector.broadcast %9 : vector<4x1xf32> to vector<4x2xf32>
    %323 = vector.broadcast %321 : vector<1x2xf32> to vector<4x2xf32>
    %324 = arith.mulf %322, %323 : vector<4x2xf32>
    %325 = arith.addf %320, %324 : vector<4x2xf32>
    %326 = vector.extract_strided_slice %301 {offsets = [5, 0], sizes = [1, 2], strides = [1, 1]} : vector<8x2xf32> to vector<1x2xf32>
    %327 = vector.broadcast %10 : vector<4x1xf32> to vector<4x2xf32>
    %328 = vector.broadcast %326 : vector<1x2xf32> to vector<4x2xf32>
    %329 = arith.mulf %327, %328 : vector<4x2xf32>
    %330 = arith.addf %325, %329 : vector<4x2xf32>
    %331 = vector.extract_strided_slice %301 {offsets = [6, 0], sizes = [1, 2], strides = [1, 1]} : vector<8x2xf32> to vector<1x2xf32>
    %332 = vector.broadcast %11 : vector<4x1xf32> to vector<4x2xf32>
    %333 = vector.broadcast %331 : vector<1x2xf32> to vector<4x2xf32>
    %334 = arith.mulf %332, %333 : vector<4x2xf32>
    %335 = arith.addf %330, %334 : vector<4x2xf32>
    %336 = vector.extract_strided_slice %301 {offsets = [7, 0], sizes = [1, 2], strides = [1, 1]} : vector<8x2xf32> to vector<1x2xf32>
    %337 = vector.broadcast %12 : vector<4x1xf32> to vector<4x2xf32>
    %338 = vector.broadcast %336 : vector<1x2xf32> to vector<4x2xf32>
    %339 = arith.mulf %337, %338 : vector<4x2xf32>
    %340 = arith.addf %335, %339 : vector<4x2xf32>
    %341 = vector.extract_strided_slice %3 {offsets = [0, 0], sizes = [4, 1], strides = [1, 1]} : vector<4x10xf32> to vector<4x1xf32>
    %342 = vector.extract_strided_slice %4 {offsets = [0, 0], sizes = [4, 1], strides = [1, 1]} : vector<4x10xf32> to vector<4x1xf32>
    %cst = arith.constant 0.000000e+00 : f32
    %343 = vector.broadcast %cst : f32 to vector<1x2xf32>
    %cst_10 = arith.constant 0.000000e+00 : f32
    %344 = vector.broadcast %cst_10 : f32 to vector<1x2xf32>
    %345 = vector.broadcast %341 : vector<4x1xf32> to vector<4x2xf32>
    %346 = vector.broadcast %343 : vector<1x2xf32> to vector<4x2xf32>
    %347 = arith.mulf %345, %346 : vector<4x2xf32>
    %348 = arith.addf %53, %347 : vector<4x2xf32>
    %349 = vector.broadcast %342 : vector<4x1xf32> to vector<4x2xf32>
    %350 = arith.addf %348, %349 : vector<4x2xf32>
    %351 = arith.negf %350 : vector<4x2xf32>
    %352 = math.exp %351 : vector<4x2xf32>
    %cst_11 = arith.constant 1.000000e+00 : f32
    %353 = vector.broadcast %cst_11 : f32 to vector<4x2xf32>
    %354 = arith.addf %353, %352 : vector<4x2xf32>
    %355 = arith.divf %353, %354 : vector<4x2xf32>
    %356 = math.tanh %350 : vector<4x2xf32>
    %357 = vector.extract_strided_slice %355 {offsets = [1, 0], sizes = [1, 2], strides = [1, 1]} : vector<4x2xf32> to vector<1x2xf32>
    %358 = arith.mulf %357, %344 : vector<1x2xf32>
    %359 = vector.extract_strided_slice %355 {offsets = [0, 0], sizes = [1, 2], strides = [1, 1]} : vector<4x2xf32> to vector<1x2xf32>
    %360 = vector.extract_strided_slice %356 {offsets = [2, 0], sizes = [1, 2], strides = [1, 1]} : vector<4x2xf32> to vector<1x2xf32>
    %361 = arith.mulf %359, %360 : vector<1x2xf32>
    %362 = arith.addf %358, %361 : vector<1x2xf32>
    %363 = vector.extract_strided_slice %355 {offsets = [3, 0], sizes = [1, 2], strides = [1, 1]} : vector<4x2xf32> to vector<1x2xf32>
    %364 = math.tanh %362 : vector<1x2xf32>
    %365 = arith.mulf %363, %364 : vector<1x2xf32>
    %366 = vector.broadcast %341 : vector<4x1xf32> to vector<4x2xf32>
    %367 = vector.broadcast %365 : vector<1x2xf32> to vector<4x2xf32>
    %368 = arith.mulf %366, %367 : vector<4x2xf32>
    %369 = arith.addf %94, %368 : vector<4x2xf32>
    %370 = vector.broadcast %342 : vector<4x1xf32> to vector<4x2xf32>
    %371 = arith.addf %369, %370 : vector<4x2xf32>
    %372 = arith.negf %371 : vector<4x2xf32>
    %373 = math.exp %372 : vector<4x2xf32>
    %cst_12 = arith.constant 1.000000e+00 : f32
    %374 = vector.broadcast %cst_12 : f32 to vector<4x2xf32>
    %375 = arith.addf %374, %373 : vector<4x2xf32>
    %376 = arith.divf %374, %375 : vector<4x2xf32>
    %377 = math.tanh %371 : vector<4x2xf32>
    %378 = vector.extract_strided_slice %376 {offsets = [1, 0], sizes = [1, 2], strides = [1, 1]} : vector<4x2xf32> to vector<1x2xf32>
    %379 = arith.mulf %378, %362 : vector<1x2xf32>
    %380 = vector.extract_strided_slice %376 {offsets = [0, 0], sizes = [1, 2], strides = [1, 1]} : vector<4x2xf32> to vector<1x2xf32>
    %381 = vector.extract_strided_slice %377 {offsets = [2, 0], sizes = [1, 2], strides = [1, 1]} : vector<4x2xf32> to vector<1x2xf32>
    %382 = arith.mulf %380, %381 : vector<1x2xf32>
    %383 = arith.addf %379, %382 : vector<1x2xf32>
    %384 = vector.extract_strided_slice %376 {offsets = [3, 0], sizes = [1, 2], strides = [1, 1]} : vector<4x2xf32> to vector<1x2xf32>
    %385 = math.tanh %383 : vector<1x2xf32>
    %386 = arith.mulf %384, %385 : vector<1x2xf32>
    %387 = vector.broadcast %341 : vector<4x1xf32> to vector<4x2xf32>
    %388 = vector.broadcast %386 : vector<1x2xf32> to vector<4x2xf32>
    %389 = arith.mulf %387, %388 : vector<4x2xf32>
    %390 = arith.addf %135, %389 : vector<4x2xf32>
    %391 = vector.broadcast %342 : vector<4x1xf32> to vector<4x2xf32>
    %392 = arith.addf %390, %391 : vector<4x2xf32>
    %393 = arith.negf %392 : vector<4x2xf32>
    %394 = math.exp %393 : vector<4x2xf32>
    %cst_13 = arith.constant 1.000000e+00 : f32
    %395 = vector.broadcast %cst_13 : f32 to vector<4x2xf32>
    %396 = arith.addf %395, %394 : vector<4x2xf32>
    %397 = arith.divf %395, %396 : vector<4x2xf32>
    %398 = math.tanh %392 : vector<4x2xf32>
    %399 = vector.extract_strided_slice %397 {offsets = [1, 0], sizes = [1, 2], strides = [1, 1]} : vector<4x2xf32> to vector<1x2xf32>
    %400 = arith.mulf %399, %383 : vector<1x2xf32>
    %401 = vector.extract_strided_slice %397 {offsets = [0, 0], sizes = [1, 2], strides = [1, 1]} : vector<4x2xf32> to vector<1x2xf32>
    %402 = vector.extract_strided_slice %398 {offsets = [2, 0], sizes = [1, 2], strides = [1, 1]} : vector<4x2xf32> to vector<1x2xf32>
    %403 = arith.mulf %401, %402 : vector<1x2xf32>
    %404 = arith.addf %400, %403 : vector<1x2xf32>
    %405 = vector.extract_strided_slice %397 {offsets = [3, 0], sizes = [1, 2], strides = [1, 1]} : vector<4x2xf32> to vector<1x2xf32>
    %406 = math.tanh %404 : vector<1x2xf32>
    %407 = arith.mulf %405, %406 : vector<1x2xf32>
    %408 = vector.broadcast %341 : vector<4x1xf32> to vector<4x2xf32>
    %409 = vector.broadcast %407 : vector<1x2xf32> to vector<4x2xf32>
    %410 = arith.mulf %408, %409 : vector<4x2xf32>
    %411 = arith.addf %176, %410 : vector<4x2xf32>
    %412 = vector.broadcast %342 : vector<4x1xf32> to vector<4x2xf32>
    %413 = arith.addf %411, %412 : vector<4x2xf32>
    %414 = arith.negf %413 : vector<4x2xf32>
    %415 = math.exp %414 : vector<4x2xf32>
    %cst_14 = arith.constant 1.000000e+00 : f32
    %416 = vector.broadcast %cst_14 : f32 to vector<4x2xf32>
    %417 = arith.addf %416, %415 : vector<4x2xf32>
    %418 = arith.divf %416, %417 : vector<4x2xf32>
    %419 = math.tanh %413 : vector<4x2xf32>
    %420 = vector.extract_strided_slice %418 {offsets = [1, 0], sizes = [1, 2], strides = [1, 1]} : vector<4x2xf32> to vector<1x2xf32>
    %421 = arith.mulf %420, %404 : vector<1x2xf32>
    %422 = vector.extract_strided_slice %418 {offsets = [0, 0], sizes = [1, 2], strides = [1, 1]} : vector<4x2xf32> to vector<1x2xf32>
    %423 = vector.extract_strided_slice %419 {offsets = [2, 0], sizes = [1, 2], strides = [1, 1]} : vector<4x2xf32> to vector<1x2xf32>
    %424 = arith.mulf %422, %423 : vector<1x2xf32>
    %425 = arith.addf %421, %424 : vector<1x2xf32>
    %426 = vector.extract_strided_slice %418 {offsets = [3, 0], sizes = [1, 2], strides = [1, 1]} : vector<4x2xf32> to vector<1x2xf32>
    %427 = math.tanh %425 : vector<1x2xf32>
    %428 = arith.mulf %426, %427 : vector<1x2xf32>
    %429 = vector.broadcast %341 : vector<4x1xf32> to vector<4x2xf32>
    %430 = vector.broadcast %428 : vector<1x2xf32> to vector<4x2xf32>
    %431 = arith.mulf %429, %430 : vector<4x2xf32>
    %432 = arith.addf %217, %431 : vector<4x2xf32>
    %433 = vector.broadcast %342 : vector<4x1xf32> to vector<4x2xf32>
    %434 = arith.addf %432, %433 : vector<4x2xf32>
    %435 = arith.negf %434 : vector<4x2xf32>
    %436 = math.exp %435 : vector<4x2xf32>
    %cst_15 = arith.constant 1.000000e+00 : f32
    %437 = vector.broadcast %cst_15 : f32 to vector<4x2xf32>
    %438 = arith.addf %437, %436 : vector<4x2xf32>
    %439 = arith.divf %437, %438 : vector<4x2xf32>
    %440 = math.tanh %434 : vector<4x2xf32>
    %441 = vector.extract_strided_slice %439 {offsets = [1, 0], sizes = [1, 2], strides = [1, 1]} : vector<4x2xf32> to vector<1x2xf32>
    %442 = arith.mulf %441, %425 : vector<1x2xf32>
    %443 = vector.extract_strided_slice %439 {offsets = [0, 0], sizes = [1, 2], strides = [1, 1]} : vector<4x2xf32> to vector<1x2xf32>
    %444 = vector.extract_strided_slice %440 {offsets = [2, 0], sizes = [1, 2], strides = [1, 1]} : vector<4x2xf32> to vector<1x2xf32>
    %445 = arith.mulf %443, %444 : vector<1x2xf32>
    %446 = arith.addf %442, %445 : vector<1x2xf32>
    %447 = vector.extract_strided_slice %439 {offsets = [3, 0], sizes = [1, 2], strides = [1, 1]} : vector<4x2xf32> to vector<1x2xf32>
    %448 = math.tanh %446 : vector<1x2xf32>
    %449 = arith.mulf %447, %448 : vector<1x2xf32>
    %450 = vector.broadcast %341 : vector<4x1xf32> to vector<4x2xf32>
    %451 = vector.broadcast %449 : vector<1x2xf32> to vector<4x2xf32>
    %452 = arith.mulf %450, %451 : vector<4x2xf32>
    %453 = arith.addf %258, %452 : vector<4x2xf32>
    %454 = vector.broadcast %342 : vector<4x1xf32> to vector<4x2xf32>
    %455 = arith.addf %453, %454 : vector<4x2xf32>
    %456 = arith.negf %455 : vector<4x2xf32>
    %457 = math.exp %456 : vector<4x2xf32>
    %cst_16 = arith.constant 1.000000e+00 : f32
    %458 = vector.broadcast %cst_16 : f32 to vector<4x2xf32>
    %459 = arith.addf %458, %457 : vector<4x2xf32>
    %460 = arith.divf %458, %459 : vector<4x2xf32>
    %461 = math.tanh %455 : vector<4x2xf32>
    %462 = vector.extract_strided_slice %460 {offsets = [1, 0], sizes = [1, 2], strides = [1, 1]} : vector<4x2xf32> to vector<1x2xf32>
    %463 = arith.mulf %462, %446 : vector<1x2xf32>
    %464 = vector.extract_strided_slice %460 {offsets = [0, 0], sizes = [1, 2], strides = [1, 1]} : vector<4x2xf32> to vector<1x2xf32>
    %465 = vector.extract_strided_slice %461 {offsets = [2, 0], sizes = [1, 2], strides = [1, 1]} : vector<4x2xf32> to vector<1x2xf32>
    %466 = arith.mulf %464, %465 : vector<1x2xf32>
    %467 = arith.addf %463, %466 : vector<1x2xf32>
    %468 = vector.extract_strided_slice %460 {offsets = [3, 0], sizes = [1, 2], strides = [1, 1]} : vector<4x2xf32> to vector<1x2xf32>
    %469 = math.tanh %467 : vector<1x2xf32>
    %470 = arith.mulf %468, %469 : vector<1x2xf32>
    %471 = vector.broadcast %341 : vector<4x1xf32> to vector<4x2xf32>
    %472 = vector.broadcast %470 : vector<1x2xf32> to vector<4x2xf32>
    %473 = arith.mulf %471, %472 : vector<4x2xf32>
    %474 = arith.addf %299, %473 : vector<4x2xf32>
    %475 = vector.broadcast %342 : vector<4x1xf32> to vector<4x2xf32>
    %476 = arith.addf %474, %475 : vector<4x2xf32>
    %477 = arith.negf %476 : vector<4x2xf32>
    %478 = math.exp %477 : vector<4x2xf32>
    %cst_17 = arith.constant 1.000000e+00 : f32
    %479 = vector.broadcast %cst_17 : f32 to vector<4x2xf32>
    %480 = arith.addf %479, %478 : vector<4x2xf32>
    %481 = arith.divf %479, %480 : vector<4x2xf32>
    %482 = math.tanh %476 : vector<4x2xf32>
    %483 = vector.extract_strided_slice %481 {offsets = [1, 0], sizes = [1, 2], strides = [1, 1]} : vector<4x2xf32> to vector<1x2xf32>
    %484 = arith.mulf %483, %467 : vector<1x2xf32>
    %485 = vector.extract_strided_slice %481 {offsets = [0, 0], sizes = [1, 2], strides = [1, 1]} : vector<4x2xf32> to vector<1x2xf32>
    %486 = vector.extract_strided_slice %482 {offsets = [2, 0], sizes = [1, 2], strides = [1, 1]} : vector<4x2xf32> to vector<1x2xf32>
    %487 = arith.mulf %485, %486 : vector<1x2xf32>
    %488 = arith.addf %484, %487 : vector<1x2xf32>
    %489 = vector.extract_strided_slice %481 {offsets = [3, 0], sizes = [1, 2], strides = [1, 1]} : vector<4x2xf32> to vector<1x2xf32>
    %490 = math.tanh %488 : vector<1x2xf32>
    %491 = arith.mulf %489, %490 : vector<1x2xf32>
    %492 = vector.broadcast %341 : vector<4x1xf32> to vector<4x2xf32>
    %493 = vector.broadcast %491 : vector<1x2xf32> to vector<4x2xf32>
    %494 = arith.mulf %492, %493 : vector<4x2xf32>
    %495 = arith.addf %340, %494 : vector<4x2xf32>
    %496 = vector.broadcast %342 : vector<4x1xf32> to vector<4x2xf32>
    %497 = arith.addf %495, %496 : vector<4x2xf32>
    %498 = arith.negf %497 : vector<4x2xf32>
    %499 = math.exp %498 : vector<4x2xf32>
    %cst_18 = arith.constant 1.000000e+00 : f32
    %500 = vector.broadcast %cst_18 : f32 to vector<4x2xf32>
    %501 = arith.addf %500, %499 : vector<4x2xf32>
    %502 = arith.divf %500, %501 : vector<4x2xf32>
    %503 = math.tanh %497 : vector<4x2xf32>
    %504 = vector.extract_strided_slice %502 {offsets = [1, 0], sizes = [1, 2], strides = [1, 1]} : vector<4x2xf32> to vector<1x2xf32>
    %505 = arith.mulf %504, %488 : vector<1x2xf32>
    %506 = vector.extract_strided_slice %502 {offsets = [0, 0], sizes = [1, 2], strides = [1, 1]} : vector<4x2xf32> to vector<1x2xf32>
    %507 = vector.extract_strided_slice %503 {offsets = [2, 0], sizes = [1, 2], strides = [1, 1]} : vector<4x2xf32> to vector<1x2xf32>
    %508 = arith.mulf %506, %507 : vector<1x2xf32>
    %509 = arith.addf %505, %508 : vector<1x2xf32>
    %510 = vector.extract_strided_slice %502 {offsets = [3, 0], sizes = [1, 2], strides = [1, 1]} : vector<4x2xf32> to vector<1x2xf32>
    %511 = math.tanh %509 : vector<1x2xf32>
    %512 = arith.mulf %510, %511 : vector<1x2xf32>
    %513 = vector.extract_strided_slice %2 {offsets = [0, 0], sizes = [4, 1], strides = [1, 1]} : vector<4x9xf32> to vector<4x1xf32>
    %514 = vector.extract_strided_slice %3 {offsets = [0, 1], sizes = [4, 1], strides = [1, 1]} : vector<4x10xf32> to vector<4x1xf32>
    %515 = vector.extract_strided_slice %4 {offsets = [0, 1], sizes = [4, 1], strides = [1, 1]} : vector<4x10xf32> to vector<4x1xf32>
    %cst_19 = arith.constant 0.000000e+00 : f32
    %516 = vector.broadcast %cst_19 : f32 to vector<1x2xf32>
    %cst_20 = arith.constant 0.000000e+00 : f32
    %517 = vector.broadcast %cst_20 : f32 to vector<1x2xf32>
    %518 = vector.broadcast %513 : vector<4x1xf32> to vector<4x2xf32>
    %519 = vector.broadcast %365 : vector<1x2xf32> to vector<4x2xf32>
    %520 = arith.mulf %518, %519 : vector<4x2xf32>
    %521 = vector.broadcast %514 : vector<4x1xf32> to vector<4x2xf32>
    %522 = vector.broadcast %516 : vector<1x2xf32> to vector<4x2xf32>
    %523 = arith.mulf %521, %522 : vector<4x2xf32>
    %524 = arith.addf %520, %523 : vector<4x2xf32>
    %525 = vector.broadcast %515 : vector<4x1xf32> to vector<4x2xf32>
    %526 = arith.addf %524, %525 : vector<4x2xf32>
    %527 = arith.negf %526 : vector<4x2xf32>
    %528 = math.exp %527 : vector<4x2xf32>
    %cst_21 = arith.constant 1.000000e+00 : f32
    %529 = vector.broadcast %cst_21 : f32 to vector<4x2xf32>
    %530 = arith.addf %529, %528 : vector<4x2xf32>
    %531 = arith.divf %529, %530 : vector<4x2xf32>
    %532 = math.tanh %526 : vector<4x2xf32>
    %533 = vector.extract_strided_slice %531 {offsets = [1, 0], sizes = [1, 2], strides = [1, 1]} : vector<4x2xf32> to vector<1x2xf32>
    %534 = arith.mulf %533, %517 : vector<1x2xf32>
    %535 = vector.extract_strided_slice %531 {offsets = [0, 0], sizes = [1, 2], strides = [1, 1]} : vector<4x2xf32> to vector<1x2xf32>
    %536 = vector.extract_strided_slice %532 {offsets = [2, 0], sizes = [1, 2], strides = [1, 1]} : vector<4x2xf32> to vector<1x2xf32>
    %537 = arith.mulf %535, %536 : vector<1x2xf32>
    %538 = arith.addf %534, %537 : vector<1x2xf32>
    %539 = vector.extract_strided_slice %531 {offsets = [3, 0], sizes = [1, 2], strides = [1, 1]} : vector<4x2xf32> to vector<1x2xf32>
    %540 = math.tanh %538 : vector<1x2xf32>
    %541 = arith.mulf %539, %540 : vector<1x2xf32>
    %542 = vector.broadcast %513 : vector<4x1xf32> to vector<4x2xf32>
    %543 = vector.broadcast %386 : vector<1x2xf32> to vector<4x2xf32>
    %544 = arith.mulf %542, %543 : vector<4x2xf32>
    %545 = vector.broadcast %514 : vector<4x1xf32> to vector<4x2xf32>
    %546 = vector.broadcast %541 : vector<1x2xf32> to vector<4x2xf32>
    %547 = arith.mulf %545, %546 : vector<4x2xf32>
    %548 = arith.addf %544, %547 : vector<4x2xf32>
    %549 = vector.broadcast %515 : vector<4x1xf32> to vector<4x2xf32>
    %550 = arith.addf %548, %549 : vector<4x2xf32>
    %551 = arith.negf %550 : vector<4x2xf32>
    %552 = math.exp %551 : vector<4x2xf32>
    %cst_22 = arith.constant 1.000000e+00 : f32
    %553 = vector.broadcast %cst_22 : f32 to vector<4x2xf32>
    %554 = arith.addf %553, %552 : vector<4x2xf32>
    %555 = arith.divf %553, %554 : vector<4x2xf32>
    %556 = math.tanh %550 : vector<4x2xf32>
    %557 = vector.extract_strided_slice %555 {offsets = [1, 0], sizes = [1, 2], strides = [1, 1]} : vector<4x2xf32> to vector<1x2xf32>
    %558 = arith.mulf %557, %538 : vector<1x2xf32>
    %559 = vector.extract_strided_slice %555 {offsets = [0, 0], sizes = [1, 2], strides = [1, 1]} : vector<4x2xf32> to vector<1x2xf32>
    %560 = vector.extract_strided_slice %556 {offsets = [2, 0], sizes = [1, 2], strides = [1, 1]} : vector<4x2xf32> to vector<1x2xf32>
    %561 = arith.mulf %559, %560 : vector<1x2xf32>
    %562 = arith.addf %558, %561 : vector<1x2xf32>
    %563 = vector.extract_strided_slice %555 {offsets = [3, 0], sizes = [1, 2], strides = [1, 1]} : vector<4x2xf32> to vector<1x2xf32>
    %564 = math.tanh %562 : vector<1x2xf32>
    %565 = arith.mulf %563, %564 : vector<1x2xf32>
    %566 = vector.broadcast %513 : vector<4x1xf32> to vector<4x2xf32>
    %567 = vector.broadcast %407 : vector<1x2xf32> to vector<4x2xf32>
    %568 = arith.mulf %566, %567 : vector<4x2xf32>
    %569 = vector.broadcast %514 : vector<4x1xf32> to vector<4x2xf32>
    %570 = vector.broadcast %565 : vector<1x2xf32> to vector<4x2xf32>
    %571 = arith.mulf %569, %570 : vector<4x2xf32>
    %572 = arith.addf %568, %571 : vector<4x2xf32>
    %573 = vector.broadcast %515 : vector<4x1xf32> to vector<4x2xf32>
    %574 = arith.addf %572, %573 : vector<4x2xf32>
    %575 = arith.negf %574 : vector<4x2xf32>
    %576 = math.exp %575 : vector<4x2xf32>
    %cst_23 = arith.constant 1.000000e+00 : f32
    %577 = vector.broadcast %cst_23 : f32 to vector<4x2xf32>
    %578 = arith.addf %577, %576 : vector<4x2xf32>
    %579 = arith.divf %577, %578 : vector<4x2xf32>
    %580 = math.tanh %574 : vector<4x2xf32>
    %581 = vector.extract_strided_slice %579 {offsets = [1, 0], sizes = [1, 2], strides = [1, 1]} : vector<4x2xf32> to vector<1x2xf32>
    %582 = arith.mulf %581, %562 : vector<1x2xf32>
    %583 = vector.extract_strided_slice %579 {offsets = [0, 0], sizes = [1, 2], strides = [1, 1]} : vector<4x2xf32> to vector<1x2xf32>
    %584 = vector.extract_strided_slice %580 {offsets = [2, 0], sizes = [1, 2], strides = [1, 1]} : vector<4x2xf32> to vector<1x2xf32>
    %585 = arith.mulf %583, %584 : vector<1x2xf32>
    %586 = arith.addf %582, %585 : vector<1x2xf32>
    %587 = vector.extract_strided_slice %579 {offsets = [3, 0], sizes = [1, 2], strides = [1, 1]} : vector<4x2xf32> to vector<1x2xf32>
    %588 = math.tanh %586 : vector<1x2xf32>
    %589 = arith.mulf %587, %588 : vector<1x2xf32>
    %590 = vector.broadcast %513 : vector<4x1xf32> to vector<4x2xf32>
    %591 = vector.broadcast %428 : vector<1x2xf32> to vector<4x2xf32>
    %592 = arith.mulf %590, %591 : vector<4x2xf32>
    %593 = vector.broadcast %514 : vector<4x1xf32> to vector<4x2xf32>
    %594 = vector.broadcast %589 : vector<1x2xf32> to vector<4x2xf32>
    %595 = arith.mulf %593, %594 : vector<4x2xf32>
    %596 = arith.addf %592, %595 : vector<4x2xf32>
    %597 = vector.broadcast %515 : vector<4x1xf32> to vector<4x2xf32>
    %598 = arith.addf %596, %597 : vector<4x2xf32>
    %599 = arith.negf %598 : vector<4x2xf32>
    %600 = math.exp %599 : vector<4x2xf32>
    %cst_24 = arith.constant 1.000000e+00 : f32
    %601 = vector.broadcast %cst_24 : f32 to vector<4x2xf32>
    %602 = arith.addf %601, %600 : vector<4x2xf32>
    %603 = arith.divf %601, %602 : vector<4x2xf32>
    %604 = math.tanh %598 : vector<4x2xf32>
    %605 = vector.extract_strided_slice %603 {offsets = [1, 0], sizes = [1, 2], strides = [1, 1]} : vector<4x2xf32> to vector<1x2xf32>
    %606 = arith.mulf %605, %586 : vector<1x2xf32>
    %607 = vector.extract_strided_slice %603 {offsets = [0, 0], sizes = [1, 2], strides = [1, 1]} : vector<4x2xf32> to vector<1x2xf32>
    %608 = vector.extract_strided_slice %604 {offsets = [2, 0], sizes = [1, 2], strides = [1, 1]} : vector<4x2xf32> to vector<1x2xf32>
    %609 = arith.mulf %607, %608 : vector<1x2xf32>
    %610 = arith.addf %606, %609 : vector<1x2xf32>
    %611 = vector.extract_strided_slice %603 {offsets = [3, 0], sizes = [1, 2], strides = [1, 1]} : vector<4x2xf32> to vector<1x2xf32>
    %612 = math.tanh %610 : vector<1x2xf32>
    %613 = arith.mulf %611, %612 : vector<1x2xf32>
    %614 = vector.broadcast %513 : vector<4x1xf32> to vector<4x2xf32>
    %615 = vector.broadcast %449 : vector<1x2xf32> to vector<4x2xf32>
    %616 = arith.mulf %614, %615 : vector<4x2xf32>
    %617 = vector.broadcast %514 : vector<4x1xf32> to vector<4x2xf32>
    %618 = vector.broadcast %613 : vector<1x2xf32> to vector<4x2xf32>
    %619 = arith.mulf %617, %618 : vector<4x2xf32>
    %620 = arith.addf %616, %619 : vector<4x2xf32>
    %621 = vector.broadcast %515 : vector<4x1xf32> to vector<4x2xf32>
    %622 = arith.addf %620, %621 : vector<4x2xf32>
    %623 = arith.negf %622 : vector<4x2xf32>
    %624 = math.exp %623 : vector<4x2xf32>
    %cst_25 = arith.constant 1.000000e+00 : f32
    %625 = vector.broadcast %cst_25 : f32 to vector<4x2xf32>
    %626 = arith.addf %625, %624 : vector<4x2xf32>
    %627 = arith.divf %625, %626 : vector<4x2xf32>
    %628 = math.tanh %622 : vector<4x2xf32>
    %629 = vector.extract_strided_slice %627 {offsets = [1, 0], sizes = [1, 2], strides = [1, 1]} : vector<4x2xf32> to vector<1x2xf32>
    %630 = arith.mulf %629, %610 : vector<1x2xf32>
    %631 = vector.extract_strided_slice %627 {offsets = [0, 0], sizes = [1, 2], strides = [1, 1]} : vector<4x2xf32> to vector<1x2xf32>
    %632 = vector.extract_strided_slice %628 {offsets = [2, 0], sizes = [1, 2], strides = [1, 1]} : vector<4x2xf32> to vector<1x2xf32>
    %633 = arith.mulf %631, %632 : vector<1x2xf32>
    %634 = arith.addf %630, %633 : vector<1x2xf32>
    %635 = vector.extract_strided_slice %627 {offsets = [3, 0], sizes = [1, 2], strides = [1, 1]} : vector<4x2xf32> to vector<1x2xf32>
    %636 = math.tanh %634 : vector<1x2xf32>
    %637 = arith.mulf %635, %636 : vector<1x2xf32>
    %638 = vector.broadcast %513 : vector<4x1xf32> to vector<4x2xf32>
    %639 = vector.broadcast %470 : vector<1x2xf32> to vector<4x2xf32>
    %640 = arith.mulf %638, %639 : vector<4x2xf32>
    %641 = vector.broadcast %514 : vector<4x1xf32> to vector<4x2xf32>
    %642 = vector.broadcast %637 : vector<1x2xf32> to vector<4x2xf32>
    %643 = arith.mulf %641, %642 : vector<4x2xf32>
    %644 = arith.addf %640, %643 : vector<4x2xf32>
    %645 = vector.broadcast %515 : vector<4x1xf32> to vector<4x2xf32>
    %646 = arith.addf %644, %645 : vector<4x2xf32>
    %647 = arith.negf %646 : vector<4x2xf32>
    %648 = math.exp %647 : vector<4x2xf32>
    %cst_26 = arith.constant 1.000000e+00 : f32
    %649 = vector.broadcast %cst_26 : f32 to vector<4x2xf32>
    %650 = arith.addf %649, %648 : vector<4x2xf32>
    %651 = arith.divf %649, %650 : vector<4x2xf32>
    %652 = math.tanh %646 : vector<4x2xf32>
    %653 = vector.extract_strided_slice %651 {offsets = [1, 0], sizes = [1, 2], strides = [1, 1]} : vector<4x2xf32> to vector<1x2xf32>
    %654 = arith.mulf %653, %634 : vector<1x2xf32>
    %655 = vector.extract_strided_slice %651 {offsets = [0, 0], sizes = [1, 2], strides = [1, 1]} : vector<4x2xf32> to vector<1x2xf32>
    %656 = vector.extract_strided_slice %652 {offsets = [2, 0], sizes = [1, 2], strides = [1, 1]} : vector<4x2xf32> to vector<1x2xf32>
    %657 = arith.mulf %655, %656 : vector<1x2xf32>
    %658 = arith.addf %654, %657 : vector<1x2xf32>
    %659 = vector.extract_strided_slice %651 {offsets = [3, 0], sizes = [1, 2], strides = [1, 1]} : vector<4x2xf32> to vector<1x2xf32>
    %660 = math.tanh %658 : vector<1x2xf32>
    %661 = arith.mulf %659, %660 : vector<1x2xf32>
    %662 = vector.broadcast %513 : vector<4x1xf32> to vector<4x2xf32>
    %663 = vector.broadcast %491 : vector<1x2xf32> to vector<4x2xf32>
    %664 = arith.mulf %662, %663 : vector<4x2xf32>
    %665 = vector.broadcast %514 : vector<4x1xf32> to vector<4x2xf32>
    %666 = vector.broadcast %661 : vector<1x2xf32> to vector<4x2xf32>
    %667 = arith.mulf %665, %666 : vector<4x2xf32>
    %668 = arith.addf %664, %667 : vector<4x2xf32>
    %669 = vector.broadcast %515 : vector<4x1xf32> to vector<4x2xf32>
    %670 = arith.addf %668, %669 : vector<4x2xf32>
    %671 = arith.negf %670 : vector<4x2xf32>
    %672 = math.exp %671 : vector<4x2xf32>
    %cst_27 = arith.constant 1.000000e+00 : f32
    %673 = vector.broadcast %cst_27 : f32 to vector<4x2xf32>
    %674 = arith.addf %673, %672 : vector<4x2xf32>
    %675 = arith.divf %673, %674 : vector<4x2xf32>
    %676 = math.tanh %670 : vector<4x2xf32>
    %677 = vector.extract_strided_slice %675 {offsets = [1, 0], sizes = [1, 2], strides = [1, 1]} : vector<4x2xf32> to vector<1x2xf32>
    %678 = arith.mulf %677, %658 : vector<1x2xf32>
    %679 = vector.extract_strided_slice %675 {offsets = [0, 0], sizes = [1, 2], strides = [1, 1]} : vector<4x2xf32> to vector<1x2xf32>
    %680 = vector.extract_strided_slice %676 {offsets = [2, 0], sizes = [1, 2], strides = [1, 1]} : vector<4x2xf32> to vector<1x2xf32>
    %681 = arith.mulf %679, %680 : vector<1x2xf32>
    %682 = arith.addf %678, %681 : vector<1x2xf32>
    %683 = vector.extract_strided_slice %675 {offsets = [3, 0], sizes = [1, 2], strides = [1, 1]} : vector<4x2xf32> to vector<1x2xf32>
    %684 = math.tanh %682 : vector<1x2xf32>
    %685 = arith.mulf %683, %684 : vector<1x2xf32>
    %686 = vector.broadcast %513 : vector<4x1xf32> to vector<4x2xf32>
    %687 = vector.broadcast %512 : vector<1x2xf32> to vector<4x2xf32>
    %688 = arith.mulf %686, %687 : vector<4x2xf32>
    %689 = vector.broadcast %514 : vector<4x1xf32> to vector<4x2xf32>
    %690 = vector.broadcast %685 : vector<1x2xf32> to vector<4x2xf32>
    %691 = arith.mulf %689, %690 : vector<4x2xf32>
    %692 = arith.addf %688, %691 : vector<4x2xf32>
    %693 = vector.broadcast %515 : vector<4x1xf32> to vector<4x2xf32>
    %694 = arith.addf %692, %693 : vector<4x2xf32>
    %695 = arith.negf %694 : vector<4x2xf32>
    %696 = math.exp %695 : vector<4x2xf32>
    %cst_28 = arith.constant 1.000000e+00 : f32
    %697 = vector.broadcast %cst_28 : f32 to vector<4x2xf32>
    %698 = arith.addf %697, %696 : vector<4x2xf32>
    %699 = arith.divf %697, %698 : vector<4x2xf32>
    %700 = math.tanh %694 : vector<4x2xf32>
    %701 = vector.extract_strided_slice %699 {offsets = [1, 0], sizes = [1, 2], strides = [1, 1]} : vector<4x2xf32> to vector<1x2xf32>
    %702 = arith.mulf %701, %682 : vector<1x2xf32>
    %703 = vector.extract_strided_slice %699 {offsets = [0, 0], sizes = [1, 2], strides = [1, 1]} : vector<4x2xf32> to vector<1x2xf32>
    %704 = vector.extract_strided_slice %700 {offsets = [2, 0], sizes = [1, 2], strides = [1, 1]} : vector<4x2xf32> to vector<1x2xf32>
    %705 = arith.mulf %703, %704 : vector<1x2xf32>
    %706 = arith.addf %702, %705 : vector<1x2xf32>
    %707 = vector.extract_strided_slice %699 {offsets = [3, 0], sizes = [1, 2], strides = [1, 1]} : vector<4x2xf32> to vector<1x2xf32>
    %708 = math.tanh %706 : vector<1x2xf32>
    %709 = arith.mulf %707, %708 : vector<1x2xf32>
    %710 = vector.extract_strided_slice %2 {offsets = [0, 1], sizes = [4, 1], strides = [1, 1]} : vector<4x9xf32> to vector<4x1xf32>
    %711 = vector.extract_strided_slice %3 {offsets = [0, 2], sizes = [4, 1], strides = [1, 1]} : vector<4x10xf32> to vector<4x1xf32>
    %712 = vector.extract_strided_slice %4 {offsets = [0, 2], sizes = [4, 1], strides = [1, 1]} : vector<4x10xf32> to vector<4x1xf32>
    %cst_29 = arith.constant 0.000000e+00 : f32
    %713 = vector.broadcast %cst_29 : f32 to vector<1x2xf32>
    %cst_30 = arith.constant 0.000000e+00 : f32
    %714 = vector.broadcast %cst_30 : f32 to vector<1x2xf32>
    %715 = vector.broadcast %710 : vector<4x1xf32> to vector<4x2xf32>
    %716 = vector.broadcast %541 : vector<1x2xf32> to vector<4x2xf32>
    %717 = arith.mulf %715, %716 : vector<4x2xf32>
    %718 = vector.broadcast %711 : vector<4x1xf32> to vector<4x2xf32>
    %719 = vector.broadcast %713 : vector<1x2xf32> to vector<4x2xf32>
    %720 = arith.mulf %718, %719 : vector<4x2xf32>
    %721 = arith.addf %717, %720 : vector<4x2xf32>
    %722 = vector.broadcast %712 : vector<4x1xf32> to vector<4x2xf32>
    %723 = arith.addf %721, %722 : vector<4x2xf32>
    %724 = arith.negf %723 : vector<4x2xf32>
    %725 = math.exp %724 : vector<4x2xf32>
    %cst_31 = arith.constant 1.000000e+00 : f32
    %726 = vector.broadcast %cst_31 : f32 to vector<4x2xf32>
    %727 = arith.addf %726, %725 : vector<4x2xf32>
    %728 = arith.divf %726, %727 : vector<4x2xf32>
    %729 = math.tanh %723 : vector<4x2xf32>
    %730 = vector.extract_strided_slice %728 {offsets = [1, 0], sizes = [1, 2], strides = [1, 1]} : vector<4x2xf32> to vector<1x2xf32>
    %731 = arith.mulf %730, %714 : vector<1x2xf32>
    %732 = vector.extract_strided_slice %728 {offsets = [0, 0], sizes = [1, 2], strides = [1, 1]} : vector<4x2xf32> to vector<1x2xf32>
    %733 = vector.extract_strided_slice %729 {offsets = [2, 0], sizes = [1, 2], strides = [1, 1]} : vector<4x2xf32> to vector<1x2xf32>
    %734 = arith.mulf %732, %733 : vector<1x2xf32>
    %735 = arith.addf %731, %734 : vector<1x2xf32>
    %736 = vector.extract_strided_slice %728 {offsets = [3, 0], sizes = [1, 2], strides = [1, 1]} : vector<4x2xf32> to vector<1x2xf32>
    %737 = math.tanh %735 : vector<1x2xf32>
    %738 = arith.mulf %736, %737 : vector<1x2xf32>
    %739 = vector.broadcast %710 : vector<4x1xf32> to vector<4x2xf32>
    %740 = vector.broadcast %565 : vector<1x2xf32> to vector<4x2xf32>
    %741 = arith.mulf %739, %740 : vector<4x2xf32>
    %742 = vector.broadcast %711 : vector<4x1xf32> to vector<4x2xf32>
    %743 = vector.broadcast %738 : vector<1x2xf32> to vector<4x2xf32>
    %744 = arith.mulf %742, %743 : vector<4x2xf32>
    %745 = arith.addf %741, %744 : vector<4x2xf32>
    %746 = vector.broadcast %712 : vector<4x1xf32> to vector<4x2xf32>
    %747 = arith.addf %745, %746 : vector<4x2xf32>
    %748 = arith.negf %747 : vector<4x2xf32>
    %749 = math.exp %748 : vector<4x2xf32>
    %cst_32 = arith.constant 1.000000e+00 : f32
    %750 = vector.broadcast %cst_32 : f32 to vector<4x2xf32>
    %751 = arith.addf %750, %749 : vector<4x2xf32>
    %752 = arith.divf %750, %751 : vector<4x2xf32>
    %753 = math.tanh %747 : vector<4x2xf32>
    %754 = vector.extract_strided_slice %752 {offsets = [1, 0], sizes = [1, 2], strides = [1, 1]} : vector<4x2xf32> to vector<1x2xf32>
    %755 = arith.mulf %754, %735 : vector<1x2xf32>
    %756 = vector.extract_strided_slice %752 {offsets = [0, 0], sizes = [1, 2], strides = [1, 1]} : vector<4x2xf32> to vector<1x2xf32>
    %757 = vector.extract_strided_slice %753 {offsets = [2, 0], sizes = [1, 2], strides = [1, 1]} : vector<4x2xf32> to vector<1x2xf32>
    %758 = arith.mulf %756, %757 : vector<1x2xf32>
    %759 = arith.addf %755, %758 : vector<1x2xf32>
    %760 = vector.extract_strided_slice %752 {offsets = [3, 0], sizes = [1, 2], strides = [1, 1]} : vector<4x2xf32> to vector<1x2xf32>
    %761 = math.tanh %759 : vector<1x2xf32>
    %762 = arith.mulf %760, %761 : vector<1x2xf32>
    %763 = vector.broadcast %710 : vector<4x1xf32> to vector<4x2xf32>
    %764 = vector.broadcast %589 : vector<1x2xf32> to vector<4x2xf32>
    %765 = arith.mulf %763, %764 : vector<4x2xf32>
    %766 = vector.broadcast %711 : vector<4x1xf32> to vector<4x2xf32>
    %767 = vector.broadcast %762 : vector<1x2xf32> to vector<4x2xf32>
    %768 = arith.mulf %766, %767 : vector<4x2xf32>
    %769 = arith.addf %765, %768 : vector<4x2xf32>
    %770 = vector.broadcast %712 : vector<4x1xf32> to vector<4x2xf32>
    %771 = arith.addf %769, %770 : vector<4x2xf32>
    %772 = arith.negf %771 : vector<4x2xf32>
    %773 = math.exp %772 : vector<4x2xf32>
    %cst_33 = arith.constant 1.000000e+00 : f32
    %774 = vector.broadcast %cst_33 : f32 to vector<4x2xf32>
    %775 = arith.addf %774, %773 : vector<4x2xf32>
    %776 = arith.divf %774, %775 : vector<4x2xf32>
    %777 = math.tanh %771 : vector<4x2xf32>
    %778 = vector.extract_strided_slice %776 {offsets = [1, 0], sizes = [1, 2], strides = [1, 1]} : vector<4x2xf32> to vector<1x2xf32>
    %779 = arith.mulf %778, %759 : vector<1x2xf32>
    %780 = vector.extract_strided_slice %776 {offsets = [0, 0], sizes = [1, 2], strides = [1, 1]} : vector<4x2xf32> to vector<1x2xf32>
    %781 = vector.extract_strided_slice %777 {offsets = [2, 0], sizes = [1, 2], strides = [1, 1]} : vector<4x2xf32> to vector<1x2xf32>
    %782 = arith.mulf %780, %781 : vector<1x2xf32>
    %783 = arith.addf %779, %782 : vector<1x2xf32>
    %784 = vector.extract_strided_slice %776 {offsets = [3, 0], sizes = [1, 2], strides = [1, 1]} : vector<4x2xf32> to vector<1x2xf32>
    %785 = math.tanh %783 : vector<1x2xf32>
    %786 = arith.mulf %784, %785 : vector<1x2xf32>
    %787 = vector.broadcast %710 : vector<4x1xf32> to vector<4x2xf32>
    %788 = vector.broadcast %613 : vector<1x2xf32> to vector<4x2xf32>
    %789 = arith.mulf %787, %788 : vector<4x2xf32>
    %790 = vector.broadcast %711 : vector<4x1xf32> to vector<4x2xf32>
    %791 = vector.broadcast %786 : vector<1x2xf32> to vector<4x2xf32>
    %792 = arith.mulf %790, %791 : vector<4x2xf32>
    %793 = arith.addf %789, %792 : vector<4x2xf32>
    %794 = vector.broadcast %712 : vector<4x1xf32> to vector<4x2xf32>
    %795 = arith.addf %793, %794 : vector<4x2xf32>
    %796 = arith.negf %795 : vector<4x2xf32>
    %797 = math.exp %796 : vector<4x2xf32>
    %cst_34 = arith.constant 1.000000e+00 : f32
    %798 = vector.broadcast %cst_34 : f32 to vector<4x2xf32>
    %799 = arith.addf %798, %797 : vector<4x2xf32>
    %800 = arith.divf %798, %799 : vector<4x2xf32>
    %801 = math.tanh %795 : vector<4x2xf32>
    %802 = vector.extract_strided_slice %800 {offsets = [1, 0], sizes = [1, 2], strides = [1, 1]} : vector<4x2xf32> to vector<1x2xf32>
    %803 = arith.mulf %802, %783 : vector<1x2xf32>
    %804 = vector.extract_strided_slice %800 {offsets = [0, 0], sizes = [1, 2], strides = [1, 1]} : vector<4x2xf32> to vector<1x2xf32>
    %805 = vector.extract_strided_slice %801 {offsets = [2, 0], sizes = [1, 2], strides = [1, 1]} : vector<4x2xf32> to vector<1x2xf32>
    %806 = arith.mulf %804, %805 : vector<1x2xf32>
    %807 = arith.addf %803, %806 : vector<1x2xf32>
    %808 = vector.extract_strided_slice %800 {offsets = [3, 0], sizes = [1, 2], strides = [1, 1]} : vector<4x2xf32> to vector<1x2xf32>
    %809 = math.tanh %807 : vector<1x2xf32>
    %810 = arith.mulf %808, %809 : vector<1x2xf32>
    %811 = vector.broadcast %710 : vector<4x1xf32> to vector<4x2xf32>
    %812 = vector.broadcast %637 : vector<1x2xf32> to vector<4x2xf32>
    %813 = arith.mulf %811, %812 : vector<4x2xf32>
    %814 = vector.broadcast %711 : vector<4x1xf32> to vector<4x2xf32>
    %815 = vector.broadcast %810 : vector<1x2xf32> to vector<4x2xf32>
    %816 = arith.mulf %814, %815 : vector<4x2xf32>
    %817 = arith.addf %813, %816 : vector<4x2xf32>
    %818 = vector.broadcast %712 : vector<4x1xf32> to vector<4x2xf32>
    %819 = arith.addf %817, %818 : vector<4x2xf32>
    %820 = arith.negf %819 : vector<4x2xf32>
    %821 = math.exp %820 : vector<4x2xf32>
    %cst_35 = arith.constant 1.000000e+00 : f32
    %822 = vector.broadcast %cst_35 : f32 to vector<4x2xf32>
    %823 = arith.addf %822, %821 : vector<4x2xf32>
    %824 = arith.divf %822, %823 : vector<4x2xf32>
    %825 = math.tanh %819 : vector<4x2xf32>
    %826 = vector.extract_strided_slice %824 {offsets = [1, 0], sizes = [1, 2], strides = [1, 1]} : vector<4x2xf32> to vector<1x2xf32>
    %827 = arith.mulf %826, %807 : vector<1x2xf32>
    %828 = vector.extract_strided_slice %824 {offsets = [0, 0], sizes = [1, 2], strides = [1, 1]} : vector<4x2xf32> to vector<1x2xf32>
    %829 = vector.extract_strided_slice %825 {offsets = [2, 0], sizes = [1, 2], strides = [1, 1]} : vector<4x2xf32> to vector<1x2xf32>
    %830 = arith.mulf %828, %829 : vector<1x2xf32>
    %831 = arith.addf %827, %830 : vector<1x2xf32>
    %832 = vector.extract_strided_slice %824 {offsets = [3, 0], sizes = [1, 2], strides = [1, 1]} : vector<4x2xf32> to vector<1x2xf32>
    %833 = math.tanh %831 : vector<1x2xf32>
    %834 = arith.mulf %832, %833 : vector<1x2xf32>
    %835 = vector.broadcast %710 : vector<4x1xf32> to vector<4x2xf32>
    %836 = vector.broadcast %661 : vector<1x2xf32> to vector<4x2xf32>
    %837 = arith.mulf %835, %836 : vector<4x2xf32>
    %838 = vector.broadcast %711 : vector<4x1xf32> to vector<4x2xf32>
    %839 = vector.broadcast %834 : vector<1x2xf32> to vector<4x2xf32>
    %840 = arith.mulf %838, %839 : vector<4x2xf32>
    %841 = arith.addf %837, %840 : vector<4x2xf32>
    %842 = vector.broadcast %712 : vector<4x1xf32> to vector<4x2xf32>
    %843 = arith.addf %841, %842 : vector<4x2xf32>
    %844 = arith.negf %843 : vector<4x2xf32>
    %845 = math.exp %844 : vector<4x2xf32>
    %cst_36 = arith.constant 1.000000e+00 : f32
    %846 = vector.broadcast %cst_36 : f32 to vector<4x2xf32>
    %847 = arith.addf %846, %845 : vector<4x2xf32>
    %848 = arith.divf %846, %847 : vector<4x2xf32>
    %849 = math.tanh %843 : vector<4x2xf32>
    %850 = vector.extract_strided_slice %848 {offsets = [1, 0], sizes = [1, 2], strides = [1, 1]} : vector<4x2xf32> to vector<1x2xf32>
    %851 = arith.mulf %850, %831 : vector<1x2xf32>
    %852 = vector.extract_strided_slice %848 {offsets = [0, 0], sizes = [1, 2], strides = [1, 1]} : vector<4x2xf32> to vector<1x2xf32>
    %853 = vector.extract_strided_slice %849 {offsets = [2, 0], sizes = [1, 2], strides = [1, 1]} : vector<4x2xf32> to vector<1x2xf32>
    %854 = arith.mulf %852, %853 : vector<1x2xf32>
    %855 = arith.addf %851, %854 : vector<1x2xf32>
    %856 = vector.extract_strided_slice %848 {offsets = [3, 0], sizes = [1, 2], strides = [1, 1]} : vector<4x2xf32> to vector<1x2xf32>
    %857 = math.tanh %855 : vector<1x2xf32>
    %858 = arith.mulf %856, %857 : vector<1x2xf32>
    %859 = vector.broadcast %710 : vector<4x1xf32> to vector<4x2xf32>
    %860 = vector.broadcast %685 : vector<1x2xf32> to vector<4x2xf32>
    %861 = arith.mulf %859, %860 : vector<4x2xf32>
    %862 = vector.broadcast %711 : vector<4x1xf32> to vector<4x2xf32>
    %863 = vector.broadcast %858 : vector<1x2xf32> to vector<4x2xf32>
    %864 = arith.mulf %862, %863 : vector<4x2xf32>
    %865 = arith.addf %861, %864 : vector<4x2xf32>
    %866 = vector.broadcast %712 : vector<4x1xf32> to vector<4x2xf32>
    %867 = arith.addf %865, %866 : vector<4x2xf32>
    %868 = arith.negf %867 : vector<4x2xf32>
    %869 = math.exp %868 : vector<4x2xf32>
    %cst_37 = arith.constant 1.000000e+00 : f32
    %870 = vector.broadcast %cst_37 : f32 to vector<4x2xf32>
    %871 = arith.addf %870, %869 : vector<4x2xf32>
    %872 = arith.divf %870, %871 : vector<4x2xf32>
    %873 = math.tanh %867 : vector<4x2xf32>
    %874 = vector.extract_strided_slice %872 {offsets = [1, 0], sizes = [1, 2], strides = [1, 1]} : vector<4x2xf32> to vector<1x2xf32>
    %875 = arith.mulf %874, %855 : vector<1x2xf32>
    %876 = vector.extract_strided_slice %872 {offsets = [0, 0], sizes = [1, 2], strides = [1, 1]} : vector<4x2xf32> to vector<1x2xf32>
    %877 = vector.extract_strided_slice %873 {offsets = [2, 0], sizes = [1, 2], strides = [1, 1]} : vector<4x2xf32> to vector<1x2xf32>
    %878 = arith.mulf %876, %877 : vector<1x2xf32>
    %879 = arith.addf %875, %878 : vector<1x2xf32>
    %880 = vector.extract_strided_slice %872 {offsets = [3, 0], sizes = [1, 2], strides = [1, 1]} : vector<4x2xf32> to vector<1x2xf32>
    %881 = math.tanh %879 : vector<1x2xf32>
    %882 = arith.mulf %880, %881 : vector<1x2xf32>
    %883 = vector.broadcast %710 : vector<4x1xf32> to vector<4x2xf32>
    %884 = vector.broadcast %709 : vector<1x2xf32> to vector<4x2xf32>
    %885 = arith.mulf %883, %884 : vector<4x2xf32>
    %886 = vector.broadcast %711 : vector<4x1xf32> to vector<4x2xf32>
    %887 = vector.broadcast %882 : vector<1x2xf32> to vector<4x2xf32>
    %888 = arith.mulf %886, %887 : vector<4x2xf32>
    %889 = arith.addf %885, %888 : vector<4x2xf32>
    %890 = vector.broadcast %712 : vector<4x1xf32> to vector<4x2xf32>
    %891 = arith.addf %889, %890 : vector<4x2xf32>
    %892 = arith.negf %891 : vector<4x2xf32>
    %893 = math.exp %892 : vector<4x2xf32>
    %cst_38 = arith.constant 1.000000e+00 : f32
    %894 = vector.broadcast %cst_38 : f32 to vector<4x2xf32>
    %895 = arith.addf %894, %893 : vector<4x2xf32>
    %896 = arith.divf %894, %895 : vector<4x2xf32>
    %897 = math.tanh %891 : vector<4x2xf32>
    %898 = vector.extract_strided_slice %896 {offsets = [1, 0], sizes = [1, 2], strides = [1, 1]} : vector<4x2xf32> to vector<1x2xf32>
    %899 = arith.mulf %898, %879 : vector<1x2xf32>
    %900 = vector.extract_strided_slice %896 {offsets = [0, 0], sizes = [1, 2], strides = [1, 1]} : vector<4x2xf32> to vector<1x2xf32>
    %901 = vector.extract_strided_slice %897 {offsets = [2, 0], sizes = [1, 2], strides = [1, 1]} : vector<4x2xf32> to vector<1x2xf32>
    %902 = arith.mulf %900, %901 : vector<1x2xf32>
    %903 = arith.addf %899, %902 : vector<1x2xf32>
    %904 = vector.extract_strided_slice %896 {offsets = [3, 0], sizes = [1, 2], strides = [1, 1]} : vector<4x2xf32> to vector<1x2xf32>
    %905 = math.tanh %903 : vector<1x2xf32>
    %906 = arith.mulf %904, %905 : vector<1x2xf32>
    %907 = vector.extract_strided_slice %2 {offsets = [0, 2], sizes = [4, 1], strides = [1, 1]} : vector<4x9xf32> to vector<4x1xf32>
    %908 = vector.extract_strided_slice %3 {offsets = [0, 3], sizes = [4, 1], strides = [1, 1]} : vector<4x10xf32> to vector<4x1xf32>
    %909 = vector.extract_strided_slice %4 {offsets = [0, 3], sizes = [4, 1], strides = [1, 1]} : vector<4x10xf32> to vector<4x1xf32>
    %cst_39 = arith.constant 0.000000e+00 : f32
    %910 = vector.broadcast %cst_39 : f32 to vector<1x2xf32>
    %cst_40 = arith.constant 0.000000e+00 : f32
    %911 = vector.broadcast %cst_40 : f32 to vector<1x2xf32>
    %912 = vector.broadcast %907 : vector<4x1xf32> to vector<4x2xf32>
    %913 = vector.broadcast %738 : vector<1x2xf32> to vector<4x2xf32>
    %914 = arith.mulf %912, %913 : vector<4x2xf32>
    %915 = vector.broadcast %908 : vector<4x1xf32> to vector<4x2xf32>
    %916 = vector.broadcast %910 : vector<1x2xf32> to vector<4x2xf32>
    %917 = arith.mulf %915, %916 : vector<4x2xf32>
    %918 = arith.addf %914, %917 : vector<4x2xf32>
    %919 = vector.broadcast %909 : vector<4x1xf32> to vector<4x2xf32>
    %920 = arith.addf %918, %919 : vector<4x2xf32>
    %921 = arith.negf %920 : vector<4x2xf32>
    %922 = math.exp %921 : vector<4x2xf32>
    %cst_41 = arith.constant 1.000000e+00 : f32
    %923 = vector.broadcast %cst_41 : f32 to vector<4x2xf32>
    %924 = arith.addf %923, %922 : vector<4x2xf32>
    %925 = arith.divf %923, %924 : vector<4x2xf32>
    %926 = math.tanh %920 : vector<4x2xf32>
    %927 = vector.extract_strided_slice %925 {offsets = [1, 0], sizes = [1, 2], strides = [1, 1]} : vector<4x2xf32> to vector<1x2xf32>
    %928 = arith.mulf %927, %911 : vector<1x2xf32>
    %929 = vector.extract_strided_slice %925 {offsets = [0, 0], sizes = [1, 2], strides = [1, 1]} : vector<4x2xf32> to vector<1x2xf32>
    %930 = vector.extract_strided_slice %926 {offsets = [2, 0], sizes = [1, 2], strides = [1, 1]} : vector<4x2xf32> to vector<1x2xf32>
    %931 = arith.mulf %929, %930 : vector<1x2xf32>
    %932 = arith.addf %928, %931 : vector<1x2xf32>
    %933 = vector.extract_strided_slice %925 {offsets = [3, 0], sizes = [1, 2], strides = [1, 1]} : vector<4x2xf32> to vector<1x2xf32>
    %934 = math.tanh %932 : vector<1x2xf32>
    %935 = arith.mulf %933, %934 : vector<1x2xf32>
    %936 = vector.broadcast %907 : vector<4x1xf32> to vector<4x2xf32>
    %937 = vector.broadcast %762 : vector<1x2xf32> to vector<4x2xf32>
    %938 = arith.mulf %936, %937 : vector<4x2xf32>
    %939 = vector.broadcast %908 : vector<4x1xf32> to vector<4x2xf32>
    %940 = vector.broadcast %935 : vector<1x2xf32> to vector<4x2xf32>
    %941 = arith.mulf %939, %940 : vector<4x2xf32>
    %942 = arith.addf %938, %941 : vector<4x2xf32>
    %943 = vector.broadcast %909 : vector<4x1xf32> to vector<4x2xf32>
    %944 = arith.addf %942, %943 : vector<4x2xf32>
    %945 = arith.negf %944 : vector<4x2xf32>
    %946 = math.exp %945 : vector<4x2xf32>
    %cst_42 = arith.constant 1.000000e+00 : f32
    %947 = vector.broadcast %cst_42 : f32 to vector<4x2xf32>
    %948 = arith.addf %947, %946 : vector<4x2xf32>
    %949 = arith.divf %947, %948 : vector<4x2xf32>
    %950 = math.tanh %944 : vector<4x2xf32>
    %951 = vector.extract_strided_slice %949 {offsets = [1, 0], sizes = [1, 2], strides = [1, 1]} : vector<4x2xf32> to vector<1x2xf32>
    %952 = arith.mulf %951, %932 : vector<1x2xf32>
    %953 = vector.extract_strided_slice %949 {offsets = [0, 0], sizes = [1, 2], strides = [1, 1]} : vector<4x2xf32> to vector<1x2xf32>
    %954 = vector.extract_strided_slice %950 {offsets = [2, 0], sizes = [1, 2], strides = [1, 1]} : vector<4x2xf32> to vector<1x2xf32>
    %955 = arith.mulf %953, %954 : vector<1x2xf32>
    %956 = arith.addf %952, %955 : vector<1x2xf32>
    %957 = vector.extract_strided_slice %949 {offsets = [3, 0], sizes = [1, 2], strides = [1, 1]} : vector<4x2xf32> to vector<1x2xf32>
    %958 = math.tanh %956 : vector<1x2xf32>
    %959 = arith.mulf %957, %958 : vector<1x2xf32>
    %960 = vector.broadcast %907 : vector<4x1xf32> to vector<4x2xf32>
    %961 = vector.broadcast %786 : vector<1x2xf32> to vector<4x2xf32>
    %962 = arith.mulf %960, %961 : vector<4x2xf32>
    %963 = vector.broadcast %908 : vector<4x1xf32> to vector<4x2xf32>
    %964 = vector.broadcast %959 : vector<1x2xf32> to vector<4x2xf32>
    %965 = arith.mulf %963, %964 : vector<4x2xf32>
    %966 = arith.addf %962, %965 : vector<4x2xf32>
    %967 = vector.broadcast %909 : vector<4x1xf32> to vector<4x2xf32>
    %968 = arith.addf %966, %967 : vector<4x2xf32>
    %969 = arith.negf %968 : vector<4x2xf32>
    %970 = math.exp %969 : vector<4x2xf32>
    %cst_43 = arith.constant 1.000000e+00 : f32
    %971 = vector.broadcast %cst_43 : f32 to vector<4x2xf32>
    %972 = arith.addf %971, %970 : vector<4x2xf32>
    %973 = arith.divf %971, %972 : vector<4x2xf32>
    %974 = math.tanh %968 : vector<4x2xf32>
    %975 = vector.extract_strided_slice %973 {offsets = [1, 0], sizes = [1, 2], strides = [1, 1]} : vector<4x2xf32> to vector<1x2xf32>
    %976 = arith.mulf %975, %956 : vector<1x2xf32>
    %977 = vector.extract_strided_slice %973 {offsets = [0, 0], sizes = [1, 2], strides = [1, 1]} : vector<4x2xf32> to vector<1x2xf32>
    %978 = vector.extract_strided_slice %974 {offsets = [2, 0], sizes = [1, 2], strides = [1, 1]} : vector<4x2xf32> to vector<1x2xf32>
    %979 = arith.mulf %977, %978 : vector<1x2xf32>
    %980 = arith.addf %976, %979 : vector<1x2xf32>
    %981 = vector.extract_strided_slice %973 {offsets = [3, 0], sizes = [1, 2], strides = [1, 1]} : vector<4x2xf32> to vector<1x2xf32>
    %982 = math.tanh %980 : vector<1x2xf32>
    %983 = arith.mulf %981, %982 : vector<1x2xf32>
    %984 = vector.broadcast %907 : vector<4x1xf32> to vector<4x2xf32>
    %985 = vector.broadcast %810 : vector<1x2xf32> to vector<4x2xf32>
    %986 = arith.mulf %984, %985 : vector<4x2xf32>
    %987 = vector.broadcast %908 : vector<4x1xf32> to vector<4x2xf32>
    %988 = vector.broadcast %983 : vector<1x2xf32> to vector<4x2xf32>
    %989 = arith.mulf %987, %988 : vector<4x2xf32>
    %990 = arith.addf %986, %989 : vector<4x2xf32>
    %991 = vector.broadcast %909 : vector<4x1xf32> to vector<4x2xf32>
    %992 = arith.addf %990, %991 : vector<4x2xf32>
    %993 = arith.negf %992 : vector<4x2xf32>
    %994 = math.exp %993 : vector<4x2xf32>
    %cst_44 = arith.constant 1.000000e+00 : f32
    %995 = vector.broadcast %cst_44 : f32 to vector<4x2xf32>
    %996 = arith.addf %995, %994 : vector<4x2xf32>
    %997 = arith.divf %995, %996 : vector<4x2xf32>
    %998 = math.tanh %992 : vector<4x2xf32>
    %999 = vector.extract_strided_slice %997 {offsets = [1, 0], sizes = [1, 2], strides = [1, 1]} : vector<4x2xf32> to vector<1x2xf32>
    %1000 = arith.mulf %999, %980 : vector<1x2xf32>
    %1001 = vector.extract_strided_slice %997 {offsets = [0, 0], sizes = [1, 2], strides = [1, 1]} : vector<4x2xf32> to vector<1x2xf32>
    %1002 = vector.extract_strided_slice %998 {offsets = [2, 0], sizes = [1, 2], strides = [1, 1]} : vector<4x2xf32> to vector<1x2xf32>
    %1003 = arith.mulf %1001, %1002 : vector<1x2xf32>
    %1004 = arith.addf %1000, %1003 : vector<1x2xf32>
    %1005 = vector.extract_strided_slice %997 {offsets = [3, 0], sizes = [1, 2], strides = [1, 1]} : vector<4x2xf32> to vector<1x2xf32>
    %1006 = math.tanh %1004 : vector<1x2xf32>
    %1007 = arith.mulf %1005, %1006 : vector<1x2xf32>
    %1008 = vector.broadcast %907 : vector<4x1xf32> to vector<4x2xf32>
    %1009 = vector.broadcast %834 : vector<1x2xf32> to vector<4x2xf32>
    %1010 = arith.mulf %1008, %1009 : vector<4x2xf32>
    %1011 = vector.broadcast %908 : vector<4x1xf32> to vector<4x2xf32>
    %1012 = vector.broadcast %1007 : vector<1x2xf32> to vector<4x2xf32>
    %1013 = arith.mulf %1011, %1012 : vector<4x2xf32>
    %1014 = arith.addf %1010, %1013 : vector<4x2xf32>
    %1015 = vector.broadcast %909 : vector<4x1xf32> to vector<4x2xf32>
    %1016 = arith.addf %1014, %1015 : vector<4x2xf32>
    %1017 = arith.negf %1016 : vector<4x2xf32>
    %1018 = math.exp %1017 : vector<4x2xf32>
    %cst_45 = arith.constant 1.000000e+00 : f32
    %1019 = vector.broadcast %cst_45 : f32 to vector<4x2xf32>
    %1020 = arith.addf %1019, %1018 : vector<4x2xf32>
    %1021 = arith.divf %1019, %1020 : vector<4x2xf32>
    %1022 = math.tanh %1016 : vector<4x2xf32>
    %1023 = vector.extract_strided_slice %1021 {offsets = [1, 0], sizes = [1, 2], strides = [1, 1]} : vector<4x2xf32> to vector<1x2xf32>
    %1024 = arith.mulf %1023, %1004 : vector<1x2xf32>
    %1025 = vector.extract_strided_slice %1021 {offsets = [0, 0], sizes = [1, 2], strides = [1, 1]} : vector<4x2xf32> to vector<1x2xf32>
    %1026 = vector.extract_strided_slice %1022 {offsets = [2, 0], sizes = [1, 2], strides = [1, 1]} : vector<4x2xf32> to vector<1x2xf32>
    %1027 = arith.mulf %1025, %1026 : vector<1x2xf32>
    %1028 = arith.addf %1024, %1027 : vector<1x2xf32>
    %1029 = vector.extract_strided_slice %1021 {offsets = [3, 0], sizes = [1, 2], strides = [1, 1]} : vector<4x2xf32> to vector<1x2xf32>
    %1030 = math.tanh %1028 : vector<1x2xf32>
    %1031 = arith.mulf %1029, %1030 : vector<1x2xf32>
    %1032 = vector.broadcast %907 : vector<4x1xf32> to vector<4x2xf32>
    %1033 = vector.broadcast %858 : vector<1x2xf32> to vector<4x2xf32>
    %1034 = arith.mulf %1032, %1033 : vector<4x2xf32>
    %1035 = vector.broadcast %908 : vector<4x1xf32> to vector<4x2xf32>
    %1036 = vector.broadcast %1031 : vector<1x2xf32> to vector<4x2xf32>
    %1037 = arith.mulf %1035, %1036 : vector<4x2xf32>
    %1038 = arith.addf %1034, %1037 : vector<4x2xf32>
    %1039 = vector.broadcast %909 : vector<4x1xf32> to vector<4x2xf32>
    %1040 = arith.addf %1038, %1039 : vector<4x2xf32>
    %1041 = arith.negf %1040 : vector<4x2xf32>
    %1042 = math.exp %1041 : vector<4x2xf32>
    %cst_46 = arith.constant 1.000000e+00 : f32
    %1043 = vector.broadcast %cst_46 : f32 to vector<4x2xf32>
    %1044 = arith.addf %1043, %1042 : vector<4x2xf32>
    %1045 = arith.divf %1043, %1044 : vector<4x2xf32>
    %1046 = math.tanh %1040 : vector<4x2xf32>
    %1047 = vector.extract_strided_slice %1045 {offsets = [1, 0], sizes = [1, 2], strides = [1, 1]} : vector<4x2xf32> to vector<1x2xf32>
    %1048 = arith.mulf %1047, %1028 : vector<1x2xf32>
    %1049 = vector.extract_strided_slice %1045 {offsets = [0, 0], sizes = [1, 2], strides = [1, 1]} : vector<4x2xf32> to vector<1x2xf32>
    %1050 = vector.extract_strided_slice %1046 {offsets = [2, 0], sizes = [1, 2], strides = [1, 1]} : vector<4x2xf32> to vector<1x2xf32>
    %1051 = arith.mulf %1049, %1050 : vector<1x2xf32>
    %1052 = arith.addf %1048, %1051 : vector<1x2xf32>
    %1053 = vector.extract_strided_slice %1045 {offsets = [3, 0], sizes = [1, 2], strides = [1, 1]} : vector<4x2xf32> to vector<1x2xf32>
    %1054 = math.tanh %1052 : vector<1x2xf32>
    %1055 = arith.mulf %1053, %1054 : vector<1x2xf32>
    %1056 = vector.broadcast %907 : vector<4x1xf32> to vector<4x2xf32>
    %1057 = vector.broadcast %882 : vector<1x2xf32> to vector<4x2xf32>
    %1058 = arith.mulf %1056, %1057 : vector<4x2xf32>
    %1059 = vector.broadcast %908 : vector<4x1xf32> to vector<4x2xf32>
    %1060 = vector.broadcast %1055 : vector<1x2xf32> to vector<4x2xf32>
    %1061 = arith.mulf %1059, %1060 : vector<4x2xf32>
    %1062 = arith.addf %1058, %1061 : vector<4x2xf32>
    %1063 = vector.broadcast %909 : vector<4x1xf32> to vector<4x2xf32>
    %1064 = arith.addf %1062, %1063 : vector<4x2xf32>
    %1065 = arith.negf %1064 : vector<4x2xf32>
    %1066 = math.exp %1065 : vector<4x2xf32>
    %cst_47 = arith.constant 1.000000e+00 : f32
    %1067 = vector.broadcast %cst_47 : f32 to vector<4x2xf32>
    %1068 = arith.addf %1067, %1066 : vector<4x2xf32>
    %1069 = arith.divf %1067, %1068 : vector<4x2xf32>
    %1070 = math.tanh %1064 : vector<4x2xf32>
    %1071 = vector.extract_strided_slice %1069 {offsets = [1, 0], sizes = [1, 2], strides = [1, 1]} : vector<4x2xf32> to vector<1x2xf32>
    %1072 = arith.mulf %1071, %1052 : vector<1x2xf32>
    %1073 = vector.extract_strided_slice %1069 {offsets = [0, 0], sizes = [1, 2], strides = [1, 1]} : vector<4x2xf32> to vector<1x2xf32>
    %1074 = vector.extract_strided_slice %1070 {offsets = [2, 0], sizes = [1, 2], strides = [1, 1]} : vector<4x2xf32> to vector<1x2xf32>
    %1075 = arith.mulf %1073, %1074 : vector<1x2xf32>
    %1076 = arith.addf %1072, %1075 : vector<1x2xf32>
    %1077 = vector.extract_strided_slice %1069 {offsets = [3, 0], sizes = [1, 2], strides = [1, 1]} : vector<4x2xf32> to vector<1x2xf32>
    %1078 = math.tanh %1076 : vector<1x2xf32>
    %1079 = arith.mulf %1077, %1078 : vector<1x2xf32>
    %1080 = vector.broadcast %907 : vector<4x1xf32> to vector<4x2xf32>
    %1081 = vector.broadcast %906 : vector<1x2xf32> to vector<4x2xf32>
    %1082 = arith.mulf %1080, %1081 : vector<4x2xf32>
    %1083 = vector.broadcast %908 : vector<4x1xf32> to vector<4x2xf32>
    %1084 = vector.broadcast %1079 : vector<1x2xf32> to vector<4x2xf32>
    %1085 = arith.mulf %1083, %1084 : vector<4x2xf32>
    %1086 = arith.addf %1082, %1085 : vector<4x2xf32>
    %1087 = vector.broadcast %909 : vector<4x1xf32> to vector<4x2xf32>
    %1088 = arith.addf %1086, %1087 : vector<4x2xf32>
    %1089 = arith.negf %1088 : vector<4x2xf32>
    %1090 = math.exp %1089 : vector<4x2xf32>
    %cst_48 = arith.constant 1.000000e+00 : f32
    %1091 = vector.broadcast %cst_48 : f32 to vector<4x2xf32>
    %1092 = arith.addf %1091, %1090 : vector<4x2xf32>
    %1093 = arith.divf %1091, %1092 : vector<4x2xf32>
    %1094 = math.tanh %1088 : vector<4x2xf32>
    %1095 = vector.extract_strided_slice %1093 {offsets = [1, 0], sizes = [1, 2], strides = [1, 1]} : vector<4x2xf32> to vector<1x2xf32>
    %1096 = arith.mulf %1095, %1076 : vector<1x2xf32>
    %1097 = vector.extract_strided_slice %1093 {offsets = [0, 0], sizes = [1, 2], strides = [1, 1]} : vector<4x2xf32> to vector<1x2xf32>
    %1098 = vector.extract_strided_slice %1094 {offsets = [2, 0], sizes = [1, 2], strides = [1, 1]} : vector<4x2xf32> to vector<1x2xf32>
    %1099 = arith.mulf %1097, %1098 : vector<1x2xf32>
    %1100 = arith.addf %1096, %1099 : vector<1x2xf32>
    %1101 = vector.extract_strided_slice %1093 {offsets = [3, 0], sizes = [1, 2], strides = [1, 1]} : vector<4x2xf32> to vector<1x2xf32>
    %1102 = math.tanh %1100 : vector<1x2xf32>
    %1103 = arith.mulf %1101, %1102 : vector<1x2xf32>
    %1104 = vector.extract_strided_slice %2 {offsets = [0, 3], sizes = [4, 1], strides = [1, 1]} : vector<4x9xf32> to vector<4x1xf32>
    %1105 = vector.extract_strided_slice %3 {offsets = [0, 4], sizes = [4, 1], strides = [1, 1]} : vector<4x10xf32> to vector<4x1xf32>
    %1106 = vector.extract_strided_slice %4 {offsets = [0, 4], sizes = [4, 1], strides = [1, 1]} : vector<4x10xf32> to vector<4x1xf32>
    %cst_49 = arith.constant 0.000000e+00 : f32
    %1107 = vector.broadcast %cst_49 : f32 to vector<1x2xf32>
    %cst_50 = arith.constant 0.000000e+00 : f32
    %1108 = vector.broadcast %cst_50 : f32 to vector<1x2xf32>
    %1109 = vector.broadcast %1104 : vector<4x1xf32> to vector<4x2xf32>
    %1110 = vector.broadcast %935 : vector<1x2xf32> to vector<4x2xf32>
    %1111 = arith.mulf %1109, %1110 : vector<4x2xf32>
    %1112 = vector.broadcast %1105 : vector<4x1xf32> to vector<4x2xf32>
    %1113 = vector.broadcast %1107 : vector<1x2xf32> to vector<4x2xf32>
    %1114 = arith.mulf %1112, %1113 : vector<4x2xf32>
    %1115 = arith.addf %1111, %1114 : vector<4x2xf32>
    %1116 = vector.broadcast %1106 : vector<4x1xf32> to vector<4x2xf32>
    %1117 = arith.addf %1115, %1116 : vector<4x2xf32>
    %1118 = arith.negf %1117 : vector<4x2xf32>
    %1119 = math.exp %1118 : vector<4x2xf32>
    %cst_51 = arith.constant 1.000000e+00 : f32
    %1120 = vector.broadcast %cst_51 : f32 to vector<4x2xf32>
    %1121 = arith.addf %1120, %1119 : vector<4x2xf32>
    %1122 = arith.divf %1120, %1121 : vector<4x2xf32>
    %1123 = math.tanh %1117 : vector<4x2xf32>
    %1124 = vector.extract_strided_slice %1122 {offsets = [1, 0], sizes = [1, 2], strides = [1, 1]} : vector<4x2xf32> to vector<1x2xf32>
    %1125 = arith.mulf %1124, %1108 : vector<1x2xf32>
    %1126 = vector.extract_strided_slice %1122 {offsets = [0, 0], sizes = [1, 2], strides = [1, 1]} : vector<4x2xf32> to vector<1x2xf32>
    %1127 = vector.extract_strided_slice %1123 {offsets = [2, 0], sizes = [1, 2], strides = [1, 1]} : vector<4x2xf32> to vector<1x2xf32>
    %1128 = arith.mulf %1126, %1127 : vector<1x2xf32>
    %1129 = arith.addf %1125, %1128 : vector<1x2xf32>
    %1130 = vector.extract_strided_slice %1122 {offsets = [3, 0], sizes = [1, 2], strides = [1, 1]} : vector<4x2xf32> to vector<1x2xf32>
    %1131 = math.tanh %1129 : vector<1x2xf32>
    %1132 = arith.mulf %1130, %1131 : vector<1x2xf32>
    %1133 = vector.broadcast %1104 : vector<4x1xf32> to vector<4x2xf32>
    %1134 = vector.broadcast %959 : vector<1x2xf32> to vector<4x2xf32>
    %1135 = arith.mulf %1133, %1134 : vector<4x2xf32>
    %1136 = vector.broadcast %1105 : vector<4x1xf32> to vector<4x2xf32>
    %1137 = vector.broadcast %1132 : vector<1x2xf32> to vector<4x2xf32>
    %1138 = arith.mulf %1136, %1137 : vector<4x2xf32>
    %1139 = arith.addf %1135, %1138 : vector<4x2xf32>
    %1140 = vector.broadcast %1106 : vector<4x1xf32> to vector<4x2xf32>
    %1141 = arith.addf %1139, %1140 : vector<4x2xf32>
    %1142 = arith.negf %1141 : vector<4x2xf32>
    %1143 = math.exp %1142 : vector<4x2xf32>
    %cst_52 = arith.constant 1.000000e+00 : f32
    %1144 = vector.broadcast %cst_52 : f32 to vector<4x2xf32>
    %1145 = arith.addf %1144, %1143 : vector<4x2xf32>
    %1146 = arith.divf %1144, %1145 : vector<4x2xf32>
    %1147 = math.tanh %1141 : vector<4x2xf32>
    %1148 = vector.extract_strided_slice %1146 {offsets = [1, 0], sizes = [1, 2], strides = [1, 1]} : vector<4x2xf32> to vector<1x2xf32>
    %1149 = arith.mulf %1148, %1129 : vector<1x2xf32>
    %1150 = vector.extract_strided_slice %1146 {offsets = [0, 0], sizes = [1, 2], strides = [1, 1]} : vector<4x2xf32> to vector<1x2xf32>
    %1151 = vector.extract_strided_slice %1147 {offsets = [2, 0], sizes = [1, 2], strides = [1, 1]} : vector<4x2xf32> to vector<1x2xf32>
    %1152 = arith.mulf %1150, %1151 : vector<1x2xf32>
    %1153 = arith.addf %1149, %1152 : vector<1x2xf32>
    %1154 = vector.extract_strided_slice %1146 {offsets = [3, 0], sizes = [1, 2], strides = [1, 1]} : vector<4x2xf32> to vector<1x2xf32>
    %1155 = math.tanh %1153 : vector<1x2xf32>
    %1156 = arith.mulf %1154, %1155 : vector<1x2xf32>
    %1157 = vector.broadcast %1104 : vector<4x1xf32> to vector<4x2xf32>
    %1158 = vector.broadcast %983 : vector<1x2xf32> to vector<4x2xf32>
    %1159 = arith.mulf %1157, %1158 : vector<4x2xf32>
    %1160 = vector.broadcast %1105 : vector<4x1xf32> to vector<4x2xf32>
    %1161 = vector.broadcast %1156 : vector<1x2xf32> to vector<4x2xf32>
    %1162 = arith.mulf %1160, %1161 : vector<4x2xf32>
    %1163 = arith.addf %1159, %1162 : vector<4x2xf32>
    %1164 = vector.broadcast %1106 : vector<4x1xf32> to vector<4x2xf32>
    %1165 = arith.addf %1163, %1164 : vector<4x2xf32>
    %1166 = arith.negf %1165 : vector<4x2xf32>
    %1167 = math.exp %1166 : vector<4x2xf32>
    %cst_53 = arith.constant 1.000000e+00 : f32
    %1168 = vector.broadcast %cst_53 : f32 to vector<4x2xf32>
    %1169 = arith.addf %1168, %1167 : vector<4x2xf32>
    %1170 = arith.divf %1168, %1169 : vector<4x2xf32>
    %1171 = math.tanh %1165 : vector<4x2xf32>
    %1172 = vector.extract_strided_slice %1170 {offsets = [1, 0], sizes = [1, 2], strides = [1, 1]} : vector<4x2xf32> to vector<1x2xf32>
    %1173 = arith.mulf %1172, %1153 : vector<1x2xf32>
    %1174 = vector.extract_strided_slice %1170 {offsets = [0, 0], sizes = [1, 2], strides = [1, 1]} : vector<4x2xf32> to vector<1x2xf32>
    %1175 = vector.extract_strided_slice %1171 {offsets = [2, 0], sizes = [1, 2], strides = [1, 1]} : vector<4x2xf32> to vector<1x2xf32>
    %1176 = arith.mulf %1174, %1175 : vector<1x2xf32>
    %1177 = arith.addf %1173, %1176 : vector<1x2xf32>
    %1178 = vector.extract_strided_slice %1170 {offsets = [3, 0], sizes = [1, 2], strides = [1, 1]} : vector<4x2xf32> to vector<1x2xf32>
    %1179 = math.tanh %1177 : vector<1x2xf32>
    %1180 = arith.mulf %1178, %1179 : vector<1x2xf32>
    %1181 = vector.broadcast %1104 : vector<4x1xf32> to vector<4x2xf32>
    %1182 = vector.broadcast %1007 : vector<1x2xf32> to vector<4x2xf32>
    %1183 = arith.mulf %1181, %1182 : vector<4x2xf32>
    %1184 = vector.broadcast %1105 : vector<4x1xf32> to vector<4x2xf32>
    %1185 = vector.broadcast %1180 : vector<1x2xf32> to vector<4x2xf32>
    %1186 = arith.mulf %1184, %1185 : vector<4x2xf32>
    %1187 = arith.addf %1183, %1186 : vector<4x2xf32>
    %1188 = vector.broadcast %1106 : vector<4x1xf32> to vector<4x2xf32>
    %1189 = arith.addf %1187, %1188 : vector<4x2xf32>
    %1190 = arith.negf %1189 : vector<4x2xf32>
    %1191 = math.exp %1190 : vector<4x2xf32>
    %cst_54 = arith.constant 1.000000e+00 : f32
    %1192 = vector.broadcast %cst_54 : f32 to vector<4x2xf32>
    %1193 = arith.addf %1192, %1191 : vector<4x2xf32>
    %1194 = arith.divf %1192, %1193 : vector<4x2xf32>
    %1195 = math.tanh %1189 : vector<4x2xf32>
    %1196 = vector.extract_strided_slice %1194 {offsets = [1, 0], sizes = [1, 2], strides = [1, 1]} : vector<4x2xf32> to vector<1x2xf32>
    %1197 = arith.mulf %1196, %1177 : vector<1x2xf32>
    %1198 = vector.extract_strided_slice %1194 {offsets = [0, 0], sizes = [1, 2], strides = [1, 1]} : vector<4x2xf32> to vector<1x2xf32>
    %1199 = vector.extract_strided_slice %1195 {offsets = [2, 0], sizes = [1, 2], strides = [1, 1]} : vector<4x2xf32> to vector<1x2xf32>
    %1200 = arith.mulf %1198, %1199 : vector<1x2xf32>
    %1201 = arith.addf %1197, %1200 : vector<1x2xf32>
    %1202 = vector.extract_strided_slice %1194 {offsets = [3, 0], sizes = [1, 2], strides = [1, 1]} : vector<4x2xf32> to vector<1x2xf32>
    %1203 = math.tanh %1201 : vector<1x2xf32>
    %1204 = arith.mulf %1202, %1203 : vector<1x2xf32>
    %1205 = vector.broadcast %1104 : vector<4x1xf32> to vector<4x2xf32>
    %1206 = vector.broadcast %1031 : vector<1x2xf32> to vector<4x2xf32>
    %1207 = arith.mulf %1205, %1206 : vector<4x2xf32>
    %1208 = vector.broadcast %1105 : vector<4x1xf32> to vector<4x2xf32>
    %1209 = vector.broadcast %1204 : vector<1x2xf32> to vector<4x2xf32>
    %1210 = arith.mulf %1208, %1209 : vector<4x2xf32>
    %1211 = arith.addf %1207, %1210 : vector<4x2xf32>
    %1212 = vector.broadcast %1106 : vector<4x1xf32> to vector<4x2xf32>
    %1213 = arith.addf %1211, %1212 : vector<4x2xf32>
    %1214 = arith.negf %1213 : vector<4x2xf32>
    %1215 = math.exp %1214 : vector<4x2xf32>
    %cst_55 = arith.constant 1.000000e+00 : f32
    %1216 = vector.broadcast %cst_55 : f32 to vector<4x2xf32>
    %1217 = arith.addf %1216, %1215 : vector<4x2xf32>
    %1218 = arith.divf %1216, %1217 : vector<4x2xf32>
    %1219 = math.tanh %1213 : vector<4x2xf32>
    %1220 = vector.extract_strided_slice %1218 {offsets = [1, 0], sizes = [1, 2], strides = [1, 1]} : vector<4x2xf32> to vector<1x2xf32>
    %1221 = arith.mulf %1220, %1201 : vector<1x2xf32>
    %1222 = vector.extract_strided_slice %1218 {offsets = [0, 0], sizes = [1, 2], strides = [1, 1]} : vector<4x2xf32> to vector<1x2xf32>
    %1223 = vector.extract_strided_slice %1219 {offsets = [2, 0], sizes = [1, 2], strides = [1, 1]} : vector<4x2xf32> to vector<1x2xf32>
    %1224 = arith.mulf %1222, %1223 : vector<1x2xf32>
    %1225 = arith.addf %1221, %1224 : vector<1x2xf32>
    %1226 = vector.extract_strided_slice %1218 {offsets = [3, 0], sizes = [1, 2], strides = [1, 1]} : vector<4x2xf32> to vector<1x2xf32>
    %1227 = math.tanh %1225 : vector<1x2xf32>
    %1228 = arith.mulf %1226, %1227 : vector<1x2xf32>
    %1229 = vector.broadcast %1104 : vector<4x1xf32> to vector<4x2xf32>
    %1230 = vector.broadcast %1055 : vector<1x2xf32> to vector<4x2xf32>
    %1231 = arith.mulf %1229, %1230 : vector<4x2xf32>
    %1232 = vector.broadcast %1105 : vector<4x1xf32> to vector<4x2xf32>
    %1233 = vector.broadcast %1228 : vector<1x2xf32> to vector<4x2xf32>
    %1234 = arith.mulf %1232, %1233 : vector<4x2xf32>
    %1235 = arith.addf %1231, %1234 : vector<4x2xf32>
    %1236 = vector.broadcast %1106 : vector<4x1xf32> to vector<4x2xf32>
    %1237 = arith.addf %1235, %1236 : vector<4x2xf32>
    %1238 = arith.negf %1237 : vector<4x2xf32>
    %1239 = math.exp %1238 : vector<4x2xf32>
    %cst_56 = arith.constant 1.000000e+00 : f32
    %1240 = vector.broadcast %cst_56 : f32 to vector<4x2xf32>
    %1241 = arith.addf %1240, %1239 : vector<4x2xf32>
    %1242 = arith.divf %1240, %1241 : vector<4x2xf32>
    %1243 = math.tanh %1237 : vector<4x2xf32>
    %1244 = vector.extract_strided_slice %1242 {offsets = [1, 0], sizes = [1, 2], strides = [1, 1]} : vector<4x2xf32> to vector<1x2xf32>
    %1245 = arith.mulf %1244, %1225 : vector<1x2xf32>
    %1246 = vector.extract_strided_slice %1242 {offsets = [0, 0], sizes = [1, 2], strides = [1, 1]} : vector<4x2xf32> to vector<1x2xf32>
    %1247 = vector.extract_strided_slice %1243 {offsets = [2, 0], sizes = [1, 2], strides = [1, 1]} : vector<4x2xf32> to vector<1x2xf32>
    %1248 = arith.mulf %1246, %1247 : vector<1x2xf32>
    %1249 = arith.addf %1245, %1248 : vector<1x2xf32>
    %1250 = vector.extract_strided_slice %1242 {offsets = [3, 0], sizes = [1, 2], strides = [1, 1]} : vector<4x2xf32> to vector<1x2xf32>
    %1251 = math.tanh %1249 : vector<1x2xf32>
    %1252 = arith.mulf %1250, %1251 : vector<1x2xf32>
    %1253 = vector.broadcast %1104 : vector<4x1xf32> to vector<4x2xf32>
    %1254 = vector.broadcast %1079 : vector<1x2xf32> to vector<4x2xf32>
    %1255 = arith.mulf %1253, %1254 : vector<4x2xf32>
    %1256 = vector.broadcast %1105 : vector<4x1xf32> to vector<4x2xf32>
    %1257 = vector.broadcast %1252 : vector<1x2xf32> to vector<4x2xf32>
    %1258 = arith.mulf %1256, %1257 : vector<4x2xf32>
    %1259 = arith.addf %1255, %1258 : vector<4x2xf32>
    %1260 = vector.broadcast %1106 : vector<4x1xf32> to vector<4x2xf32>
    %1261 = arith.addf %1259, %1260 : vector<4x2xf32>
    %1262 = arith.negf %1261 : vector<4x2xf32>
    %1263 = math.exp %1262 : vector<4x2xf32>
    %cst_57 = arith.constant 1.000000e+00 : f32
    %1264 = vector.broadcast %cst_57 : f32 to vector<4x2xf32>
    %1265 = arith.addf %1264, %1263 : vector<4x2xf32>
    %1266 = arith.divf %1264, %1265 : vector<4x2xf32>
    %1267 = math.tanh %1261 : vector<4x2xf32>
    %1268 = vector.extract_strided_slice %1266 {offsets = [1, 0], sizes = [1, 2], strides = [1, 1]} : vector<4x2xf32> to vector<1x2xf32>
    %1269 = arith.mulf %1268, %1249 : vector<1x2xf32>
    %1270 = vector.extract_strided_slice %1266 {offsets = [0, 0], sizes = [1, 2], strides = [1, 1]} : vector<4x2xf32> to vector<1x2xf32>
    %1271 = vector.extract_strided_slice %1267 {offsets = [2, 0], sizes = [1, 2], strides = [1, 1]} : vector<4x2xf32> to vector<1x2xf32>
    %1272 = arith.mulf %1270, %1271 : vector<1x2xf32>
    %1273 = arith.addf %1269, %1272 : vector<1x2xf32>
    %1274 = vector.extract_strided_slice %1266 {offsets = [3, 0], sizes = [1, 2], strides = [1, 1]} : vector<4x2xf32> to vector<1x2xf32>
    %1275 = math.tanh %1273 : vector<1x2xf32>
    %1276 = arith.mulf %1274, %1275 : vector<1x2xf32>
    %1277 = vector.broadcast %1104 : vector<4x1xf32> to vector<4x2xf32>
    %1278 = vector.broadcast %1103 : vector<1x2xf32> to vector<4x2xf32>
    %1279 = arith.mulf %1277, %1278 : vector<4x2xf32>
    %1280 = vector.broadcast %1105 : vector<4x1xf32> to vector<4x2xf32>
    %1281 = vector.broadcast %1276 : vector<1x2xf32> to vector<4x2xf32>
    %1282 = arith.mulf %1280, %1281 : vector<4x2xf32>
    %1283 = arith.addf %1279, %1282 : vector<4x2xf32>
    %1284 = vector.broadcast %1106 : vector<4x1xf32> to vector<4x2xf32>
    %1285 = arith.addf %1283, %1284 : vector<4x2xf32>
    %1286 = arith.negf %1285 : vector<4x2xf32>
    %1287 = math.exp %1286 : vector<4x2xf32>
    %cst_58 = arith.constant 1.000000e+00 : f32
    %1288 = vector.broadcast %cst_58 : f32 to vector<4x2xf32>
    %1289 = arith.addf %1288, %1287 : vector<4x2xf32>
    %1290 = arith.divf %1288, %1289 : vector<4x2xf32>
    %1291 = math.tanh %1285 : vector<4x2xf32>
    %1292 = vector.extract_strided_slice %1290 {offsets = [1, 0], sizes = [1, 2], strides = [1, 1]} : vector<4x2xf32> to vector<1x2xf32>
    %1293 = arith.mulf %1292, %1273 : vector<1x2xf32>
    %1294 = vector.extract_strided_slice %1290 {offsets = [0, 0], sizes = [1, 2], strides = [1, 1]} : vector<4x2xf32> to vector<1x2xf32>
    %1295 = vector.extract_strided_slice %1291 {offsets = [2, 0], sizes = [1, 2], strides = [1, 1]} : vector<4x2xf32> to vector<1x2xf32>
    %1296 = arith.mulf %1294, %1295 : vector<1x2xf32>
    %1297 = arith.addf %1293, %1296 : vector<1x2xf32>
    %1298 = vector.extract_strided_slice %1290 {offsets = [3, 0], sizes = [1, 2], strides = [1, 1]} : vector<4x2xf32> to vector<1x2xf32>
    %1299 = math.tanh %1297 : vector<1x2xf32>
    %1300 = arith.mulf %1298, %1299 : vector<1x2xf32>
    %1301 = vector.extract_strided_slice %2 {offsets = [0, 4], sizes = [4, 1], strides = [1, 1]} : vector<4x9xf32> to vector<4x1xf32>
    %1302 = vector.extract_strided_slice %3 {offsets = [0, 5], sizes = [4, 1], strides = [1, 1]} : vector<4x10xf32> to vector<4x1xf32>
    %1303 = vector.extract_strided_slice %4 {offsets = [0, 5], sizes = [4, 1], strides = [1, 1]} : vector<4x10xf32> to vector<4x1xf32>
    %cst_59 = arith.constant 0.000000e+00 : f32
    %1304 = vector.broadcast %cst_59 : f32 to vector<1x2xf32>
    %cst_60 = arith.constant 0.000000e+00 : f32
    %1305 = vector.broadcast %cst_60 : f32 to vector<1x2xf32>
    %1306 = vector.broadcast %1301 : vector<4x1xf32> to vector<4x2xf32>
    %1307 = vector.broadcast %1132 : vector<1x2xf32> to vector<4x2xf32>
    %1308 = arith.mulf %1306, %1307 : vector<4x2xf32>
    %1309 = vector.broadcast %1302 : vector<4x1xf32> to vector<4x2xf32>
    %1310 = vector.broadcast %1304 : vector<1x2xf32> to vector<4x2xf32>
    %1311 = arith.mulf %1309, %1310 : vector<4x2xf32>
    %1312 = arith.addf %1308, %1311 : vector<4x2xf32>
    %1313 = vector.broadcast %1303 : vector<4x1xf32> to vector<4x2xf32>
    %1314 = arith.addf %1312, %1313 : vector<4x2xf32>
    %1315 = arith.negf %1314 : vector<4x2xf32>
    %1316 = math.exp %1315 : vector<4x2xf32>
    %cst_61 = arith.constant 1.000000e+00 : f32
    %1317 = vector.broadcast %cst_61 : f32 to vector<4x2xf32>
    %1318 = arith.addf %1317, %1316 : vector<4x2xf32>
    %1319 = arith.divf %1317, %1318 : vector<4x2xf32>
    %1320 = math.tanh %1314 : vector<4x2xf32>
    %1321 = vector.extract_strided_slice %1319 {offsets = [1, 0], sizes = [1, 2], strides = [1, 1]} : vector<4x2xf32> to vector<1x2xf32>
    %1322 = arith.mulf %1321, %1305 : vector<1x2xf32>
    %1323 = vector.extract_strided_slice %1319 {offsets = [0, 0], sizes = [1, 2], strides = [1, 1]} : vector<4x2xf32> to vector<1x2xf32>
    %1324 = vector.extract_strided_slice %1320 {offsets = [2, 0], sizes = [1, 2], strides = [1, 1]} : vector<4x2xf32> to vector<1x2xf32>
    %1325 = arith.mulf %1323, %1324 : vector<1x2xf32>
    %1326 = arith.addf %1322, %1325 : vector<1x2xf32>
    %1327 = vector.extract_strided_slice %1319 {offsets = [3, 0], sizes = [1, 2], strides = [1, 1]} : vector<4x2xf32> to vector<1x2xf32>
    %1328 = math.tanh %1326 : vector<1x2xf32>
    %1329 = arith.mulf %1327, %1328 : vector<1x2xf32>
    %1330 = vector.broadcast %1301 : vector<4x1xf32> to vector<4x2xf32>
    %1331 = vector.broadcast %1156 : vector<1x2xf32> to vector<4x2xf32>
    %1332 = arith.mulf %1330, %1331 : vector<4x2xf32>
    %1333 = vector.broadcast %1302 : vector<4x1xf32> to vector<4x2xf32>
    %1334 = vector.broadcast %1329 : vector<1x2xf32> to vector<4x2xf32>
    %1335 = arith.mulf %1333, %1334 : vector<4x2xf32>
    %1336 = arith.addf %1332, %1335 : vector<4x2xf32>
    %1337 = vector.broadcast %1303 : vector<4x1xf32> to vector<4x2xf32>
    %1338 = arith.addf %1336, %1337 : vector<4x2xf32>
    %1339 = arith.negf %1338 : vector<4x2xf32>
    %1340 = math.exp %1339 : vector<4x2xf32>
    %cst_62 = arith.constant 1.000000e+00 : f32
    %1341 = vector.broadcast %cst_62 : f32 to vector<4x2xf32>
    %1342 = arith.addf %1341, %1340 : vector<4x2xf32>
    %1343 = arith.divf %1341, %1342 : vector<4x2xf32>
    %1344 = math.tanh %1338 : vector<4x2xf32>
    %1345 = vector.extract_strided_slice %1343 {offsets = [1, 0], sizes = [1, 2], strides = [1, 1]} : vector<4x2xf32> to vector<1x2xf32>
    %1346 = arith.mulf %1345, %1326 : vector<1x2xf32>
    %1347 = vector.extract_strided_slice %1343 {offsets = [0, 0], sizes = [1, 2], strides = [1, 1]} : vector<4x2xf32> to vector<1x2xf32>
    %1348 = vector.extract_strided_slice %1344 {offsets = [2, 0], sizes = [1, 2], strides = [1, 1]} : vector<4x2xf32> to vector<1x2xf32>
    %1349 = arith.mulf %1347, %1348 : vector<1x2xf32>
    %1350 = arith.addf %1346, %1349 : vector<1x2xf32>
    %1351 = vector.extract_strided_slice %1343 {offsets = [3, 0], sizes = [1, 2], strides = [1, 1]} : vector<4x2xf32> to vector<1x2xf32>
    %1352 = math.tanh %1350 : vector<1x2xf32>
    %1353 = arith.mulf %1351, %1352 : vector<1x2xf32>
    %1354 = vector.broadcast %1301 : vector<4x1xf32> to vector<4x2xf32>
    %1355 = vector.broadcast %1180 : vector<1x2xf32> to vector<4x2xf32>
    %1356 = arith.mulf %1354, %1355 : vector<4x2xf32>
    %1357 = vector.broadcast %1302 : vector<4x1xf32> to vector<4x2xf32>
    %1358 = vector.broadcast %1353 : vector<1x2xf32> to vector<4x2xf32>
    %1359 = arith.mulf %1357, %1358 : vector<4x2xf32>
    %1360 = arith.addf %1356, %1359 : vector<4x2xf32>
    %1361 = vector.broadcast %1303 : vector<4x1xf32> to vector<4x2xf32>
    %1362 = arith.addf %1360, %1361 : vector<4x2xf32>
    %1363 = arith.negf %1362 : vector<4x2xf32>
    %1364 = math.exp %1363 : vector<4x2xf32>
    %cst_63 = arith.constant 1.000000e+00 : f32
    %1365 = vector.broadcast %cst_63 : f32 to vector<4x2xf32>
    %1366 = arith.addf %1365, %1364 : vector<4x2xf32>
    %1367 = arith.divf %1365, %1366 : vector<4x2xf32>
    %1368 = math.tanh %1362 : vector<4x2xf32>
    %1369 = vector.extract_strided_slice %1367 {offsets = [1, 0], sizes = [1, 2], strides = [1, 1]} : vector<4x2xf32> to vector<1x2xf32>
    %1370 = arith.mulf %1369, %1350 : vector<1x2xf32>
    %1371 = vector.extract_strided_slice %1367 {offsets = [0, 0], sizes = [1, 2], strides = [1, 1]} : vector<4x2xf32> to vector<1x2xf32>
    %1372 = vector.extract_strided_slice %1368 {offsets = [2, 0], sizes = [1, 2], strides = [1, 1]} : vector<4x2xf32> to vector<1x2xf32>
    %1373 = arith.mulf %1371, %1372 : vector<1x2xf32>
    %1374 = arith.addf %1370, %1373 : vector<1x2xf32>
    %1375 = vector.extract_strided_slice %1367 {offsets = [3, 0], sizes = [1, 2], strides = [1, 1]} : vector<4x2xf32> to vector<1x2xf32>
    %1376 = math.tanh %1374 : vector<1x2xf32>
    %1377 = arith.mulf %1375, %1376 : vector<1x2xf32>
    %1378 = vector.broadcast %1301 : vector<4x1xf32> to vector<4x2xf32>
    %1379 = vector.broadcast %1204 : vector<1x2xf32> to vector<4x2xf32>
    %1380 = arith.mulf %1378, %1379 : vector<4x2xf32>
    %1381 = vector.broadcast %1302 : vector<4x1xf32> to vector<4x2xf32>
    %1382 = vector.broadcast %1377 : vector<1x2xf32> to vector<4x2xf32>
    %1383 = arith.mulf %1381, %1382 : vector<4x2xf32>
    %1384 = arith.addf %1380, %1383 : vector<4x2xf32>
    %1385 = vector.broadcast %1303 : vector<4x1xf32> to vector<4x2xf32>
    %1386 = arith.addf %1384, %1385 : vector<4x2xf32>
    %1387 = arith.negf %1386 : vector<4x2xf32>
    %1388 = math.exp %1387 : vector<4x2xf32>
    %cst_64 = arith.constant 1.000000e+00 : f32
    %1389 = vector.broadcast %cst_64 : f32 to vector<4x2xf32>
    %1390 = arith.addf %1389, %1388 : vector<4x2xf32>
    %1391 = arith.divf %1389, %1390 : vector<4x2xf32>
    %1392 = math.tanh %1386 : vector<4x2xf32>
    %1393 = vector.extract_strided_slice %1391 {offsets = [1, 0], sizes = [1, 2], strides = [1, 1]} : vector<4x2xf32> to vector<1x2xf32>
    %1394 = arith.mulf %1393, %1374 : vector<1x2xf32>
    %1395 = vector.extract_strided_slice %1391 {offsets = [0, 0], sizes = [1, 2], strides = [1, 1]} : vector<4x2xf32> to vector<1x2xf32>
    %1396 = vector.extract_strided_slice %1392 {offsets = [2, 0], sizes = [1, 2], strides = [1, 1]} : vector<4x2xf32> to vector<1x2xf32>
    %1397 = arith.mulf %1395, %1396 : vector<1x2xf32>
    %1398 = arith.addf %1394, %1397 : vector<1x2xf32>
    %1399 = vector.extract_strided_slice %1391 {offsets = [3, 0], sizes = [1, 2], strides = [1, 1]} : vector<4x2xf32> to vector<1x2xf32>
    %1400 = math.tanh %1398 : vector<1x2xf32>
    %1401 = arith.mulf %1399, %1400 : vector<1x2xf32>
    %1402 = vector.broadcast %1301 : vector<4x1xf32> to vector<4x2xf32>
    %1403 = vector.broadcast %1228 : vector<1x2xf32> to vector<4x2xf32>
    %1404 = arith.mulf %1402, %1403 : vector<4x2xf32>
    %1405 = vector.broadcast %1302 : vector<4x1xf32> to vector<4x2xf32>
    %1406 = vector.broadcast %1401 : vector<1x2xf32> to vector<4x2xf32>
    %1407 = arith.mulf %1405, %1406 : vector<4x2xf32>
    %1408 = arith.addf %1404, %1407 : vector<4x2xf32>
    %1409 = vector.broadcast %1303 : vector<4x1xf32> to vector<4x2xf32>
    %1410 = arith.addf %1408, %1409 : vector<4x2xf32>
    %1411 = arith.negf %1410 : vector<4x2xf32>
    %1412 = math.exp %1411 : vector<4x2xf32>
    %cst_65 = arith.constant 1.000000e+00 : f32
    %1413 = vector.broadcast %cst_65 : f32 to vector<4x2xf32>
    %1414 = arith.addf %1413, %1412 : vector<4x2xf32>
    %1415 = arith.divf %1413, %1414 : vector<4x2xf32>
    %1416 = math.tanh %1410 : vector<4x2xf32>
    %1417 = vector.extract_strided_slice %1415 {offsets = [1, 0], sizes = [1, 2], strides = [1, 1]} : vector<4x2xf32> to vector<1x2xf32>
    %1418 = arith.mulf %1417, %1398 : vector<1x2xf32>
    %1419 = vector.extract_strided_slice %1415 {offsets = [0, 0], sizes = [1, 2], strides = [1, 1]} : vector<4x2xf32> to vector<1x2xf32>
    %1420 = vector.extract_strided_slice %1416 {offsets = [2, 0], sizes = [1, 2], strides = [1, 1]} : vector<4x2xf32> to vector<1x2xf32>
    %1421 = arith.mulf %1419, %1420 : vector<1x2xf32>
    %1422 = arith.addf %1418, %1421 : vector<1x2xf32>
    %1423 = vector.extract_strided_slice %1415 {offsets = [3, 0], sizes = [1, 2], strides = [1, 1]} : vector<4x2xf32> to vector<1x2xf32>
    %1424 = math.tanh %1422 : vector<1x2xf32>
    %1425 = arith.mulf %1423, %1424 : vector<1x2xf32>
    %1426 = vector.broadcast %1301 : vector<4x1xf32> to vector<4x2xf32>
    %1427 = vector.broadcast %1252 : vector<1x2xf32> to vector<4x2xf32>
    %1428 = arith.mulf %1426, %1427 : vector<4x2xf32>
    %1429 = vector.broadcast %1302 : vector<4x1xf32> to vector<4x2xf32>
    %1430 = vector.broadcast %1425 : vector<1x2xf32> to vector<4x2xf32>
    %1431 = arith.mulf %1429, %1430 : vector<4x2xf32>
    %1432 = arith.addf %1428, %1431 : vector<4x2xf32>
    %1433 = vector.broadcast %1303 : vector<4x1xf32> to vector<4x2xf32>
    %1434 = arith.addf %1432, %1433 : vector<4x2xf32>
    %1435 = arith.negf %1434 : vector<4x2xf32>
    %1436 = math.exp %1435 : vector<4x2xf32>
    %cst_66 = arith.constant 1.000000e+00 : f32
    %1437 = vector.broadcast %cst_66 : f32 to vector<4x2xf32>
    %1438 = arith.addf %1437, %1436 : vector<4x2xf32>
    %1439 = arith.divf %1437, %1438 : vector<4x2xf32>
    %1440 = math.tanh %1434 : vector<4x2xf32>
    %1441 = vector.extract_strided_slice %1439 {offsets = [1, 0], sizes = [1, 2], strides = [1, 1]} : vector<4x2xf32> to vector<1x2xf32>
    %1442 = arith.mulf %1441, %1422 : vector<1x2xf32>
    %1443 = vector.extract_strided_slice %1439 {offsets = [0, 0], sizes = [1, 2], strides = [1, 1]} : vector<4x2xf32> to vector<1x2xf32>
    %1444 = vector.extract_strided_slice %1440 {offsets = [2, 0], sizes = [1, 2], strides = [1, 1]} : vector<4x2xf32> to vector<1x2xf32>
    %1445 = arith.mulf %1443, %1444 : vector<1x2xf32>
    %1446 = arith.addf %1442, %1445 : vector<1x2xf32>
    %1447 = vector.extract_strided_slice %1439 {offsets = [3, 0], sizes = [1, 2], strides = [1, 1]} : vector<4x2xf32> to vector<1x2xf32>
    %1448 = math.tanh %1446 : vector<1x2xf32>
    %1449 = arith.mulf %1447, %1448 : vector<1x2xf32>
    %1450 = vector.broadcast %1301 : vector<4x1xf32> to vector<4x2xf32>
    %1451 = vector.broadcast %1276 : vector<1x2xf32> to vector<4x2xf32>
    %1452 = arith.mulf %1450, %1451 : vector<4x2xf32>
    %1453 = vector.broadcast %1302 : vector<4x1xf32> to vector<4x2xf32>
    %1454 = vector.broadcast %1449 : vector<1x2xf32> to vector<4x2xf32>
    %1455 = arith.mulf %1453, %1454 : vector<4x2xf32>
    %1456 = arith.addf %1452, %1455 : vector<4x2xf32>
    %1457 = vector.broadcast %1303 : vector<4x1xf32> to vector<4x2xf32>
    %1458 = arith.addf %1456, %1457 : vector<4x2xf32>
    %1459 = arith.negf %1458 : vector<4x2xf32>
    %1460 = math.exp %1459 : vector<4x2xf32>
    %cst_67 = arith.constant 1.000000e+00 : f32
    %1461 = vector.broadcast %cst_67 : f32 to vector<4x2xf32>
    %1462 = arith.addf %1461, %1460 : vector<4x2xf32>
    %1463 = arith.divf %1461, %1462 : vector<4x2xf32>
    %1464 = math.tanh %1458 : vector<4x2xf32>
    %1465 = vector.extract_strided_slice %1463 {offsets = [1, 0], sizes = [1, 2], strides = [1, 1]} : vector<4x2xf32> to vector<1x2xf32>
    %1466 = arith.mulf %1465, %1446 : vector<1x2xf32>
    %1467 = vector.extract_strided_slice %1463 {offsets = [0, 0], sizes = [1, 2], strides = [1, 1]} : vector<4x2xf32> to vector<1x2xf32>
    %1468 = vector.extract_strided_slice %1464 {offsets = [2, 0], sizes = [1, 2], strides = [1, 1]} : vector<4x2xf32> to vector<1x2xf32>
    %1469 = arith.mulf %1467, %1468 : vector<1x2xf32>
    %1470 = arith.addf %1466, %1469 : vector<1x2xf32>
    %1471 = vector.extract_strided_slice %1463 {offsets = [3, 0], sizes = [1, 2], strides = [1, 1]} : vector<4x2xf32> to vector<1x2xf32>
    %1472 = math.tanh %1470 : vector<1x2xf32>
    %1473 = arith.mulf %1471, %1472 : vector<1x2xf32>
    %1474 = vector.broadcast %1301 : vector<4x1xf32> to vector<4x2xf32>
    %1475 = vector.broadcast %1300 : vector<1x2xf32> to vector<4x2xf32>
    %1476 = arith.mulf %1474, %1475 : vector<4x2xf32>
    %1477 = vector.broadcast %1302 : vector<4x1xf32> to vector<4x2xf32>
    %1478 = vector.broadcast %1473 : vector<1x2xf32> to vector<4x2xf32>
    %1479 = arith.mulf %1477, %1478 : vector<4x2xf32>
    %1480 = arith.addf %1476, %1479 : vector<4x2xf32>
    %1481 = vector.broadcast %1303 : vector<4x1xf32> to vector<4x2xf32>
    %1482 = arith.addf %1480, %1481 : vector<4x2xf32>
    %1483 = arith.negf %1482 : vector<4x2xf32>
    %1484 = math.exp %1483 : vector<4x2xf32>
    %cst_68 = arith.constant 1.000000e+00 : f32
    %1485 = vector.broadcast %cst_68 : f32 to vector<4x2xf32>
    %1486 = arith.addf %1485, %1484 : vector<4x2xf32>
    %1487 = arith.divf %1485, %1486 : vector<4x2xf32>
    %1488 = math.tanh %1482 : vector<4x2xf32>
    %1489 = vector.extract_strided_slice %1487 {offsets = [1, 0], sizes = [1, 2], strides = [1, 1]} : vector<4x2xf32> to vector<1x2xf32>
    %1490 = arith.mulf %1489, %1470 : vector<1x2xf32>
    %1491 = vector.extract_strided_slice %1487 {offsets = [0, 0], sizes = [1, 2], strides = [1, 1]} : vector<4x2xf32> to vector<1x2xf32>
    %1492 = vector.extract_strided_slice %1488 {offsets = [2, 0], sizes = [1, 2], strides = [1, 1]} : vector<4x2xf32> to vector<1x2xf32>
    %1493 = arith.mulf %1491, %1492 : vector<1x2xf32>
    %1494 = arith.addf %1490, %1493 : vector<1x2xf32>
    %1495 = vector.extract_strided_slice %1487 {offsets = [3, 0], sizes = [1, 2], strides = [1, 1]} : vector<4x2xf32> to vector<1x2xf32>
    %1496 = math.tanh %1494 : vector<1x2xf32>
    %1497 = arith.mulf %1495, %1496 : vector<1x2xf32>
    %1498 = vector.extract_strided_slice %2 {offsets = [0, 5], sizes = [4, 1], strides = [1, 1]} : vector<4x9xf32> to vector<4x1xf32>
    %1499 = vector.extract_strided_slice %3 {offsets = [0, 6], sizes = [4, 1], strides = [1, 1]} : vector<4x10xf32> to vector<4x1xf32>
    %1500 = vector.extract_strided_slice %4 {offsets = [0, 6], sizes = [4, 1], strides = [1, 1]} : vector<4x10xf32> to vector<4x1xf32>
    %cst_69 = arith.constant 0.000000e+00 : f32
    %1501 = vector.broadcast %cst_69 : f32 to vector<1x2xf32>
    %cst_70 = arith.constant 0.000000e+00 : f32
    %1502 = vector.broadcast %cst_70 : f32 to vector<1x2xf32>
    %1503 = vector.broadcast %1498 : vector<4x1xf32> to vector<4x2xf32>
    %1504 = vector.broadcast %1329 : vector<1x2xf32> to vector<4x2xf32>
    %1505 = arith.mulf %1503, %1504 : vector<4x2xf32>
    %1506 = vector.broadcast %1499 : vector<4x1xf32> to vector<4x2xf32>
    %1507 = vector.broadcast %1501 : vector<1x2xf32> to vector<4x2xf32>
    %1508 = arith.mulf %1506, %1507 : vector<4x2xf32>
    %1509 = arith.addf %1505, %1508 : vector<4x2xf32>
    %1510 = vector.broadcast %1500 : vector<4x1xf32> to vector<4x2xf32>
    %1511 = arith.addf %1509, %1510 : vector<4x2xf32>
    %1512 = arith.negf %1511 : vector<4x2xf32>
    %1513 = math.exp %1512 : vector<4x2xf32>
    %cst_71 = arith.constant 1.000000e+00 : f32
    %1514 = vector.broadcast %cst_71 : f32 to vector<4x2xf32>
    %1515 = arith.addf %1514, %1513 : vector<4x2xf32>
    %1516 = arith.divf %1514, %1515 : vector<4x2xf32>
    %1517 = math.tanh %1511 : vector<4x2xf32>
    %1518 = vector.extract_strided_slice %1516 {offsets = [1, 0], sizes = [1, 2], strides = [1, 1]} : vector<4x2xf32> to vector<1x2xf32>
    %1519 = arith.mulf %1518, %1502 : vector<1x2xf32>
    %1520 = vector.extract_strided_slice %1516 {offsets = [0, 0], sizes = [1, 2], strides = [1, 1]} : vector<4x2xf32> to vector<1x2xf32>
    %1521 = vector.extract_strided_slice %1517 {offsets = [2, 0], sizes = [1, 2], strides = [1, 1]} : vector<4x2xf32> to vector<1x2xf32>
    %1522 = arith.mulf %1520, %1521 : vector<1x2xf32>
    %1523 = arith.addf %1519, %1522 : vector<1x2xf32>
    %1524 = vector.extract_strided_slice %1516 {offsets = [3, 0], sizes = [1, 2], strides = [1, 1]} : vector<4x2xf32> to vector<1x2xf32>
    %1525 = math.tanh %1523 : vector<1x2xf32>
    %1526 = arith.mulf %1524, %1525 : vector<1x2xf32>
    %1527 = vector.broadcast %1498 : vector<4x1xf32> to vector<4x2xf32>
    %1528 = vector.broadcast %1353 : vector<1x2xf32> to vector<4x2xf32>
    %1529 = arith.mulf %1527, %1528 : vector<4x2xf32>
    %1530 = vector.broadcast %1499 : vector<4x1xf32> to vector<4x2xf32>
    %1531 = vector.broadcast %1526 : vector<1x2xf32> to vector<4x2xf32>
    %1532 = arith.mulf %1530, %1531 : vector<4x2xf32>
    %1533 = arith.addf %1529, %1532 : vector<4x2xf32>
    %1534 = vector.broadcast %1500 : vector<4x1xf32> to vector<4x2xf32>
    %1535 = arith.addf %1533, %1534 : vector<4x2xf32>
    %1536 = arith.negf %1535 : vector<4x2xf32>
    %1537 = math.exp %1536 : vector<4x2xf32>
    %cst_72 = arith.constant 1.000000e+00 : f32
    %1538 = vector.broadcast %cst_72 : f32 to vector<4x2xf32>
    %1539 = arith.addf %1538, %1537 : vector<4x2xf32>
    %1540 = arith.divf %1538, %1539 : vector<4x2xf32>
    %1541 = math.tanh %1535 : vector<4x2xf32>
    %1542 = vector.extract_strided_slice %1540 {offsets = [1, 0], sizes = [1, 2], strides = [1, 1]} : vector<4x2xf32> to vector<1x2xf32>
    %1543 = arith.mulf %1542, %1523 : vector<1x2xf32>
    %1544 = vector.extract_strided_slice %1540 {offsets = [0, 0], sizes = [1, 2], strides = [1, 1]} : vector<4x2xf32> to vector<1x2xf32>
    %1545 = vector.extract_strided_slice %1541 {offsets = [2, 0], sizes = [1, 2], strides = [1, 1]} : vector<4x2xf32> to vector<1x2xf32>
    %1546 = arith.mulf %1544, %1545 : vector<1x2xf32>
    %1547 = arith.addf %1543, %1546 : vector<1x2xf32>
    %1548 = vector.extract_strided_slice %1540 {offsets = [3, 0], sizes = [1, 2], strides = [1, 1]} : vector<4x2xf32> to vector<1x2xf32>
    %1549 = math.tanh %1547 : vector<1x2xf32>
    %1550 = arith.mulf %1548, %1549 : vector<1x2xf32>
    %1551 = vector.broadcast %1498 : vector<4x1xf32> to vector<4x2xf32>
    %1552 = vector.broadcast %1377 : vector<1x2xf32> to vector<4x2xf32>
    %1553 = arith.mulf %1551, %1552 : vector<4x2xf32>
    %1554 = vector.broadcast %1499 : vector<4x1xf32> to vector<4x2xf32>
    %1555 = vector.broadcast %1550 : vector<1x2xf32> to vector<4x2xf32>
    %1556 = arith.mulf %1554, %1555 : vector<4x2xf32>
    %1557 = arith.addf %1553, %1556 : vector<4x2xf32>
    %1558 = vector.broadcast %1500 : vector<4x1xf32> to vector<4x2xf32>
    %1559 = arith.addf %1557, %1558 : vector<4x2xf32>
    %1560 = arith.negf %1559 : vector<4x2xf32>
    %1561 = math.exp %1560 : vector<4x2xf32>
    %cst_73 = arith.constant 1.000000e+00 : f32
    %1562 = vector.broadcast %cst_73 : f32 to vector<4x2xf32>
    %1563 = arith.addf %1562, %1561 : vector<4x2xf32>
    %1564 = arith.divf %1562, %1563 : vector<4x2xf32>
    %1565 = math.tanh %1559 : vector<4x2xf32>
    %1566 = vector.extract_strided_slice %1564 {offsets = [1, 0], sizes = [1, 2], strides = [1, 1]} : vector<4x2xf32> to vector<1x2xf32>
    %1567 = arith.mulf %1566, %1547 : vector<1x2xf32>
    %1568 = vector.extract_strided_slice %1564 {offsets = [0, 0], sizes = [1, 2], strides = [1, 1]} : vector<4x2xf32> to vector<1x2xf32>
    %1569 = vector.extract_strided_slice %1565 {offsets = [2, 0], sizes = [1, 2], strides = [1, 1]} : vector<4x2xf32> to vector<1x2xf32>
    %1570 = arith.mulf %1568, %1569 : vector<1x2xf32>
    %1571 = arith.addf %1567, %1570 : vector<1x2xf32>
    %1572 = vector.extract_strided_slice %1564 {offsets = [3, 0], sizes = [1, 2], strides = [1, 1]} : vector<4x2xf32> to vector<1x2xf32>
    %1573 = math.tanh %1571 : vector<1x2xf32>
    %1574 = arith.mulf %1572, %1573 : vector<1x2xf32>
    %1575 = vector.broadcast %1498 : vector<4x1xf32> to vector<4x2xf32>
    %1576 = vector.broadcast %1401 : vector<1x2xf32> to vector<4x2xf32>
    %1577 = arith.mulf %1575, %1576 : vector<4x2xf32>
    %1578 = vector.broadcast %1499 : vector<4x1xf32> to vector<4x2xf32>
    %1579 = vector.broadcast %1574 : vector<1x2xf32> to vector<4x2xf32>
    %1580 = arith.mulf %1578, %1579 : vector<4x2xf32>
    %1581 = arith.addf %1577, %1580 : vector<4x2xf32>
    %1582 = vector.broadcast %1500 : vector<4x1xf32> to vector<4x2xf32>
    %1583 = arith.addf %1581, %1582 : vector<4x2xf32>
    %1584 = arith.negf %1583 : vector<4x2xf32>
    %1585 = math.exp %1584 : vector<4x2xf32>
    %cst_74 = arith.constant 1.000000e+00 : f32
    %1586 = vector.broadcast %cst_74 : f32 to vector<4x2xf32>
    %1587 = arith.addf %1586, %1585 : vector<4x2xf32>
    %1588 = arith.divf %1586, %1587 : vector<4x2xf32>
    %1589 = math.tanh %1583 : vector<4x2xf32>
    %1590 = vector.extract_strided_slice %1588 {offsets = [1, 0], sizes = [1, 2], strides = [1, 1]} : vector<4x2xf32> to vector<1x2xf32>
    %1591 = arith.mulf %1590, %1571 : vector<1x2xf32>
    %1592 = vector.extract_strided_slice %1588 {offsets = [0, 0], sizes = [1, 2], strides = [1, 1]} : vector<4x2xf32> to vector<1x2xf32>
    %1593 = vector.extract_strided_slice %1589 {offsets = [2, 0], sizes = [1, 2], strides = [1, 1]} : vector<4x2xf32> to vector<1x2xf32>
    %1594 = arith.mulf %1592, %1593 : vector<1x2xf32>
    %1595 = arith.addf %1591, %1594 : vector<1x2xf32>
    %1596 = vector.extract_strided_slice %1588 {offsets = [3, 0], sizes = [1, 2], strides = [1, 1]} : vector<4x2xf32> to vector<1x2xf32>
    %1597 = math.tanh %1595 : vector<1x2xf32>
    %1598 = arith.mulf %1596, %1597 : vector<1x2xf32>
    %1599 = vector.broadcast %1498 : vector<4x1xf32> to vector<4x2xf32>
    %1600 = vector.broadcast %1425 : vector<1x2xf32> to vector<4x2xf32>
    %1601 = arith.mulf %1599, %1600 : vector<4x2xf32>
    %1602 = vector.broadcast %1499 : vector<4x1xf32> to vector<4x2xf32>
    %1603 = vector.broadcast %1598 : vector<1x2xf32> to vector<4x2xf32>
    %1604 = arith.mulf %1602, %1603 : vector<4x2xf32>
    %1605 = arith.addf %1601, %1604 : vector<4x2xf32>
    %1606 = vector.broadcast %1500 : vector<4x1xf32> to vector<4x2xf32>
    %1607 = arith.addf %1605, %1606 : vector<4x2xf32>
    %1608 = arith.negf %1607 : vector<4x2xf32>
    %1609 = math.exp %1608 : vector<4x2xf32>
    %cst_75 = arith.constant 1.000000e+00 : f32
    %1610 = vector.broadcast %cst_75 : f32 to vector<4x2xf32>
    %1611 = arith.addf %1610, %1609 : vector<4x2xf32>
    %1612 = arith.divf %1610, %1611 : vector<4x2xf32>
    %1613 = math.tanh %1607 : vector<4x2xf32>
    %1614 = vector.extract_strided_slice %1612 {offsets = [1, 0], sizes = [1, 2], strides = [1, 1]} : vector<4x2xf32> to vector<1x2xf32>
    %1615 = arith.mulf %1614, %1595 : vector<1x2xf32>
    %1616 = vector.extract_strided_slice %1612 {offsets = [0, 0], sizes = [1, 2], strides = [1, 1]} : vector<4x2xf32> to vector<1x2xf32>
    %1617 = vector.extract_strided_slice %1613 {offsets = [2, 0], sizes = [1, 2], strides = [1, 1]} : vector<4x2xf32> to vector<1x2xf32>
    %1618 = arith.mulf %1616, %1617 : vector<1x2xf32>
    %1619 = arith.addf %1615, %1618 : vector<1x2xf32>
    %1620 = vector.extract_strided_slice %1612 {offsets = [3, 0], sizes = [1, 2], strides = [1, 1]} : vector<4x2xf32> to vector<1x2xf32>
    %1621 = math.tanh %1619 : vector<1x2xf32>
    %1622 = arith.mulf %1620, %1621 : vector<1x2xf32>
    %1623 = vector.broadcast %1498 : vector<4x1xf32> to vector<4x2xf32>
    %1624 = vector.broadcast %1449 : vector<1x2xf32> to vector<4x2xf32>
    %1625 = arith.mulf %1623, %1624 : vector<4x2xf32>
    %1626 = vector.broadcast %1499 : vector<4x1xf32> to vector<4x2xf32>
    %1627 = vector.broadcast %1622 : vector<1x2xf32> to vector<4x2xf32>
    %1628 = arith.mulf %1626, %1627 : vector<4x2xf32>
    %1629 = arith.addf %1625, %1628 : vector<4x2xf32>
    %1630 = vector.broadcast %1500 : vector<4x1xf32> to vector<4x2xf32>
    %1631 = arith.addf %1629, %1630 : vector<4x2xf32>
    %1632 = arith.negf %1631 : vector<4x2xf32>
    %1633 = math.exp %1632 : vector<4x2xf32>
    %cst_76 = arith.constant 1.000000e+00 : f32
    %1634 = vector.broadcast %cst_76 : f32 to vector<4x2xf32>
    %1635 = arith.addf %1634, %1633 : vector<4x2xf32>
    %1636 = arith.divf %1634, %1635 : vector<4x2xf32>
    %1637 = math.tanh %1631 : vector<4x2xf32>
    %1638 = vector.extract_strided_slice %1636 {offsets = [1, 0], sizes = [1, 2], strides = [1, 1]} : vector<4x2xf32> to vector<1x2xf32>
    %1639 = arith.mulf %1638, %1619 : vector<1x2xf32>
    %1640 = vector.extract_strided_slice %1636 {offsets = [0, 0], sizes = [1, 2], strides = [1, 1]} : vector<4x2xf32> to vector<1x2xf32>
    %1641 = vector.extract_strided_slice %1637 {offsets = [2, 0], sizes = [1, 2], strides = [1, 1]} : vector<4x2xf32> to vector<1x2xf32>
    %1642 = arith.mulf %1640, %1641 : vector<1x2xf32>
    %1643 = arith.addf %1639, %1642 : vector<1x2xf32>
    %1644 = vector.extract_strided_slice %1636 {offsets = [3, 0], sizes = [1, 2], strides = [1, 1]} : vector<4x2xf32> to vector<1x2xf32>
    %1645 = math.tanh %1643 : vector<1x2xf32>
    %1646 = arith.mulf %1644, %1645 : vector<1x2xf32>
    %1647 = vector.broadcast %1498 : vector<4x1xf32> to vector<4x2xf32>
    %1648 = vector.broadcast %1473 : vector<1x2xf32> to vector<4x2xf32>
    %1649 = arith.mulf %1647, %1648 : vector<4x2xf32>
    %1650 = vector.broadcast %1499 : vector<4x1xf32> to vector<4x2xf32>
    %1651 = vector.broadcast %1646 : vector<1x2xf32> to vector<4x2xf32>
    %1652 = arith.mulf %1650, %1651 : vector<4x2xf32>
    %1653 = arith.addf %1649, %1652 : vector<4x2xf32>
    %1654 = vector.broadcast %1500 : vector<4x1xf32> to vector<4x2xf32>
    %1655 = arith.addf %1653, %1654 : vector<4x2xf32>
    %1656 = arith.negf %1655 : vector<4x2xf32>
    %1657 = math.exp %1656 : vector<4x2xf32>
    %cst_77 = arith.constant 1.000000e+00 : f32
    %1658 = vector.broadcast %cst_77 : f32 to vector<4x2xf32>
    %1659 = arith.addf %1658, %1657 : vector<4x2xf32>
    %1660 = arith.divf %1658, %1659 : vector<4x2xf32>
    %1661 = math.tanh %1655 : vector<4x2xf32>
    %1662 = vector.extract_strided_slice %1660 {offsets = [1, 0], sizes = [1, 2], strides = [1, 1]} : vector<4x2xf32> to vector<1x2xf32>
    %1663 = arith.mulf %1662, %1643 : vector<1x2xf32>
    %1664 = vector.extract_strided_slice %1660 {offsets = [0, 0], sizes = [1, 2], strides = [1, 1]} : vector<4x2xf32> to vector<1x2xf32>
    %1665 = vector.extract_strided_slice %1661 {offsets = [2, 0], sizes = [1, 2], strides = [1, 1]} : vector<4x2xf32> to vector<1x2xf32>
    %1666 = arith.mulf %1664, %1665 : vector<1x2xf32>
    %1667 = arith.addf %1663, %1666 : vector<1x2xf32>
    %1668 = vector.extract_strided_slice %1660 {offsets = [3, 0], sizes = [1, 2], strides = [1, 1]} : vector<4x2xf32> to vector<1x2xf32>
    %1669 = math.tanh %1667 : vector<1x2xf32>
    %1670 = arith.mulf %1668, %1669 : vector<1x2xf32>
    %1671 = vector.broadcast %1498 : vector<4x1xf32> to vector<4x2xf32>
    %1672 = vector.broadcast %1497 : vector<1x2xf32> to vector<4x2xf32>
    %1673 = arith.mulf %1671, %1672 : vector<4x2xf32>
    %1674 = vector.broadcast %1499 : vector<4x1xf32> to vector<4x2xf32>
    %1675 = vector.broadcast %1670 : vector<1x2xf32> to vector<4x2xf32>
    %1676 = arith.mulf %1674, %1675 : vector<4x2xf32>
    %1677 = arith.addf %1673, %1676 : vector<4x2xf32>
    %1678 = vector.broadcast %1500 : vector<4x1xf32> to vector<4x2xf32>
    %1679 = arith.addf %1677, %1678 : vector<4x2xf32>
    %1680 = arith.negf %1679 : vector<4x2xf32>
    %1681 = math.exp %1680 : vector<4x2xf32>
    %cst_78 = arith.constant 1.000000e+00 : f32
    %1682 = vector.broadcast %cst_78 : f32 to vector<4x2xf32>
    %1683 = arith.addf %1682, %1681 : vector<4x2xf32>
    %1684 = arith.divf %1682, %1683 : vector<4x2xf32>
    %1685 = math.tanh %1679 : vector<4x2xf32>
    %1686 = vector.extract_strided_slice %1684 {offsets = [1, 0], sizes = [1, 2], strides = [1, 1]} : vector<4x2xf32> to vector<1x2xf32>
    %1687 = arith.mulf %1686, %1667 : vector<1x2xf32>
    %1688 = vector.extract_strided_slice %1684 {offsets = [0, 0], sizes = [1, 2], strides = [1, 1]} : vector<4x2xf32> to vector<1x2xf32>
    %1689 = vector.extract_strided_slice %1685 {offsets = [2, 0], sizes = [1, 2], strides = [1, 1]} : vector<4x2xf32> to vector<1x2xf32>
    %1690 = arith.mulf %1688, %1689 : vector<1x2xf32>
    %1691 = arith.addf %1687, %1690 : vector<1x2xf32>
    %1692 = vector.extract_strided_slice %1684 {offsets = [3, 0], sizes = [1, 2], strides = [1, 1]} : vector<4x2xf32> to vector<1x2xf32>
    %1693 = math.tanh %1691 : vector<1x2xf32>
    %1694 = arith.mulf %1692, %1693 : vector<1x2xf32>
    %1695 = vector.extract_strided_slice %2 {offsets = [0, 6], sizes = [4, 1], strides = [1, 1]} : vector<4x9xf32> to vector<4x1xf32>
    %1696 = vector.extract_strided_slice %3 {offsets = [0, 7], sizes = [4, 1], strides = [1, 1]} : vector<4x10xf32> to vector<4x1xf32>
    %1697 = vector.extract_strided_slice %4 {offsets = [0, 7], sizes = [4, 1], strides = [1, 1]} : vector<4x10xf32> to vector<4x1xf32>
    %cst_79 = arith.constant 0.000000e+00 : f32
    %1698 = vector.broadcast %cst_79 : f32 to vector<1x2xf32>
    %cst_80 = arith.constant 0.000000e+00 : f32
    %1699 = vector.broadcast %cst_80 : f32 to vector<1x2xf32>
    %1700 = vector.broadcast %1695 : vector<4x1xf32> to vector<4x2xf32>
    %1701 = vector.broadcast %1526 : vector<1x2xf32> to vector<4x2xf32>
    %1702 = arith.mulf %1700, %1701 : vector<4x2xf32>
    %1703 = vector.broadcast %1696 : vector<4x1xf32> to vector<4x2xf32>
    %1704 = vector.broadcast %1698 : vector<1x2xf32> to vector<4x2xf32>
    %1705 = arith.mulf %1703, %1704 : vector<4x2xf32>
    %1706 = arith.addf %1702, %1705 : vector<4x2xf32>
    %1707 = vector.broadcast %1697 : vector<4x1xf32> to vector<4x2xf32>
    %1708 = arith.addf %1706, %1707 : vector<4x2xf32>
    %1709 = arith.negf %1708 : vector<4x2xf32>
    %1710 = math.exp %1709 : vector<4x2xf32>
    %cst_81 = arith.constant 1.000000e+00 : f32
    %1711 = vector.broadcast %cst_81 : f32 to vector<4x2xf32>
    %1712 = arith.addf %1711, %1710 : vector<4x2xf32>
    %1713 = arith.divf %1711, %1712 : vector<4x2xf32>
    %1714 = math.tanh %1708 : vector<4x2xf32>
    %1715 = vector.extract_strided_slice %1713 {offsets = [1, 0], sizes = [1, 2], strides = [1, 1]} : vector<4x2xf32> to vector<1x2xf32>
    %1716 = arith.mulf %1715, %1699 : vector<1x2xf32>
    %1717 = vector.extract_strided_slice %1713 {offsets = [0, 0], sizes = [1, 2], strides = [1, 1]} : vector<4x2xf32> to vector<1x2xf32>
    %1718 = vector.extract_strided_slice %1714 {offsets = [2, 0], sizes = [1, 2], strides = [1, 1]} : vector<4x2xf32> to vector<1x2xf32>
    %1719 = arith.mulf %1717, %1718 : vector<1x2xf32>
    %1720 = arith.addf %1716, %1719 : vector<1x2xf32>
    %1721 = vector.extract_strided_slice %1713 {offsets = [3, 0], sizes = [1, 2], strides = [1, 1]} : vector<4x2xf32> to vector<1x2xf32>
    %1722 = math.tanh %1720 : vector<1x2xf32>
    %1723 = arith.mulf %1721, %1722 : vector<1x2xf32>
    %1724 = vector.broadcast %1695 : vector<4x1xf32> to vector<4x2xf32>
    %1725 = vector.broadcast %1550 : vector<1x2xf32> to vector<4x2xf32>
    %1726 = arith.mulf %1724, %1725 : vector<4x2xf32>
    %1727 = vector.broadcast %1696 : vector<4x1xf32> to vector<4x2xf32>
    %1728 = vector.broadcast %1723 : vector<1x2xf32> to vector<4x2xf32>
    %1729 = arith.mulf %1727, %1728 : vector<4x2xf32>
    %1730 = arith.addf %1726, %1729 : vector<4x2xf32>
    %1731 = vector.broadcast %1697 : vector<4x1xf32> to vector<4x2xf32>
    %1732 = arith.addf %1730, %1731 : vector<4x2xf32>
    %1733 = arith.negf %1732 : vector<4x2xf32>
    %1734 = math.exp %1733 : vector<4x2xf32>
    %cst_82 = arith.constant 1.000000e+00 : f32
    %1735 = vector.broadcast %cst_82 : f32 to vector<4x2xf32>
    %1736 = arith.addf %1735, %1734 : vector<4x2xf32>
    %1737 = arith.divf %1735, %1736 : vector<4x2xf32>
    %1738 = math.tanh %1732 : vector<4x2xf32>
    %1739 = vector.extract_strided_slice %1737 {offsets = [1, 0], sizes = [1, 2], strides = [1, 1]} : vector<4x2xf32> to vector<1x2xf32>
    %1740 = arith.mulf %1739, %1720 : vector<1x2xf32>
    %1741 = vector.extract_strided_slice %1737 {offsets = [0, 0], sizes = [1, 2], strides = [1, 1]} : vector<4x2xf32> to vector<1x2xf32>
    %1742 = vector.extract_strided_slice %1738 {offsets = [2, 0], sizes = [1, 2], strides = [1, 1]} : vector<4x2xf32> to vector<1x2xf32>
    %1743 = arith.mulf %1741, %1742 : vector<1x2xf32>
    %1744 = arith.addf %1740, %1743 : vector<1x2xf32>
    %1745 = vector.extract_strided_slice %1737 {offsets = [3, 0], sizes = [1, 2], strides = [1, 1]} : vector<4x2xf32> to vector<1x2xf32>
    %1746 = math.tanh %1744 : vector<1x2xf32>
    %1747 = arith.mulf %1745, %1746 : vector<1x2xf32>
    %1748 = vector.broadcast %1695 : vector<4x1xf32> to vector<4x2xf32>
    %1749 = vector.broadcast %1574 : vector<1x2xf32> to vector<4x2xf32>
    %1750 = arith.mulf %1748, %1749 : vector<4x2xf32>
    %1751 = vector.broadcast %1696 : vector<4x1xf32> to vector<4x2xf32>
    %1752 = vector.broadcast %1747 : vector<1x2xf32> to vector<4x2xf32>
    %1753 = arith.mulf %1751, %1752 : vector<4x2xf32>
    %1754 = arith.addf %1750, %1753 : vector<4x2xf32>
    %1755 = vector.broadcast %1697 : vector<4x1xf32> to vector<4x2xf32>
    %1756 = arith.addf %1754, %1755 : vector<4x2xf32>
    %1757 = arith.negf %1756 : vector<4x2xf32>
    %1758 = math.exp %1757 : vector<4x2xf32>
    %cst_83 = arith.constant 1.000000e+00 : f32
    %1759 = vector.broadcast %cst_83 : f32 to vector<4x2xf32>
    %1760 = arith.addf %1759, %1758 : vector<4x2xf32>
    %1761 = arith.divf %1759, %1760 : vector<4x2xf32>
    %1762 = math.tanh %1756 : vector<4x2xf32>
    %1763 = vector.extract_strided_slice %1761 {offsets = [1, 0], sizes = [1, 2], strides = [1, 1]} : vector<4x2xf32> to vector<1x2xf32>
    %1764 = arith.mulf %1763, %1744 : vector<1x2xf32>
    %1765 = vector.extract_strided_slice %1761 {offsets = [0, 0], sizes = [1, 2], strides = [1, 1]} : vector<4x2xf32> to vector<1x2xf32>
    %1766 = vector.extract_strided_slice %1762 {offsets = [2, 0], sizes = [1, 2], strides = [1, 1]} : vector<4x2xf32> to vector<1x2xf32>
    %1767 = arith.mulf %1765, %1766 : vector<1x2xf32>
    %1768 = arith.addf %1764, %1767 : vector<1x2xf32>
    %1769 = vector.extract_strided_slice %1761 {offsets = [3, 0], sizes = [1, 2], strides = [1, 1]} : vector<4x2xf32> to vector<1x2xf32>
    %1770 = math.tanh %1768 : vector<1x2xf32>
    %1771 = arith.mulf %1769, %1770 : vector<1x2xf32>
    %1772 = vector.broadcast %1695 : vector<4x1xf32> to vector<4x2xf32>
    %1773 = vector.broadcast %1598 : vector<1x2xf32> to vector<4x2xf32>
    %1774 = arith.mulf %1772, %1773 : vector<4x2xf32>
    %1775 = vector.broadcast %1696 : vector<4x1xf32> to vector<4x2xf32>
    %1776 = vector.broadcast %1771 : vector<1x2xf32> to vector<4x2xf32>
    %1777 = arith.mulf %1775, %1776 : vector<4x2xf32>
    %1778 = arith.addf %1774, %1777 : vector<4x2xf32>
    %1779 = vector.broadcast %1697 : vector<4x1xf32> to vector<4x2xf32>
    %1780 = arith.addf %1778, %1779 : vector<4x2xf32>
    %1781 = arith.negf %1780 : vector<4x2xf32>
    %1782 = math.exp %1781 : vector<4x2xf32>
    %cst_84 = arith.constant 1.000000e+00 : f32
    %1783 = vector.broadcast %cst_84 : f32 to vector<4x2xf32>
    %1784 = arith.addf %1783, %1782 : vector<4x2xf32>
    %1785 = arith.divf %1783, %1784 : vector<4x2xf32>
    %1786 = math.tanh %1780 : vector<4x2xf32>
    %1787 = vector.extract_strided_slice %1785 {offsets = [1, 0], sizes = [1, 2], strides = [1, 1]} : vector<4x2xf32> to vector<1x2xf32>
    %1788 = arith.mulf %1787, %1768 : vector<1x2xf32>
    %1789 = vector.extract_strided_slice %1785 {offsets = [0, 0], sizes = [1, 2], strides = [1, 1]} : vector<4x2xf32> to vector<1x2xf32>
    %1790 = vector.extract_strided_slice %1786 {offsets = [2, 0], sizes = [1, 2], strides = [1, 1]} : vector<4x2xf32> to vector<1x2xf32>
    %1791 = arith.mulf %1789, %1790 : vector<1x2xf32>
    %1792 = arith.addf %1788, %1791 : vector<1x2xf32>
    %1793 = vector.extract_strided_slice %1785 {offsets = [3, 0], sizes = [1, 2], strides = [1, 1]} : vector<4x2xf32> to vector<1x2xf32>
    %1794 = math.tanh %1792 : vector<1x2xf32>
    %1795 = arith.mulf %1793, %1794 : vector<1x2xf32>
    %1796 = vector.broadcast %1695 : vector<4x1xf32> to vector<4x2xf32>
    %1797 = vector.broadcast %1622 : vector<1x2xf32> to vector<4x2xf32>
    %1798 = arith.mulf %1796, %1797 : vector<4x2xf32>
    %1799 = vector.broadcast %1696 : vector<4x1xf32> to vector<4x2xf32>
    %1800 = vector.broadcast %1795 : vector<1x2xf32> to vector<4x2xf32>
    %1801 = arith.mulf %1799, %1800 : vector<4x2xf32>
    %1802 = arith.addf %1798, %1801 : vector<4x2xf32>
    %1803 = vector.broadcast %1697 : vector<4x1xf32> to vector<4x2xf32>
    %1804 = arith.addf %1802, %1803 : vector<4x2xf32>
    %1805 = arith.negf %1804 : vector<4x2xf32>
    %1806 = math.exp %1805 : vector<4x2xf32>
    %cst_85 = arith.constant 1.000000e+00 : f32
    %1807 = vector.broadcast %cst_85 : f32 to vector<4x2xf32>
    %1808 = arith.addf %1807, %1806 : vector<4x2xf32>
    %1809 = arith.divf %1807, %1808 : vector<4x2xf32>
    %1810 = math.tanh %1804 : vector<4x2xf32>
    %1811 = vector.extract_strided_slice %1809 {offsets = [1, 0], sizes = [1, 2], strides = [1, 1]} : vector<4x2xf32> to vector<1x2xf32>
    %1812 = arith.mulf %1811, %1792 : vector<1x2xf32>
    %1813 = vector.extract_strided_slice %1809 {offsets = [0, 0], sizes = [1, 2], strides = [1, 1]} : vector<4x2xf32> to vector<1x2xf32>
    %1814 = vector.extract_strided_slice %1810 {offsets = [2, 0], sizes = [1, 2], strides = [1, 1]} : vector<4x2xf32> to vector<1x2xf32>
    %1815 = arith.mulf %1813, %1814 : vector<1x2xf32>
    %1816 = arith.addf %1812, %1815 : vector<1x2xf32>
    %1817 = vector.extract_strided_slice %1809 {offsets = [3, 0], sizes = [1, 2], strides = [1, 1]} : vector<4x2xf32> to vector<1x2xf32>
    %1818 = math.tanh %1816 : vector<1x2xf32>
    %1819 = arith.mulf %1817, %1818 : vector<1x2xf32>
    %1820 = vector.broadcast %1695 : vector<4x1xf32> to vector<4x2xf32>
    %1821 = vector.broadcast %1646 : vector<1x2xf32> to vector<4x2xf32>
    %1822 = arith.mulf %1820, %1821 : vector<4x2xf32>
    %1823 = vector.broadcast %1696 : vector<4x1xf32> to vector<4x2xf32>
    %1824 = vector.broadcast %1819 : vector<1x2xf32> to vector<4x2xf32>
    %1825 = arith.mulf %1823, %1824 : vector<4x2xf32>
    %1826 = arith.addf %1822, %1825 : vector<4x2xf32>
    %1827 = vector.broadcast %1697 : vector<4x1xf32> to vector<4x2xf32>
    %1828 = arith.addf %1826, %1827 : vector<4x2xf32>
    %1829 = arith.negf %1828 : vector<4x2xf32>
    %1830 = math.exp %1829 : vector<4x2xf32>
    %cst_86 = arith.constant 1.000000e+00 : f32
    %1831 = vector.broadcast %cst_86 : f32 to vector<4x2xf32>
    %1832 = arith.addf %1831, %1830 : vector<4x2xf32>
    %1833 = arith.divf %1831, %1832 : vector<4x2xf32>
    %1834 = math.tanh %1828 : vector<4x2xf32>
    %1835 = vector.extract_strided_slice %1833 {offsets = [1, 0], sizes = [1, 2], strides = [1, 1]} : vector<4x2xf32> to vector<1x2xf32>
    %1836 = arith.mulf %1835, %1816 : vector<1x2xf32>
    %1837 = vector.extract_strided_slice %1833 {offsets = [0, 0], sizes = [1, 2], strides = [1, 1]} : vector<4x2xf32> to vector<1x2xf32>
    %1838 = vector.extract_strided_slice %1834 {offsets = [2, 0], sizes = [1, 2], strides = [1, 1]} : vector<4x2xf32> to vector<1x2xf32>
    %1839 = arith.mulf %1837, %1838 : vector<1x2xf32>
    %1840 = arith.addf %1836, %1839 : vector<1x2xf32>
    %1841 = vector.extract_strided_slice %1833 {offsets = [3, 0], sizes = [1, 2], strides = [1, 1]} : vector<4x2xf32> to vector<1x2xf32>
    %1842 = math.tanh %1840 : vector<1x2xf32>
    %1843 = arith.mulf %1841, %1842 : vector<1x2xf32>
    %1844 = vector.broadcast %1695 : vector<4x1xf32> to vector<4x2xf32>
    %1845 = vector.broadcast %1670 : vector<1x2xf32> to vector<4x2xf32>
    %1846 = arith.mulf %1844, %1845 : vector<4x2xf32>
    %1847 = vector.broadcast %1696 : vector<4x1xf32> to vector<4x2xf32>
    %1848 = vector.broadcast %1843 : vector<1x2xf32> to vector<4x2xf32>
    %1849 = arith.mulf %1847, %1848 : vector<4x2xf32>
    %1850 = arith.addf %1846, %1849 : vector<4x2xf32>
    %1851 = vector.broadcast %1697 : vector<4x1xf32> to vector<4x2xf32>
    %1852 = arith.addf %1850, %1851 : vector<4x2xf32>
    %1853 = arith.negf %1852 : vector<4x2xf32>
    %1854 = math.exp %1853 : vector<4x2xf32>
    %cst_87 = arith.constant 1.000000e+00 : f32
    %1855 = vector.broadcast %cst_87 : f32 to vector<4x2xf32>
    %1856 = arith.addf %1855, %1854 : vector<4x2xf32>
    %1857 = arith.divf %1855, %1856 : vector<4x2xf32>
    %1858 = math.tanh %1852 : vector<4x2xf32>
    %1859 = vector.extract_strided_slice %1857 {offsets = [1, 0], sizes = [1, 2], strides = [1, 1]} : vector<4x2xf32> to vector<1x2xf32>
    %1860 = arith.mulf %1859, %1840 : vector<1x2xf32>
    %1861 = vector.extract_strided_slice %1857 {offsets = [0, 0], sizes = [1, 2], strides = [1, 1]} : vector<4x2xf32> to vector<1x2xf32>
    %1862 = vector.extract_strided_slice %1858 {offsets = [2, 0], sizes = [1, 2], strides = [1, 1]} : vector<4x2xf32> to vector<1x2xf32>
    %1863 = arith.mulf %1861, %1862 : vector<1x2xf32>
    %1864 = arith.addf %1860, %1863 : vector<1x2xf32>
    %1865 = vector.extract_strided_slice %1857 {offsets = [3, 0], sizes = [1, 2], strides = [1, 1]} : vector<4x2xf32> to vector<1x2xf32>
    %1866 = math.tanh %1864 : vector<1x2xf32>
    %1867 = arith.mulf %1865, %1866 : vector<1x2xf32>
    %1868 = vector.broadcast %1695 : vector<4x1xf32> to vector<4x2xf32>
    %1869 = vector.broadcast %1694 : vector<1x2xf32> to vector<4x2xf32>
    %1870 = arith.mulf %1868, %1869 : vector<4x2xf32>
    %1871 = vector.broadcast %1696 : vector<4x1xf32> to vector<4x2xf32>
    %1872 = vector.broadcast %1867 : vector<1x2xf32> to vector<4x2xf32>
    %1873 = arith.mulf %1871, %1872 : vector<4x2xf32>
    %1874 = arith.addf %1870, %1873 : vector<4x2xf32>
    %1875 = vector.broadcast %1697 : vector<4x1xf32> to vector<4x2xf32>
    %1876 = arith.addf %1874, %1875 : vector<4x2xf32>
    %1877 = arith.negf %1876 : vector<4x2xf32>
    %1878 = math.exp %1877 : vector<4x2xf32>
    %cst_88 = arith.constant 1.000000e+00 : f32
    %1879 = vector.broadcast %cst_88 : f32 to vector<4x2xf32>
    %1880 = arith.addf %1879, %1878 : vector<4x2xf32>
    %1881 = arith.divf %1879, %1880 : vector<4x2xf32>
    %1882 = math.tanh %1876 : vector<4x2xf32>
    %1883 = vector.extract_strided_slice %1881 {offsets = [1, 0], sizes = [1, 2], strides = [1, 1]} : vector<4x2xf32> to vector<1x2xf32>
    %1884 = arith.mulf %1883, %1864 : vector<1x2xf32>
    %1885 = vector.extract_strided_slice %1881 {offsets = [0, 0], sizes = [1, 2], strides = [1, 1]} : vector<4x2xf32> to vector<1x2xf32>
    %1886 = vector.extract_strided_slice %1882 {offsets = [2, 0], sizes = [1, 2], strides = [1, 1]} : vector<4x2xf32> to vector<1x2xf32>
    %1887 = arith.mulf %1885, %1886 : vector<1x2xf32>
    %1888 = arith.addf %1884, %1887 : vector<1x2xf32>
    %1889 = vector.extract_strided_slice %1881 {offsets = [3, 0], sizes = [1, 2], strides = [1, 1]} : vector<4x2xf32> to vector<1x2xf32>
    %1890 = math.tanh %1888 : vector<1x2xf32>
    %1891 = arith.mulf %1889, %1890 : vector<1x2xf32>
    %1892 = vector.extract_strided_slice %2 {offsets = [0, 7], sizes = [4, 1], strides = [1, 1]} : vector<4x9xf32> to vector<4x1xf32>
    %1893 = vector.extract_strided_slice %3 {offsets = [0, 8], sizes = [4, 1], strides = [1, 1]} : vector<4x10xf32> to vector<4x1xf32>
    %1894 = vector.extract_strided_slice %4 {offsets = [0, 8], sizes = [4, 1], strides = [1, 1]} : vector<4x10xf32> to vector<4x1xf32>
    %cst_89 = arith.constant 0.000000e+00 : f32
    %1895 = vector.broadcast %cst_89 : f32 to vector<1x2xf32>
    %cst_90 = arith.constant 0.000000e+00 : f32
    %1896 = vector.broadcast %cst_90 : f32 to vector<1x2xf32>
    %1897 = vector.broadcast %1892 : vector<4x1xf32> to vector<4x2xf32>
    %1898 = vector.broadcast %1723 : vector<1x2xf32> to vector<4x2xf32>
    %1899 = arith.mulf %1897, %1898 : vector<4x2xf32>
    %1900 = vector.broadcast %1893 : vector<4x1xf32> to vector<4x2xf32>
    %1901 = vector.broadcast %1895 : vector<1x2xf32> to vector<4x2xf32>
    %1902 = arith.mulf %1900, %1901 : vector<4x2xf32>
    %1903 = arith.addf %1899, %1902 : vector<4x2xf32>
    %1904 = vector.broadcast %1894 : vector<4x1xf32> to vector<4x2xf32>
    %1905 = arith.addf %1903, %1904 : vector<4x2xf32>
    %1906 = arith.negf %1905 : vector<4x2xf32>
    %1907 = math.exp %1906 : vector<4x2xf32>
    %cst_91 = arith.constant 1.000000e+00 : f32
    %1908 = vector.broadcast %cst_91 : f32 to vector<4x2xf32>
    %1909 = arith.addf %1908, %1907 : vector<4x2xf32>
    %1910 = arith.divf %1908, %1909 : vector<4x2xf32>
    %1911 = math.tanh %1905 : vector<4x2xf32>
    %1912 = vector.extract_strided_slice %1910 {offsets = [1, 0], sizes = [1, 2], strides = [1, 1]} : vector<4x2xf32> to vector<1x2xf32>
    %1913 = arith.mulf %1912, %1896 : vector<1x2xf32>
    %1914 = vector.extract_strided_slice %1910 {offsets = [0, 0], sizes = [1, 2], strides = [1, 1]} : vector<4x2xf32> to vector<1x2xf32>
    %1915 = vector.extract_strided_slice %1911 {offsets = [2, 0], sizes = [1, 2], strides = [1, 1]} : vector<4x2xf32> to vector<1x2xf32>
    %1916 = arith.mulf %1914, %1915 : vector<1x2xf32>
    %1917 = arith.addf %1913, %1916 : vector<1x2xf32>
    %1918 = vector.extract_strided_slice %1910 {offsets = [3, 0], sizes = [1, 2], strides = [1, 1]} : vector<4x2xf32> to vector<1x2xf32>
    %1919 = math.tanh %1917 : vector<1x2xf32>
    %1920 = arith.mulf %1918, %1919 : vector<1x2xf32>
    %1921 = vector.broadcast %1892 : vector<4x1xf32> to vector<4x2xf32>
    %1922 = vector.broadcast %1747 : vector<1x2xf32> to vector<4x2xf32>
    %1923 = arith.mulf %1921, %1922 : vector<4x2xf32>
    %1924 = vector.broadcast %1893 : vector<4x1xf32> to vector<4x2xf32>
    %1925 = vector.broadcast %1920 : vector<1x2xf32> to vector<4x2xf32>
    %1926 = arith.mulf %1924, %1925 : vector<4x2xf32>
    %1927 = arith.addf %1923, %1926 : vector<4x2xf32>
    %1928 = vector.broadcast %1894 : vector<4x1xf32> to vector<4x2xf32>
    %1929 = arith.addf %1927, %1928 : vector<4x2xf32>
    %1930 = arith.negf %1929 : vector<4x2xf32>
    %1931 = math.exp %1930 : vector<4x2xf32>
    %cst_92 = arith.constant 1.000000e+00 : f32
    %1932 = vector.broadcast %cst_92 : f32 to vector<4x2xf32>
    %1933 = arith.addf %1932, %1931 : vector<4x2xf32>
    %1934 = arith.divf %1932, %1933 : vector<4x2xf32>
    %1935 = math.tanh %1929 : vector<4x2xf32>
    %1936 = vector.extract_strided_slice %1934 {offsets = [1, 0], sizes = [1, 2], strides = [1, 1]} : vector<4x2xf32> to vector<1x2xf32>
    %1937 = arith.mulf %1936, %1917 : vector<1x2xf32>
    %1938 = vector.extract_strided_slice %1934 {offsets = [0, 0], sizes = [1, 2], strides = [1, 1]} : vector<4x2xf32> to vector<1x2xf32>
    %1939 = vector.extract_strided_slice %1935 {offsets = [2, 0], sizes = [1, 2], strides = [1, 1]} : vector<4x2xf32> to vector<1x2xf32>
    %1940 = arith.mulf %1938, %1939 : vector<1x2xf32>
    %1941 = arith.addf %1937, %1940 : vector<1x2xf32>
    %1942 = vector.extract_strided_slice %1934 {offsets = [3, 0], sizes = [1, 2], strides = [1, 1]} : vector<4x2xf32> to vector<1x2xf32>
    %1943 = math.tanh %1941 : vector<1x2xf32>
    %1944 = arith.mulf %1942, %1943 : vector<1x2xf32>
    %1945 = vector.broadcast %1892 : vector<4x1xf32> to vector<4x2xf32>
    %1946 = vector.broadcast %1771 : vector<1x2xf32> to vector<4x2xf32>
    %1947 = arith.mulf %1945, %1946 : vector<4x2xf32>
    %1948 = vector.broadcast %1893 : vector<4x1xf32> to vector<4x2xf32>
    %1949 = vector.broadcast %1944 : vector<1x2xf32> to vector<4x2xf32>
    %1950 = arith.mulf %1948, %1949 : vector<4x2xf32>
    %1951 = arith.addf %1947, %1950 : vector<4x2xf32>
    %1952 = vector.broadcast %1894 : vector<4x1xf32> to vector<4x2xf32>
    %1953 = arith.addf %1951, %1952 : vector<4x2xf32>
    %1954 = arith.negf %1953 : vector<4x2xf32>
    %1955 = math.exp %1954 : vector<4x2xf32>
    %cst_93 = arith.constant 1.000000e+00 : f32
    %1956 = vector.broadcast %cst_93 : f32 to vector<4x2xf32>
    %1957 = arith.addf %1956, %1955 : vector<4x2xf32>
    %1958 = arith.divf %1956, %1957 : vector<4x2xf32>
    %1959 = math.tanh %1953 : vector<4x2xf32>
    %1960 = vector.extract_strided_slice %1958 {offsets = [1, 0], sizes = [1, 2], strides = [1, 1]} : vector<4x2xf32> to vector<1x2xf32>
    %1961 = arith.mulf %1960, %1941 : vector<1x2xf32>
    %1962 = vector.extract_strided_slice %1958 {offsets = [0, 0], sizes = [1, 2], strides = [1, 1]} : vector<4x2xf32> to vector<1x2xf32>
    %1963 = vector.extract_strided_slice %1959 {offsets = [2, 0], sizes = [1, 2], strides = [1, 1]} : vector<4x2xf32> to vector<1x2xf32>
    %1964 = arith.mulf %1962, %1963 : vector<1x2xf32>
    %1965 = arith.addf %1961, %1964 : vector<1x2xf32>
    %1966 = vector.extract_strided_slice %1958 {offsets = [3, 0], sizes = [1, 2], strides = [1, 1]} : vector<4x2xf32> to vector<1x2xf32>
    %1967 = math.tanh %1965 : vector<1x2xf32>
    %1968 = arith.mulf %1966, %1967 : vector<1x2xf32>
    %1969 = vector.broadcast %1892 : vector<4x1xf32> to vector<4x2xf32>
    %1970 = vector.broadcast %1795 : vector<1x2xf32> to vector<4x2xf32>
    %1971 = arith.mulf %1969, %1970 : vector<4x2xf32>
    %1972 = vector.broadcast %1893 : vector<4x1xf32> to vector<4x2xf32>
    %1973 = vector.broadcast %1968 : vector<1x2xf32> to vector<4x2xf32>
    %1974 = arith.mulf %1972, %1973 : vector<4x2xf32>
    %1975 = arith.addf %1971, %1974 : vector<4x2xf32>
    %1976 = vector.broadcast %1894 : vector<4x1xf32> to vector<4x2xf32>
    %1977 = arith.addf %1975, %1976 : vector<4x2xf32>
    %1978 = arith.negf %1977 : vector<4x2xf32>
    %1979 = math.exp %1978 : vector<4x2xf32>
    %cst_94 = arith.constant 1.000000e+00 : f32
    %1980 = vector.broadcast %cst_94 : f32 to vector<4x2xf32>
    %1981 = arith.addf %1980, %1979 : vector<4x2xf32>
    %1982 = arith.divf %1980, %1981 : vector<4x2xf32>
    %1983 = math.tanh %1977 : vector<4x2xf32>
    %1984 = vector.extract_strided_slice %1982 {offsets = [1, 0], sizes = [1, 2], strides = [1, 1]} : vector<4x2xf32> to vector<1x2xf32>
    %1985 = arith.mulf %1984, %1965 : vector<1x2xf32>
    %1986 = vector.extract_strided_slice %1982 {offsets = [0, 0], sizes = [1, 2], strides = [1, 1]} : vector<4x2xf32> to vector<1x2xf32>
    %1987 = vector.extract_strided_slice %1983 {offsets = [2, 0], sizes = [1, 2], strides = [1, 1]} : vector<4x2xf32> to vector<1x2xf32>
    %1988 = arith.mulf %1986, %1987 : vector<1x2xf32>
    %1989 = arith.addf %1985, %1988 : vector<1x2xf32>
    %1990 = vector.extract_strided_slice %1982 {offsets = [3, 0], sizes = [1, 2], strides = [1, 1]} : vector<4x2xf32> to vector<1x2xf32>
    %1991 = math.tanh %1989 : vector<1x2xf32>
    %1992 = arith.mulf %1990, %1991 : vector<1x2xf32>
    %1993 = vector.broadcast %1892 : vector<4x1xf32> to vector<4x2xf32>
    %1994 = vector.broadcast %1819 : vector<1x2xf32> to vector<4x2xf32>
    %1995 = arith.mulf %1993, %1994 : vector<4x2xf32>
    %1996 = vector.broadcast %1893 : vector<4x1xf32> to vector<4x2xf32>
    %1997 = vector.broadcast %1992 : vector<1x2xf32> to vector<4x2xf32>
    %1998 = arith.mulf %1996, %1997 : vector<4x2xf32>
    %1999 = arith.addf %1995, %1998 : vector<4x2xf32>
    %2000 = vector.broadcast %1894 : vector<4x1xf32> to vector<4x2xf32>
    %2001 = arith.addf %1999, %2000 : vector<4x2xf32>
    %2002 = arith.negf %2001 : vector<4x2xf32>
    %2003 = math.exp %2002 : vector<4x2xf32>
    %cst_95 = arith.constant 1.000000e+00 : f32
    %2004 = vector.broadcast %cst_95 : f32 to vector<4x2xf32>
    %2005 = arith.addf %2004, %2003 : vector<4x2xf32>
    %2006 = arith.divf %2004, %2005 : vector<4x2xf32>
    %2007 = math.tanh %2001 : vector<4x2xf32>
    %2008 = vector.extract_strided_slice %2006 {offsets = [1, 0], sizes = [1, 2], strides = [1, 1]} : vector<4x2xf32> to vector<1x2xf32>
    %2009 = arith.mulf %2008, %1989 : vector<1x2xf32>
    %2010 = vector.extract_strided_slice %2006 {offsets = [0, 0], sizes = [1, 2], strides = [1, 1]} : vector<4x2xf32> to vector<1x2xf32>
    %2011 = vector.extract_strided_slice %2007 {offsets = [2, 0], sizes = [1, 2], strides = [1, 1]} : vector<4x2xf32> to vector<1x2xf32>
    %2012 = arith.mulf %2010, %2011 : vector<1x2xf32>
    %2013 = arith.addf %2009, %2012 : vector<1x2xf32>
    %2014 = vector.extract_strided_slice %2006 {offsets = [3, 0], sizes = [1, 2], strides = [1, 1]} : vector<4x2xf32> to vector<1x2xf32>
    %2015 = math.tanh %2013 : vector<1x2xf32>
    %2016 = arith.mulf %2014, %2015 : vector<1x2xf32>
    %2017 = vector.broadcast %1892 : vector<4x1xf32> to vector<4x2xf32>
    %2018 = vector.broadcast %1843 : vector<1x2xf32> to vector<4x2xf32>
    %2019 = arith.mulf %2017, %2018 : vector<4x2xf32>
    %2020 = vector.broadcast %1893 : vector<4x1xf32> to vector<4x2xf32>
    %2021 = vector.broadcast %2016 : vector<1x2xf32> to vector<4x2xf32>
    %2022 = arith.mulf %2020, %2021 : vector<4x2xf32>
    %2023 = arith.addf %2019, %2022 : vector<4x2xf32>
    %2024 = vector.broadcast %1894 : vector<4x1xf32> to vector<4x2xf32>
    %2025 = arith.addf %2023, %2024 : vector<4x2xf32>
    %2026 = arith.negf %2025 : vector<4x2xf32>
    %2027 = math.exp %2026 : vector<4x2xf32>
    %cst_96 = arith.constant 1.000000e+00 : f32
    %2028 = vector.broadcast %cst_96 : f32 to vector<4x2xf32>
    %2029 = arith.addf %2028, %2027 : vector<4x2xf32>
    %2030 = arith.divf %2028, %2029 : vector<4x2xf32>
    %2031 = math.tanh %2025 : vector<4x2xf32>
    %2032 = vector.extract_strided_slice %2030 {offsets = [1, 0], sizes = [1, 2], strides = [1, 1]} : vector<4x2xf32> to vector<1x2xf32>
    %2033 = arith.mulf %2032, %2013 : vector<1x2xf32>
    %2034 = vector.extract_strided_slice %2030 {offsets = [0, 0], sizes = [1, 2], strides = [1, 1]} : vector<4x2xf32> to vector<1x2xf32>
    %2035 = vector.extract_strided_slice %2031 {offsets = [2, 0], sizes = [1, 2], strides = [1, 1]} : vector<4x2xf32> to vector<1x2xf32>
    %2036 = arith.mulf %2034, %2035 : vector<1x2xf32>
    %2037 = arith.addf %2033, %2036 : vector<1x2xf32>
    %2038 = vector.extract_strided_slice %2030 {offsets = [3, 0], sizes = [1, 2], strides = [1, 1]} : vector<4x2xf32> to vector<1x2xf32>
    %2039 = math.tanh %2037 : vector<1x2xf32>
    %2040 = arith.mulf %2038, %2039 : vector<1x2xf32>
    %2041 = vector.broadcast %1892 : vector<4x1xf32> to vector<4x2xf32>
    %2042 = vector.broadcast %1867 : vector<1x2xf32> to vector<4x2xf32>
    %2043 = arith.mulf %2041, %2042 : vector<4x2xf32>
    %2044 = vector.broadcast %1893 : vector<4x1xf32> to vector<4x2xf32>
    %2045 = vector.broadcast %2040 : vector<1x2xf32> to vector<4x2xf32>
    %2046 = arith.mulf %2044, %2045 : vector<4x2xf32>
    %2047 = arith.addf %2043, %2046 : vector<4x2xf32>
    %2048 = vector.broadcast %1894 : vector<4x1xf32> to vector<4x2xf32>
    %2049 = arith.addf %2047, %2048 : vector<4x2xf32>
    %2050 = arith.negf %2049 : vector<4x2xf32>
    %2051 = math.exp %2050 : vector<4x2xf32>
    %cst_97 = arith.constant 1.000000e+00 : f32
    %2052 = vector.broadcast %cst_97 : f32 to vector<4x2xf32>
    %2053 = arith.addf %2052, %2051 : vector<4x2xf32>
    %2054 = arith.divf %2052, %2053 : vector<4x2xf32>
    %2055 = math.tanh %2049 : vector<4x2xf32>
    %2056 = vector.extract_strided_slice %2054 {offsets = [1, 0], sizes = [1, 2], strides = [1, 1]} : vector<4x2xf32> to vector<1x2xf32>
    %2057 = arith.mulf %2056, %2037 : vector<1x2xf32>
    %2058 = vector.extract_strided_slice %2054 {offsets = [0, 0], sizes = [1, 2], strides = [1, 1]} : vector<4x2xf32> to vector<1x2xf32>
    %2059 = vector.extract_strided_slice %2055 {offsets = [2, 0], sizes = [1, 2], strides = [1, 1]} : vector<4x2xf32> to vector<1x2xf32>
    %2060 = arith.mulf %2058, %2059 : vector<1x2xf32>
    %2061 = arith.addf %2057, %2060 : vector<1x2xf32>
    %2062 = vector.extract_strided_slice %2054 {offsets = [3, 0], sizes = [1, 2], strides = [1, 1]} : vector<4x2xf32> to vector<1x2xf32>
    %2063 = math.tanh %2061 : vector<1x2xf32>
    %2064 = arith.mulf %2062, %2063 : vector<1x2xf32>
    %2065 = vector.broadcast %1892 : vector<4x1xf32> to vector<4x2xf32>
    %2066 = vector.broadcast %1891 : vector<1x2xf32> to vector<4x2xf32>
    %2067 = arith.mulf %2065, %2066 : vector<4x2xf32>
    %2068 = vector.broadcast %1893 : vector<4x1xf32> to vector<4x2xf32>
    %2069 = vector.broadcast %2064 : vector<1x2xf32> to vector<4x2xf32>
    %2070 = arith.mulf %2068, %2069 : vector<4x2xf32>
    %2071 = arith.addf %2067, %2070 : vector<4x2xf32>
    %2072 = vector.broadcast %1894 : vector<4x1xf32> to vector<4x2xf32>
    %2073 = arith.addf %2071, %2072 : vector<4x2xf32>
    %2074 = arith.negf %2073 : vector<4x2xf32>
    %2075 = math.exp %2074 : vector<4x2xf32>
    %cst_98 = arith.constant 1.000000e+00 : f32
    %2076 = vector.broadcast %cst_98 : f32 to vector<4x2xf32>
    %2077 = arith.addf %2076, %2075 : vector<4x2xf32>
    %2078 = arith.divf %2076, %2077 : vector<4x2xf32>
    %2079 = math.tanh %2073 : vector<4x2xf32>
    %2080 = vector.extract_strided_slice %2078 {offsets = [1, 0], sizes = [1, 2], strides = [1, 1]} : vector<4x2xf32> to vector<1x2xf32>
    %2081 = arith.mulf %2080, %2061 : vector<1x2xf32>
    %2082 = vector.extract_strided_slice %2078 {offsets = [0, 0], sizes = [1, 2], strides = [1, 1]} : vector<4x2xf32> to vector<1x2xf32>
    %2083 = vector.extract_strided_slice %2079 {offsets = [2, 0], sizes = [1, 2], strides = [1, 1]} : vector<4x2xf32> to vector<1x2xf32>
    %2084 = arith.mulf %2082, %2083 : vector<1x2xf32>
    %2085 = arith.addf %2081, %2084 : vector<1x2xf32>
    %2086 = vector.extract_strided_slice %2078 {offsets = [3, 0], sizes = [1, 2], strides = [1, 1]} : vector<4x2xf32> to vector<1x2xf32>
    %2087 = math.tanh %2085 : vector<1x2xf32>
    %2088 = arith.mulf %2086, %2087 : vector<1x2xf32>
    %2089 = vector.extract_strided_slice %2 {offsets = [0, 8], sizes = [4, 1], strides = [1, 1]} : vector<4x9xf32> to vector<4x1xf32>
    %2090 = vector.extract_strided_slice %3 {offsets = [0, 9], sizes = [4, 1], strides = [1, 1]} : vector<4x10xf32> to vector<4x1xf32>
    %2091 = vector.extract_strided_slice %4 {offsets = [0, 9], sizes = [4, 1], strides = [1, 1]} : vector<4x10xf32> to vector<4x1xf32>
    %cst_99 = arith.constant 0.000000e+00 : f32
    %2092 = vector.broadcast %cst_99 : f32 to vector<1x2xf32>
    %cst_100 = arith.constant 0.000000e+00 : f32
    %2093 = vector.broadcast %cst_100 : f32 to vector<1x2xf32>
    %2094 = vector.broadcast %2089 : vector<4x1xf32> to vector<4x2xf32>
    %2095 = vector.broadcast %1920 : vector<1x2xf32> to vector<4x2xf32>
    %2096 = arith.mulf %2094, %2095 : vector<4x2xf32>
    %2097 = vector.broadcast %2090 : vector<4x1xf32> to vector<4x2xf32>
    %2098 = vector.broadcast %2092 : vector<1x2xf32> to vector<4x2xf32>
    %2099 = arith.mulf %2097, %2098 : vector<4x2xf32>
    %2100 = arith.addf %2096, %2099 : vector<4x2xf32>
    %2101 = vector.broadcast %2091 : vector<4x1xf32> to vector<4x2xf32>
    %2102 = arith.addf %2100, %2101 : vector<4x2xf32>
    %2103 = arith.negf %2102 : vector<4x2xf32>
    %2104 = math.exp %2103 : vector<4x2xf32>
    %cst_101 = arith.constant 1.000000e+00 : f32
    %2105 = vector.broadcast %cst_101 : f32 to vector<4x2xf32>
    %2106 = arith.addf %2105, %2104 : vector<4x2xf32>
    %2107 = arith.divf %2105, %2106 : vector<4x2xf32>
    %2108 = math.tanh %2102 : vector<4x2xf32>
    %2109 = vector.extract_strided_slice %2107 {offsets = [1, 0], sizes = [1, 2], strides = [1, 1]} : vector<4x2xf32> to vector<1x2xf32>
    %2110 = arith.mulf %2109, %2093 : vector<1x2xf32>
    %2111 = vector.extract_strided_slice %2107 {offsets = [0, 0], sizes = [1, 2], strides = [1, 1]} : vector<4x2xf32> to vector<1x2xf32>
    %2112 = vector.extract_strided_slice %2108 {offsets = [2, 0], sizes = [1, 2], strides = [1, 1]} : vector<4x2xf32> to vector<1x2xf32>
    %2113 = arith.mulf %2111, %2112 : vector<1x2xf32>
    %2114 = arith.addf %2110, %2113 : vector<1x2xf32>
    %2115 = vector.extract_strided_slice %2107 {offsets = [3, 0], sizes = [1, 2], strides = [1, 1]} : vector<4x2xf32> to vector<1x2xf32>
    %2116 = math.tanh %2114 : vector<1x2xf32>
    %2117 = arith.mulf %2115, %2116 : vector<1x2xf32>
    %2118 = vector.broadcast %2089 : vector<4x1xf32> to vector<4x2xf32>
    %2119 = vector.broadcast %1944 : vector<1x2xf32> to vector<4x2xf32>
    %2120 = arith.mulf %2118, %2119 : vector<4x2xf32>
    %2121 = vector.broadcast %2090 : vector<4x1xf32> to vector<4x2xf32>
    %2122 = vector.broadcast %2117 : vector<1x2xf32> to vector<4x2xf32>
    %2123 = arith.mulf %2121, %2122 : vector<4x2xf32>
    %2124 = arith.addf %2120, %2123 : vector<4x2xf32>
    %2125 = vector.broadcast %2091 : vector<4x1xf32> to vector<4x2xf32>
    %2126 = arith.addf %2124, %2125 : vector<4x2xf32>
    %2127 = arith.negf %2126 : vector<4x2xf32>
    %2128 = math.exp %2127 : vector<4x2xf32>
    %cst_102 = arith.constant 1.000000e+00 : f32
    %2129 = vector.broadcast %cst_102 : f32 to vector<4x2xf32>
    %2130 = arith.addf %2129, %2128 : vector<4x2xf32>
    %2131 = arith.divf %2129, %2130 : vector<4x2xf32>
    %2132 = math.tanh %2126 : vector<4x2xf32>
    %2133 = vector.extract_strided_slice %2131 {offsets = [1, 0], sizes = [1, 2], strides = [1, 1]} : vector<4x2xf32> to vector<1x2xf32>
    %2134 = arith.mulf %2133, %2114 : vector<1x2xf32>
    %2135 = vector.extract_strided_slice %2131 {offsets = [0, 0], sizes = [1, 2], strides = [1, 1]} : vector<4x2xf32> to vector<1x2xf32>
    %2136 = vector.extract_strided_slice %2132 {offsets = [2, 0], sizes = [1, 2], strides = [1, 1]} : vector<4x2xf32> to vector<1x2xf32>
    %2137 = arith.mulf %2135, %2136 : vector<1x2xf32>
    %2138 = arith.addf %2134, %2137 : vector<1x2xf32>
    %2139 = vector.extract_strided_slice %2131 {offsets = [3, 0], sizes = [1, 2], strides = [1, 1]} : vector<4x2xf32> to vector<1x2xf32>
    %2140 = math.tanh %2138 : vector<1x2xf32>
    %2141 = arith.mulf %2139, %2140 : vector<1x2xf32>
    %2142 = vector.broadcast %2089 : vector<4x1xf32> to vector<4x2xf32>
    %2143 = vector.broadcast %1968 : vector<1x2xf32> to vector<4x2xf32>
    %2144 = arith.mulf %2142, %2143 : vector<4x2xf32>
    %2145 = vector.broadcast %2090 : vector<4x1xf32> to vector<4x2xf32>
    %2146 = vector.broadcast %2141 : vector<1x2xf32> to vector<4x2xf32>
    %2147 = arith.mulf %2145, %2146 : vector<4x2xf32>
    %2148 = arith.addf %2144, %2147 : vector<4x2xf32>
    %2149 = vector.broadcast %2091 : vector<4x1xf32> to vector<4x2xf32>
    %2150 = arith.addf %2148, %2149 : vector<4x2xf32>
    %2151 = arith.negf %2150 : vector<4x2xf32>
    %2152 = math.exp %2151 : vector<4x2xf32>
    %cst_103 = arith.constant 1.000000e+00 : f32
    %2153 = vector.broadcast %cst_103 : f32 to vector<4x2xf32>
    %2154 = arith.addf %2153, %2152 : vector<4x2xf32>
    %2155 = arith.divf %2153, %2154 : vector<4x2xf32>
    %2156 = math.tanh %2150 : vector<4x2xf32>
    %2157 = vector.extract_strided_slice %2155 {offsets = [1, 0], sizes = [1, 2], strides = [1, 1]} : vector<4x2xf32> to vector<1x2xf32>
    %2158 = arith.mulf %2157, %2138 : vector<1x2xf32>
    %2159 = vector.extract_strided_slice %2155 {offsets = [0, 0], sizes = [1, 2], strides = [1, 1]} : vector<4x2xf32> to vector<1x2xf32>
    %2160 = vector.extract_strided_slice %2156 {offsets = [2, 0], sizes = [1, 2], strides = [1, 1]} : vector<4x2xf32> to vector<1x2xf32>
    %2161 = arith.mulf %2159, %2160 : vector<1x2xf32>
    %2162 = arith.addf %2158, %2161 : vector<1x2xf32>
    %2163 = vector.extract_strided_slice %2155 {offsets = [3, 0], sizes = [1, 2], strides = [1, 1]} : vector<4x2xf32> to vector<1x2xf32>
    %2164 = math.tanh %2162 : vector<1x2xf32>
    %2165 = arith.mulf %2163, %2164 : vector<1x2xf32>
    %2166 = vector.broadcast %2089 : vector<4x1xf32> to vector<4x2xf32>
    %2167 = vector.broadcast %1992 : vector<1x2xf32> to vector<4x2xf32>
    %2168 = arith.mulf %2166, %2167 : vector<4x2xf32>
    %2169 = vector.broadcast %2090 : vector<4x1xf32> to vector<4x2xf32>
    %2170 = vector.broadcast %2165 : vector<1x2xf32> to vector<4x2xf32>
    %2171 = arith.mulf %2169, %2170 : vector<4x2xf32>
    %2172 = arith.addf %2168, %2171 : vector<4x2xf32>
    %2173 = vector.broadcast %2091 : vector<4x1xf32> to vector<4x2xf32>
    %2174 = arith.addf %2172, %2173 : vector<4x2xf32>
    %2175 = arith.negf %2174 : vector<4x2xf32>
    %2176 = math.exp %2175 : vector<4x2xf32>
    %cst_104 = arith.constant 1.000000e+00 : f32
    %2177 = vector.broadcast %cst_104 : f32 to vector<4x2xf32>
    %2178 = arith.addf %2177, %2176 : vector<4x2xf32>
    %2179 = arith.divf %2177, %2178 : vector<4x2xf32>
    %2180 = math.tanh %2174 : vector<4x2xf32>
    %2181 = vector.extract_strided_slice %2179 {offsets = [1, 0], sizes = [1, 2], strides = [1, 1]} : vector<4x2xf32> to vector<1x2xf32>
    %2182 = arith.mulf %2181, %2162 : vector<1x2xf32>
    %2183 = vector.extract_strided_slice %2179 {offsets = [0, 0], sizes = [1, 2], strides = [1, 1]} : vector<4x2xf32> to vector<1x2xf32>
    %2184 = vector.extract_strided_slice %2180 {offsets = [2, 0], sizes = [1, 2], strides = [1, 1]} : vector<4x2xf32> to vector<1x2xf32>
    %2185 = arith.mulf %2183, %2184 : vector<1x2xf32>
    %2186 = arith.addf %2182, %2185 : vector<1x2xf32>
    %2187 = vector.extract_strided_slice %2179 {offsets = [3, 0], sizes = [1, 2], strides = [1, 1]} : vector<4x2xf32> to vector<1x2xf32>
    %2188 = math.tanh %2186 : vector<1x2xf32>
    %2189 = arith.mulf %2187, %2188 : vector<1x2xf32>
    %2190 = vector.broadcast %2089 : vector<4x1xf32> to vector<4x2xf32>
    %2191 = vector.broadcast %2016 : vector<1x2xf32> to vector<4x2xf32>
    %2192 = arith.mulf %2190, %2191 : vector<4x2xf32>
    %2193 = vector.broadcast %2090 : vector<4x1xf32> to vector<4x2xf32>
    %2194 = vector.broadcast %2189 : vector<1x2xf32> to vector<4x2xf32>
    %2195 = arith.mulf %2193, %2194 : vector<4x2xf32>
    %2196 = arith.addf %2192, %2195 : vector<4x2xf32>
    %2197 = vector.broadcast %2091 : vector<4x1xf32> to vector<4x2xf32>
    %2198 = arith.addf %2196, %2197 : vector<4x2xf32>
    %2199 = arith.negf %2198 : vector<4x2xf32>
    %2200 = math.exp %2199 : vector<4x2xf32>
    %cst_105 = arith.constant 1.000000e+00 : f32
    %2201 = vector.broadcast %cst_105 : f32 to vector<4x2xf32>
    %2202 = arith.addf %2201, %2200 : vector<4x2xf32>
    %2203 = arith.divf %2201, %2202 : vector<4x2xf32>
    %2204 = math.tanh %2198 : vector<4x2xf32>
    %2205 = vector.extract_strided_slice %2203 {offsets = [1, 0], sizes = [1, 2], strides = [1, 1]} : vector<4x2xf32> to vector<1x2xf32>
    %2206 = arith.mulf %2205, %2186 : vector<1x2xf32>
    %2207 = vector.extract_strided_slice %2203 {offsets = [0, 0], sizes = [1, 2], strides = [1, 1]} : vector<4x2xf32> to vector<1x2xf32>
    %2208 = vector.extract_strided_slice %2204 {offsets = [2, 0], sizes = [1, 2], strides = [1, 1]} : vector<4x2xf32> to vector<1x2xf32>
    %2209 = arith.mulf %2207, %2208 : vector<1x2xf32>
    %2210 = arith.addf %2206, %2209 : vector<1x2xf32>
    %2211 = vector.extract_strided_slice %2203 {offsets = [3, 0], sizes = [1, 2], strides = [1, 1]} : vector<4x2xf32> to vector<1x2xf32>
    %2212 = math.tanh %2210 : vector<1x2xf32>
    %2213 = arith.mulf %2211, %2212 : vector<1x2xf32>
    %2214 = vector.broadcast %2089 : vector<4x1xf32> to vector<4x2xf32>
    %2215 = vector.broadcast %2040 : vector<1x2xf32> to vector<4x2xf32>
    %2216 = arith.mulf %2214, %2215 : vector<4x2xf32>
    %2217 = vector.broadcast %2090 : vector<4x1xf32> to vector<4x2xf32>
    %2218 = vector.broadcast %2213 : vector<1x2xf32> to vector<4x2xf32>
    %2219 = arith.mulf %2217, %2218 : vector<4x2xf32>
    %2220 = arith.addf %2216, %2219 : vector<4x2xf32>
    %2221 = vector.broadcast %2091 : vector<4x1xf32> to vector<4x2xf32>
    %2222 = arith.addf %2220, %2221 : vector<4x2xf32>
    %2223 = arith.negf %2222 : vector<4x2xf32>
    %2224 = math.exp %2223 : vector<4x2xf32>
    %cst_106 = arith.constant 1.000000e+00 : f32
    %2225 = vector.broadcast %cst_106 : f32 to vector<4x2xf32>
    %2226 = arith.addf %2225, %2224 : vector<4x2xf32>
    %2227 = arith.divf %2225, %2226 : vector<4x2xf32>
    %2228 = math.tanh %2222 : vector<4x2xf32>
    %2229 = vector.extract_strided_slice %2227 {offsets = [1, 0], sizes = [1, 2], strides = [1, 1]} : vector<4x2xf32> to vector<1x2xf32>
    %2230 = arith.mulf %2229, %2210 : vector<1x2xf32>
    %2231 = vector.extract_strided_slice %2227 {offsets = [0, 0], sizes = [1, 2], strides = [1, 1]} : vector<4x2xf32> to vector<1x2xf32>
    %2232 = vector.extract_strided_slice %2228 {offsets = [2, 0], sizes = [1, 2], strides = [1, 1]} : vector<4x2xf32> to vector<1x2xf32>
    %2233 = arith.mulf %2231, %2232 : vector<1x2xf32>
    %2234 = arith.addf %2230, %2233 : vector<1x2xf32>
    %2235 = vector.extract_strided_slice %2227 {offsets = [3, 0], sizes = [1, 2], strides = [1, 1]} : vector<4x2xf32> to vector<1x2xf32>
    %2236 = math.tanh %2234 : vector<1x2xf32>
    %2237 = arith.mulf %2235, %2236 : vector<1x2xf32>
    %2238 = vector.broadcast %2089 : vector<4x1xf32> to vector<4x2xf32>
    %2239 = vector.broadcast %2064 : vector<1x2xf32> to vector<4x2xf32>
    %2240 = arith.mulf %2238, %2239 : vector<4x2xf32>
    %2241 = vector.broadcast %2090 : vector<4x1xf32> to vector<4x2xf32>
    %2242 = vector.broadcast %2237 : vector<1x2xf32> to vector<4x2xf32>
    %2243 = arith.mulf %2241, %2242 : vector<4x2xf32>
    %2244 = arith.addf %2240, %2243 : vector<4x2xf32>
    %2245 = vector.broadcast %2091 : vector<4x1xf32> to vector<4x2xf32>
    %2246 = arith.addf %2244, %2245 : vector<4x2xf32>
    %2247 = arith.negf %2246 : vector<4x2xf32>
    %2248 = math.exp %2247 : vector<4x2xf32>
    %cst_107 = arith.constant 1.000000e+00 : f32
    %2249 = vector.broadcast %cst_107 : f32 to vector<4x2xf32>
    %2250 = arith.addf %2249, %2248 : vector<4x2xf32>
    %2251 = arith.divf %2249, %2250 : vector<4x2xf32>
    %2252 = math.tanh %2246 : vector<4x2xf32>
    %2253 = vector.extract_strided_slice %2251 {offsets = [1, 0], sizes = [1, 2], strides = [1, 1]} : vector<4x2xf32> to vector<1x2xf32>
    %2254 = arith.mulf %2253, %2234 : vector<1x2xf32>
    %2255 = vector.extract_strided_slice %2251 {offsets = [0, 0], sizes = [1, 2], strides = [1, 1]} : vector<4x2xf32> to vector<1x2xf32>
    %2256 = vector.extract_strided_slice %2252 {offsets = [2, 0], sizes = [1, 2], strides = [1, 1]} : vector<4x2xf32> to vector<1x2xf32>
    %2257 = arith.mulf %2255, %2256 : vector<1x2xf32>
    %2258 = arith.addf %2254, %2257 : vector<1x2xf32>
    %2259 = vector.extract_strided_slice %2251 {offsets = [3, 0], sizes = [1, 2], strides = [1, 1]} : vector<4x2xf32> to vector<1x2xf32>
    %2260 = math.tanh %2258 : vector<1x2xf32>
    %2261 = arith.mulf %2259, %2260 : vector<1x2xf32>
    %2262 = vector.broadcast %2089 : vector<4x1xf32> to vector<4x2xf32>
    %2263 = vector.broadcast %2088 : vector<1x2xf32> to vector<4x2xf32>
    %2264 = arith.mulf %2262, %2263 : vector<4x2xf32>
    %2265 = vector.broadcast %2090 : vector<4x1xf32> to vector<4x2xf32>
    %2266 = vector.broadcast %2261 : vector<1x2xf32> to vector<4x2xf32>
    %2267 = arith.mulf %2265, %2266 : vector<4x2xf32>
    %2268 = arith.addf %2264, %2267 : vector<4x2xf32>
    %2269 = vector.broadcast %2091 : vector<4x1xf32> to vector<4x2xf32>
    %2270 = arith.addf %2268, %2269 : vector<4x2xf32>
    %2271 = arith.negf %2270 : vector<4x2xf32>
    %2272 = math.exp %2271 : vector<4x2xf32>
    %cst_108 = arith.constant 1.000000e+00 : f32
    %2273 = vector.broadcast %cst_108 : f32 to vector<4x2xf32>
    %2274 = arith.addf %2273, %2272 : vector<4x2xf32>
    %2275 = arith.divf %2273, %2274 : vector<4x2xf32>
    %2276 = math.tanh %2270 : vector<4x2xf32>
    %2277 = vector.extract_strided_slice %2275 {offsets = [1, 0], sizes = [1, 2], strides = [1, 1]} : vector<4x2xf32> to vector<1x2xf32>
    %2278 = arith.mulf %2277, %2258 : vector<1x2xf32>
    %2279 = vector.extract_strided_slice %2275 {offsets = [0, 0], sizes = [1, 2], strides = [1, 1]} : vector<4x2xf32> to vector<1x2xf32>
    %2280 = vector.extract_strided_slice %2276 {offsets = [2, 0], sizes = [1, 2], strides = [1, 1]} : vector<4x2xf32> to vector<1x2xf32>
    %2281 = arith.mulf %2279, %2280 : vector<1x2xf32>
    %2282 = arith.addf %2278, %2281 : vector<1x2xf32>
    %2283 = vector.extract_strided_slice %2275 {offsets = [3, 0], sizes = [1, 2], strides = [1, 1]} : vector<4x2xf32> to vector<1x2xf32>
    %2284 = math.tanh %2282 : vector<1x2xf32>
    %2285 = arith.mulf %2283, %2284 : vector<1x2xf32>
    %2286 = tpu.concatenate %2117, %2141, %2165, %2189, %2213, %2237, %2261, %2285 in 0 : vector<1x2xf32>, vector<1x2xf32>, vector<1x2xf32>, vector<1x2xf32>, vector<1x2xf32>, vector<1x2xf32>, vector<1x2xf32>, vector<1x2xf32> -> vector<8x2xf32>
    %2287 = arith.negf %2286 : vector<8x2xf32>
    %2288 = math.exp %2287 : vector<8x2xf32>
    %cst_109 = arith.constant 1.000000e+00 : f32
    %2289 = vector.broadcast %cst_109 : f32 to vector<8x2xf32>
    %2290 = arith.addf %2289, %2288 : vector<8x2xf32>
    %2291 = arith.divf %2289, %2290 : vector<8x2xf32>
    %cst_110 = arith.constant 6.000000e+01 : f32
    %2292 = vector.broadcast %cst_110 : f32 to vector<8x2xf32>
    %2293 = arith.mulf %2291, %2292 : vector<8x2xf32>
    %c0_111 = arith.constant 0 : index
    %c0_112 = arith.constant 0 : index
    %2294 = vector.load %arg6[%c0_111, %c0_112] : memref<8x2xf32, #tpu.memory_space<vmem>>, vector<8x2xf32>
    tpu.vector_store %arg6[%c0_111, %c0_112], %2293 {strides = array<i32>} : memref<8x2xf32, #tpu.memory_space<vmem>>, vector<8x2xf32>,
    return
  }
  func.func @transform_0(%arg0: i32) -> (i32, i32, i32) {
    %c0_i32 = arith.constant 0 : i32
    %c0_i32_0 = arith.constant 0 : i32
    %c0_i32_1 = arith.constant 0 : i32
    %c0_i32_2 = arith.constant 0 : i32
    return %c0_i32, %c0_i32_0, %c0_i32_1 : i32, i32, i32
  }
  func.func @transform_1(%arg0: i32) -> (i32, i32) {
    %c0_i32 = arith.constant 0 : i32
    %c0_i32_0 = arith.constant 0 : i32
    %c0_i32_1 = arith.constant 0 : i32
    return %c0_i32, %c0_i32_0 : i32, i32
  }
  func.func @transform_2(%arg0: i32) -> (i32, i32) {
    %c0_i32 = arith.constant 0 : i32
    %c0_i32_0 = arith.constant 0 : i32
    %c0_i32_1 = arith.constant 0 : i32
    return %c0_i32, %c0_i32_0 : i32, i32
  }
  func.func @transform_3(%arg0: i32) -> (i32, i32) {
    %c0_i32 = arith.constant 0 : i32
    %c0_i32_0 = arith.constant 0 : i32
    %c0_i32_1 = arith.constant 0 : i32
    return %c0_i32, %c0_i32_0 : i32, i32
  }
  func.func @transform_4(%arg0: i32) -> (i32, i32) {
    %c0_i32 = arith.constant 0 : i32
    %c0_i32_0 = arith.constant 0 : i32
    %c0_i32_1 = arith.constant 0 : i32
    return %c0_i32, %c0_i32_0 : i32, i32
  }
  func.func @transform_5(%arg0: i32) -> (i32, i32) {
    %c0_i32 = arith.constant 0 : i32
    %c0_i32_0 = arith.constant 0 : i32
    %c0_i32_1 = arith.constant 0 : i32
    return %c0_i32, %c0_i32_0 : i32, i32
  }
}

</mosaic_0001>

<llo_original>
// kernel: tpu_custom_call.1
$region0: #{tpu_custom_call.1}
  #allocation0 [shape = 'u32[]', space=smem, size = 0x4, offset = 0x4, fixed_abs, tag = 'smem constant byte address 0x4 - core index']
  #allocation1 [shape = 'u32[72,128]{1,0:T(1,128)}', space=vmem, size = 0x9000, scoped, tag = 'internal scratch']
  %s0 = inlined_call_operand.vmem [shape: f32[8,8,2], index: 0, kind: input, shape index: {}]
  %s1 = inlined_call_operand.vmem [shape: f32[4,8], index: 1, kind: input, shape index: {}]
  %s2 = inlined_call_operand.vmem [shape: f32[4,9], index: 2, kind: input, shape index: {}]
  %s3 = inlined_call_operand.vmem [shape: f32[4,10], index: 3, kind: input, shape index: {}]
  %s4 = inlined_call_operand.vmem [shape: f32[4,10], index: 4, kind: input, shape index: {}]
  %s5 = inlined_call_operand.vmem [shape: f32[8,2], index: 5, kind: output, shape index: {}]
  %s6 = sld [smem:[#allocation0]]
  $region30: #{tpu_custom_call.1} parent=0
    _
  %s8 = ssub.s32 1, %s6
  %s9 = scalar_select 0, %s8, %s6
  // Predicated region
  $region2: #{tpu_custom_call.1} parent=0 // pred_check
    _
  $region3: #{tpu_custom_call.1} parent=0 // pred_check_branch
    %11 = sbr.rel (0) target = $region5
  $region4: #{tpu_custom_call.1} parent=0 // pred_region
    _
  $region5: #{tpu_custom_call.1} parent=0 // pred_fallthru
    _
  // Predicated region
  $region6: #{tpu_custom_call.1} parent=0 // pred_check
    _
  $region7: #{tpu_custom_call.1} parent=0 // pred_check_branch
    %13 = sbr.rel (0) target = $region9
  $region8: #{tpu_custom_call.1} parent=0 // pred_region
    _
  $region9: #{tpu_custom_call.1} parent=0 // pred_fallthru
    _
  // Predicated region
  $region10: #{tpu_custom_call.1} parent=0 // pred_check
    _
  $region11: #{tpu_custom_call.1} parent=0 // pred_check_branch
    %15 = sbr.rel (0) target = $region13
  $region12: #{tpu_custom_call.1} parent=0 // pred_region
    _
  $region13: #{tpu_custom_call.1} parent=0 // pred_fallthru
    _
  // Predicated region
  $region14: #{tpu_custom_call.1} parent=0 // pred_check
    _
  $region15: #{tpu_custom_call.1} parent=0 // pred_check_branch
    %17 = sbr.rel (0) target = $region17
  $region16: #{tpu_custom_call.1} parent=0 // pred_region
    _
  $region17: #{tpu_custom_call.1} parent=0 // pred_fallthru
    _
  // Predicated region
  $region18: #{tpu_custom_call.1} parent=0 // pred_check
    _
  $region19: #{tpu_custom_call.1} parent=0 // pred_check_branch
    %19 = sbr.rel (0) target = $region21
  $region20: #{tpu_custom_call.1} parent=0 // pred_region
    _
  $region21: #{tpu_custom_call.1} parent=0 // pred_fallthru
    _
  %v20 = vld [vmem:[%s0] sm:$0xff]
  %v21 = vld [vmem:[%s0 + $0x8] sm:$0xff]
  %v22 = vld [vmem:[%s0 + $0x10] sm:$0xff]
  %v23 = vld [vmem:[%s0 + $0x18] sm:$0xff]
  %v24 = vld [vmem:[%s0 + $0x20] sm:$0xff]
  %v25 = vld [vmem:[%s0 + $0x28] sm:$0xff]
  %v26 = vld [vmem:[%s0 + $0x30] sm:$0xff]
  %v27 = vld [vmem:[%s0 + $0x38] sm:$0xff]
  %v28 = vld [vmem:[%s1] sm:$0xf]
  %v29 = vld [vmem:[%s2] sm:$0xf]
  %v30 = vld [vmem:[%s3] sm:$0xf]
  %v31 = vld [vmem:[%s4] sm:$0xf]
  %33 = vset.pattern.permute.xlu0 0
  %34 = vperm.xlu0 %33, %v28
  %v35 = vpop.permute.xlu0 %34
  %v37 = vperm.slane %v20, 0
  %v38 = vmul.f32 %v35, %v37
  %39 = vset.pattern.permute.xlu0 1
  %40 = vperm.xlu0 %39, %v28
  %v41 = vpop.permute.xlu0 %40
  %v43 = vperm.slane %v20, 1
  %v44 = vmul.f32 %v41, %v43
  %v45 = vadd.f32 %v38, %v44
  %46 = vset.pattern.permute.xlu0 2
  %47 = vperm.xlu0 %46, %v28
  %v48 = vpop.permute.xlu0 %47
  %v50 = vperm.slane %v20, 2
  %v51 = vmul.f32 %v48, %v50
  %v52 = vadd.f32 %v45, %v51
  %53 = vset.pattern.permute.xlu0 3
  %54 = vperm.xlu0 %53, %v28
  %v55 = vpop.permute.xlu0 %54
  %v57 = vperm.slane %v20, 3
  %v58 = vmul.f32 %v55, %v57
  %v59 = vadd.f32 %v52, %v58
  %60 = vset.pattern.permute.xlu0 4
  %61 = vperm.xlu0 %60, %v28
  %v62 = vpop.permute.xlu0 %61
  %v64 = vperm.slane %v20, 4
  %v65 = vmul.f32 %v62, %v64
  %v66 = vadd.f32 %v59, %v65
  %67 = vset.pattern.permute.xlu0 5
  %68 = vperm.xlu0 %67, %v28
  %v69 = vpop.permute.xlu0 %68
  %v71 = vperm.slane %v20, 5
  %v72 = vmul.f32 %v69, %v71
  %v73 = vadd.f32 %v66, %v72
  %74 = vset.pattern.permute.xlu0 6
  %75 = vperm.xlu0 %74, %v28
  %v76 = vpop.permute.xlu0 %75
  %v78 = vperm.slane %v20, 6
  %v79 = vmul.f32 %v76, %v78
  %v80 = vadd.f32 %v73, %v79
  %81 = vset.pattern.permute.xlu0 7
  %82 = vperm.xlu0 %81, %v28
  %v83 = vpop.permute.xlu0 %82
  %v85 = vperm.slane %v20, 7
  %v86 = vmul.f32 %v83, %v85
  %v87 = vadd.f32 %v80, %v86
  %v88 = vperm.slane %v21, 0
  %v89 = vmul.f32 %v35, %v88
  %v90 = vperm.slane %v21, 1
  %v91 = vmul.f32 %v41, %v90
  %v92 = vadd.f32 %v89, %v91
  %v93 = vperm.slane %v21, 2
  %v94 = vmul.f32 %v48, %v93
  %v95 = vadd.f32 %v92, %v94
  %v96 = vperm.slane %v21, 3
  %v97 = vmul.f32 %v55, %v96
  %v98 = vadd.f32 %v95, %v97
  %v99 = vperm.slane %v21, 4
  %v100 = vmul.f32 %v62, %v99
  %v101 = vadd.f32 %v98, %v100
  %v102 = vperm.slane %v21, 5
  %v103 = vmul.f32 %v69, %v102
  %v104 = vadd.f32 %v101, %v103
  %v105 = vperm.slane %v21, 6
  %v106 = vmul.f32 %v76, %v105
  %v107 = vadd.f32 %v104, %v106
  %v108 = vperm.slane %v21, 7
  %v109 = vmul.f32 %v83, %v108
  %v110 = vadd.f32 %v107, %v109
  %v111 = vperm.slane %v22, 0
  %v112 = vmul.f32 %v35, %v111
  %v113 = vperm.slane %v22, 1
  %v114 = vmul.f32 %v41, %v113
  %v115 = vadd.f32 %v112, %v114
  %v116 = vperm.slane %v22, 2
  %v117 = vmul.f32 %v48, %v116
  %v118 = vadd.f32 %v115, %v117
  %v119 = vperm.slane %v22, 3
  %v120 = vmul.f32 %v55, %v119
  %v121 = vadd.f32 %v118, %v120
  %v122 = vperm.slane %v22, 4
  %v123 = vmul.f32 %v62, %v122
  %v124 = vadd.f32 %v121, %v123
  %v125 = vperm.slane %v22, 5
  %v126 = vmul.f32 %v69, %v125
  %v127 = vadd.f32 %v124, %v126
  %v128 = vperm.slane %v22, 6
  %v129 = vmul.f32 %v76, %v128
  %v130 = vadd.f32 %v127, %v129
  %v131 = vperm.slane %v22, 7
  %v132 = vmul.f32 %v83, %v131
  %v133 = vadd.f32 %v130, %v132
  %v134 = vperm.slane %v23, 0
  %v135 = vmul.f32 %v35, %v134
  %v136 = vperm.slane %v23, 1
  %v137 = vmul.f32 %v41, %v136
  %v138 = vadd.f32 %v135, %v137
  %v139 = vperm.slane %v23, 2
  %v140 = vmul.f32 %v48, %v139
  %v141 = vadd.f32 %v138, %v140
  %v142 = vperm.slane %v23, 3
  %v143 = vmul.f32 %v55, %v142
  %v144 = vadd.f32 %v141, %v143
  %v145 = vperm.slane %v23, 4
  %v146 = vmul.f32 %v62, %v145
  %v147 = vadd.f32 %v144, %v146
  %v148 = vperm.slane %v23, 5
  %v149 = vmul.f32 %v69, %v148
  %v150 = vadd.f32 %v147, %v149
  %v151 = vperm.slane %v23, 6
  %v152 = vmul.f32 %v76, %v151
  %v153 = vadd.f32 %v150, %v152
  %v154 = vperm.slane %v23, 7
  %v155 = vmul.f32 %v83, %v154
  %v156 = vadd.f32 %v153, %v155
  %v157 = vperm.slane %v24, 0
  %v158 = vmul.f32 %v35, %v157
  %v159 = vperm.slane %v24, 1
  %v160 = vmul.f32 %v41, %v159
  %v161 = vadd.f32 %v158, %v160
  %v162 = vperm.slane %v24, 2
  %v163 = vmul.f32 %v48, %v162
  %v164 = vadd.f32 %v161, %v163
  %v165 = vperm.slane %v24, 3
  %v166 = vmul.f32 %v55, %v165
  %v167 = vadd.f32 %v164, %v166
  %v168 = vperm.slane %v24, 4
  %v169 = vmul.f32 %v62, %v168
  %v170 = vadd.f32 %v167, %v169
  %v171 = vperm.slane %v24, 5
  %v172 = vmul.f32 %v69, %v171
  %v173 = vadd.f32 %v170, %v172
  %v174 = vperm.slane %v24, 6
  %v175 = vmul.f32 %v76, %v174
  %v176 = vadd.f32 %v173, %v175
  %v177 = vperm.slane %v24, 7
  %v178 = vmul.f32 %v83, %v177
  %v179 = vadd.f32 %v176, %v178
  %v180 = vperm.slane %v25, 0
  %v181 = vmul.f32 %v35, %v180
  %v182 = vperm.slane %v25, 1
  %v183 = vmul.f32 %v41, %v182
  %v184 = vadd.f32 %v181, %v183
  %v185 = vperm.slane %v25, 2
  %v186 = vmul.f32 %v48, %v185
  %v187 = vadd.f32 %v184, %v186
  %v188 = vperm.slane %v25, 3
  %v189 = vmul.f32 %v55, %v188
  %v190 = vadd.f32 %v187, %v189
  %v191 = vperm.slane %v25, 4
  %v192 = vmul.f32 %v62, %v191
  %v193 = vadd.f32 %v190, %v192
  %v194 = vperm.slane %v25, 5
  %v195 = vmul.f32 %v69, %v194
  %v196 = vadd.f32 %v193, %v195
  %v197 = vperm.slane %v25, 6
  %v198 = vmul.f32 %v76, %v197
  %v199 = vadd.f32 %v196, %v198
  %v200 = vperm.slane %v25, 7
  %v201 = vmul.f32 %v83, %v200
  %v202 = vadd.f32 %v199, %v201
  %v203 = vperm.slane %v26, 0
  %v204 = vmul.f32 %v35, %v203
  %v205 = vperm.slane %v26, 1
  %v206 = vmul.f32 %v41, %v205
  %v207 = vadd.f32 %v204, %v206
  %v208 = vperm.slane %v26, 2
  %v209 = vmul.f32 %v48, %v208
  %v210 = vadd.f32 %v207, %v209
  %v211 = vperm.slane %v26, 3
  %v212 = vmul.f32 %v55, %v211
  %v213 = vadd.f32 %v210, %v212
  %v214 = vperm.slane %v26, 4
  %v215 = vmul.f32 %v62, %v214
  %v216 = vadd.f32 %v213, %v215
  %v217 = vperm.slane %v26, 5
  %v218 = vmul.f32 %v69, %v217
  %v219 = vadd.f32 %v216, %v218
  %v220 = vperm.slane %v26, 6
  %v221 = vmul.f32 %v76, %v220
  %v222 = vadd.f32 %v219, %v221
  %v223 = vperm.slane %v26, 7
  %v224 = vmul.f32 %v83, %v223
  %v225 = vadd.f32 %v222, %v224
  %v226 = vperm.slane %v27, 0
  %v227 = vmul.f32 %v35, %v226
  %v228 = vperm.slane %v27, 1
  %v229 = vmul.f32 %v41, %v228
  %v230 = vadd.f32 %v227, %v229
  %v231 = vperm.slane %v27, 2
  %v232 = vmul.f32 %v48, %v231
  %v233 = vadd.f32 %v230, %v232
  %v234 = vperm.slane %v27, 3
  %v235 = vmul.f32 %v55, %v234
  %v236 = vadd.f32 %v233, %v235
  %v237 = vperm.slane %v27, 4
  %v238 = vmul.f32 %v62, %v237
  %v239 = vadd.f32 %v236, %v238
  %v240 = vperm.slane %v27, 5
  %v241 = vmul.f32 %v69, %v240
  %v242 = vadd.f32 %v239, %v241
  %v243 = vperm.slane %v27, 6
  %v244 = vmul.f32 %v76, %v243
  %v245 = vadd.f32 %v242, %v244
  %v246 = vperm.slane %v27, 7
  %v247 = vmul.f32 %v83, %v246
  %v248 = vadd.f32 %v245, %v247
  %250 = vset.pattern.permute.xlu0 0
  %251 = vperm.xlu0 %250, %v30
  %v252 = vpop.permute.xlu0 %251
  %v254 = vmul.f32 %v252, 0.0
  %v255 = vadd.f32 %v87, %v254
  %257 = vset.pattern.permute.xlu0 0
  %258 = vperm.xlu0 %257, %v31
  %v259 = vpop.permute.xlu0 %258
  %v261 = vadd.f32 %v255, %v259
  %v262 = vxor.u32 %v261, 2147483648
  %v263 = vmul.f32 %v262, 1.442695
  %v264 = vpow.pop %v263
  %v265 = vadd.f32 %v264, 1.0
  %v266 = vrcp.pop %v265
  %v267 = vmul.f32 %v265, %v266
  %v268 = vsub.f32 1.0, %v267
  %v269 = vmul.f32 %v266, %v268
  %v270 = vadd.f32 %v266, %v269
  %vm271 = vweird.f32 %v265
  %vm272 = vweird.f32 %v266
  %vm273 = vmor %vm271, %vm272
  %v274 = vsel %vm273, %v266, %v270
  %v275 = vand.u32 2147483647, %v265
  %vm276 = vcmp.eq.f32.partialorder %v275, 8.507059e+37
  %v277 = vand.u32 %v265, 2147483648
  %v278 = vor.u32 1.1754944e-38, %v277
  %v279 = vsel %vm276, %v278, %v274
  %v280 = vmul.f32 1.0, %v279
  %v281 = vtanh.pop %v261
  %v282 = vmul.f32 %v280, 0.0
  %v284 = vrot.slane %v281, 2
  %v286 = vmul.f32 %v280, %v284
  %v288 = vrot.slane %v286, 7
  %v290 = vadd.f32 %v282, %v288
  %v291 = vtanh.pop %v290
  %v293 = vrot.slane %v291, 6
  %v295 = vmul.f32 %v280, %v293
  %v296 = vperm.slane %v295, 3
  %v297 = vmul.f32 %v252, %v296
  %v298 = vadd.f32 %v110, %v297
  %v299 = vadd.f32 %v298, %v259
  %v300 = vxor.u32 %v299, 2147483648
  %v301 = vmul.f32 %v300, 1.442695
  %v302 = vpow.pop %v301
  %v303 = vadd.f32 %v302, 1.0
  %v304 = vrcp.pop %v303
  %v305 = vmul.f32 %v303, %v304
  %v306 = vsub.f32 1.0, %v305
  %v307 = vmul.f32 %v304, %v306
  %v308 = vadd.f32 %v304, %v307
  %vm309 = vweird.f32 %v303
  %vm310 = vweird.f32 %v304
  %vm311 = vmor %vm309, %vm310
  %v312 = vsel %vm311, %v304, %v308
  %v313 = vand.u32 2147483647, %v303
  %vm314 = vcmp.eq.f32.partialorder %v313, 8.507059e+37
  %v315 = vand.u32 %v303, 2147483648
  %v316 = vor.u32 1.1754944e-38, %v315
  %v317 = vsel %vm314, %v316, %v312
  %v318 = vmul.f32 1.0, %v317
  %v319 = vtanh.pop %v299
  %v320 = vmul.f32 %v318, %v290
  %v322 = vrot.slane %v319, 2
  %v324 = vmul.f32 %v318, %v322
  %v326 = vrot.slane %v324, 7
  %v328 = vadd.f32 %v320, %v326
  %v329 = vtanh.pop %v328
  %v331 = vrot.slane %v329, 6
  %v333 = vmul.f32 %v318, %v331
  %v334 = vperm.slane %v333, 3
  %v335 = vmul.f32 %v252, %v334
  %v336 = vadd.f32 %v133, %v335
  %v337 = vadd.f32 %v336, %v259
  %v338 = vxor.u32 %v337, 2147483648
  %v339 = vmul.f32 %v338, 1.442695
  %v340 = vpow.pop %v339
  %v341 = vadd.f32 %v340, 1.0
  %v342 = vrcp.pop %v341
  %v343 = vmul.f32 %v341, %v342
  %v344 = vsub.f32 1.0, %v343
  %v345 = vmul.f32 %v342, %v344
  %v346 = vadd.f32 %v342, %v345
  %vm347 = vweird.f32 %v341
  %vm348 = vweird.f32 %v342
  %vm349 = vmor %vm347, %vm348
  %v350 = vsel %vm349, %v342, %v346
  %v351 = vand.u32 2147483647, %v341
  %vm352 = vcmp.eq.f32.partialorder %v351, 8.507059e+37
  %v353 = vand.u32 %v341, 2147483648
  %v354 = vor.u32 1.1754944e-38, %v353
  %v355 = vsel %vm352, %v354, %v350
  %v356 = vmul.f32 1.0, %v355
  %v357 = vtanh.pop %v337
  %v358 = vmul.f32 %v356, %v328
  %v360 = vrot.slane %v357, 2
  %v362 = vmul.f32 %v356, %v360
  %v364 = vrot.slane %v362, 7
  %v366 = vadd.f32 %v358, %v364
  %v367 = vtanh.pop %v366
  %v369 = vrot.slane %v367, 6
  %v371 = vmul.f32 %v356, %v369
  %v372 = vperm.slane %v371, 3
  %v373 = vmul.f32 %v252, %v372
  %v374 = vadd.f32 %v156, %v373
  %v375 = vadd.f32 %v374, %v259
  %v376 = vxor.u32 %v375, 2147483648
  %v377 = vmul.f32 %v376, 1.442695
  %v378 = vpow.pop %v377
  %v379 = vadd.f32 %v378, 1.0
  %v380 = vrcp.pop %v379
  %v381 = vmul.f32 %v379, %v380
  %v382 = vsub.f32 1.0, %v381
  %v383 = vmul.f32 %v380, %v382
  %v384 = vadd.f32 %v380, %v383
  %vm385 = vweird.f32 %v379
  %vm386 = vweird.f32 %v380
  %vm387 = vmor %vm385, %vm386
  %v388 = vsel %vm387, %v380, %v384
  %v389 = vand.u32 2147483647, %v379
  %vm390 = vcmp.eq.f32.partialorder %v389, 8.507059e+37
  %v391 = vand.u32 %v379, 2147483648
  %v392 = vor.u32 1.1754944e-38, %v391
  %v393 = vsel %vm390, %v392, %v388
  %v394 = vmul.f32 1.0, %v393
  %v395 = vtanh.pop %v375
  %v396 = vmul.f32 %v394, %v366
  %v398 = vrot.slane %v395, 2
  %v400 = vmul.f32 %v394, %v398
  %v402 = vrot.slane %v400, 7
  %v404 = vadd.f32 %v396, %v402
  %v405 = vtanh.pop %v404
  %v407 = vrot.slane %v405, 6
  %v409 = vmul.f32 %v394, %v407
  %v410 = vperm.slane %v409, 3
  %v411 = vmul.f32 %v252, %v410
  %v412 = vadd.f32 %v179, %v411
  %v413 = vadd.f32 %v412, %v259
  %v414 = vxor.u32 %v413, 2147483648
  %v415 = vmul.f32 %v414, 1.442695
  %v416 = vpow.pop %v415
  %v417 = vadd.f32 %v416, 1.0
  %v418 = vrcp.pop %v417
  %v419 = vmul.f32 %v417, %v418
  %v420 = vsub.f32 1.0, %v419
  %v421 = vmul.f32 %v418, %v420
  %v422 = vadd.f32 %v418, %v421
  %vm423 = vweird.f32 %v417
  %vm424 = vweird.f32 %v418
  %vm425 = vmor %vm423, %vm424
  %v426 = vsel %vm425, %v418, %v422
  %v427 = vand.u32 2147483647, %v417
  %vm428 = vcmp.eq.f32.partialorder %v427, 8.507059e+37
  %v429 = vand.u32 %v417, 2147483648
  %v430 = vor.u32 1.1754944e-38, %v429
  %v431 = vsel %vm428, %v430, %v426
  %v432 = vmul.f32 1.0, %v431
  %v433 = vtanh.pop %v413
  %v434 = vmul.f32 %v432, %v404
  %v436 = vrot.slane %v433, 2
  %v438 = vmul.f32 %v432, %v436
  %v440 = vrot.slane %v438, 7
  %v442 = vadd.f32 %v434, %v440
  %v443 = vtanh.pop %v442
  %v445 = vrot.slane %v443, 6
  %v447 = vmul.f32 %v432, %v445
  %v448 = vperm.slane %v447, 3
  %v449 = vmul.f32 %v252, %v448
  %v450 = vadd.f32 %v202, %v449
  %v451 = vadd.f32 %v450, %v259
  %v452 = vxor.u32 %v451, 2147483648
  %v453 = vmul.f32 %v452, 1.442695
  %v454 = vpow.pop %v453
  %v455 = vadd.f32 %v454, 1.0
  %v456 = vrcp.pop %v455
  %v457 = vmul.f32 %v455, %v456
  %v458 = vsub.f32 1.0, %v457
  %v459 = vmul.f32 %v456, %v458
  %v460 = vadd.f32 %v456, %v459
  %vm461 = vweird.f32 %v455
  %vm462 = vweird.f32 %v456
  %vm463 = vmor %vm461, %vm462
  %v464 = vsel %vm463, %v456, %v460
  %v465 = vand.u32 2147483647, %v455
  %vm466 = vcmp.eq.f32.partialorder %v465, 8.507059e+37
  %v467 = vand.u32 %v455, 2147483648
  %v468 = vor.u32 1.1754944e-38, %v467
  %v469 = vsel %vm466, %v468, %v464
  %v470 = vmul.f32 1.0, %v469
  %v471 = vtanh.pop %v451
  %v472 = vmul.f32 %v470, %v442
  %v474 = vrot.slane %v471, 2
  %v476 = vmul.f32 %v470, %v474
  %v478 = vrot.slane %v476, 7
  %v480 = vadd.f32 %v472, %v478
  %v481 = vtanh.pop %v480
  %v483 = vrot.slane %v481, 6
  %v485 = vmul.f32 %v470, %v483
  %v486 = vperm.slane %v485, 3
  %v487 = vmul.f32 %v252, %v486
  %v488 = vadd.f32 %v225, %v487
  %v489 = vadd.f32 %v488, %v259
  %v490 = vxor.u32 %v489, 2147483648
  %v491 = vmul.f32 %v490, 1.442695
  %v492 = vpow.pop %v491
  %v493 = vadd.f32 %v492, 1.0
  %v494 = vrcp.pop %v493
  %v495 = vmul.f32 %v493, %v494
  %v496 = vsub.f32 1.0, %v495
  %v497 = vmul.f32 %v494, %v496
  %v498 = vadd.f32 %v494, %v497
  %vm499 = vweird.f32 %v493
  %vm500 = vweird.f32 %v494
  %vm501 = vmor %vm499, %vm500
  %v502 = vsel %vm501, %v494, %v498
  %v503 = vand.u32 2147483647, %v493
  %vm504 = vcmp.eq.f32.partialorder %v503, 8.507059e+37
  %v505 = vand.u32 %v493, 2147483648
  %v506 = vor.u32 1.1754944e-38, %v505
  %v507 = vsel %vm504, %v506, %v502
  %v508 = vmul.f32 1.0, %v507
  %v509 = vtanh.pop %v489
  %v510 = vmul.f32 %v508, %v480
  %v512 = vrot.slane %v509, 2
  %v514 = vmul.f32 %v508, %v512
  %v516 = vrot.slane %v514, 7
  %v518 = vadd.f32 %v510, %v516
  %v519 = vtanh.pop %v518
  %v521 = vrot.slane %v519, 6
  %v523 = vmul.f32 %v508, %v521
  %v524 = vperm.slane %v523, 3
  %v525 = vmul.f32 %v252, %v524
  %v526 = vadd.f32 %v248, %v525
  %v527 = vadd.f32 %v526, %v259
  %v528 = vxor.u32 %v527, 2147483648
  %v529 = vmul.f32 %v528, 1.442695
  %v530 = vpow.pop %v529
  %v531 = vadd.f32 %v530, 1.0
  %v532 = vrcp.pop %v531
  %v533 = vmul.f32 %v531, %v532
  %v534 = vsub.f32 1.0, %v533
  %v535 = vmul.f32 %v532, %v534
  %v536 = vadd.f32 %v532, %v535
  %vm537 = vweird.f32 %v531
  %vm538 = vweird.f32 %v532
  %vm539 = vmor %vm537, %vm538
  %v540 = vsel %vm539, %v532, %v536
  %v541 = vand.u32 2147483647, %v531
  %vm542 = vcmp.eq.f32.partialorder %v541, 8.507059e+37
  %v543 = vand.u32 %v531, 2147483648
  %v544 = vor.u32 1.1754944e-38, %v543
  %v545 = vsel %vm542, %v544, %v540
  %v546 = vmul.f32 1.0, %v545
  %v547 = vtanh.pop %v527
  %v548 = vmul.f32 %v546, %v518
  %v550 = vrot.slane %v547, 2
  %v552 = vmul.f32 %v546, %v550
  %v554 = vrot.slane %v552, 7
  %v556 = vadd.f32 %v548, %v554
  %v557 = vtanh.pop %v556
  %v559 = vrot.slane %v557, 6
  %v561 = vmul.f32 %v546, %v559
  %563 = vset.pattern.permute.xlu0 0
  %564 = vperm.xlu0 %563, %v29
  %v565 = vpop.permute.xlu0 %564
  %v567 = vmul.f32 %v565, %v296
  %568 = vset.pattern.permute.xlu0 1
  %569 = vperm.xlu0 %568, %v30
  %v570 = vpop.permute.xlu0 %569
  %v572 = vmul.f32 %v570, 0.0
  %v573 = vadd.f32 %v567, %v572
  %574 = vset.pattern.permute.xlu0 1
  %575 = vperm.xlu0 %574, %v31
  %v576 = vpop.permute.xlu0 %575
  %v578 = vadd.f32 %v573, %v576
  %v579 = vxor.u32 %v578, 2147483648
  %v580 = vmul.f32 %v579, 1.442695
  %v581 = vpow.pop %v580
  %v582 = vadd.f32 %v581, 1.0
  %v583 = vrcp.pop %v582
  %v584 = vmul.f32 %v582, %v583
  %v585 = vsub.f32 1.0, %v584
  %v586 = vmul.f32 %v583, %v585
  %v587 = vadd.f32 %v583, %v586
  %vm588 = vweird.f32 %v582
  %vm589 = vweird.f32 %v583
  %vm590 = vmor %vm588, %vm589
  %v591 = vsel %vm590, %v583, %v587
  %v592 = vand.u32 2147483647, %v582
  %vm593 = vcmp.eq.f32.partialorder %v592, 8.507059e+37
  %v594 = vand.u32 %v582, 2147483648
  %v595 = vor.u32 1.1754944e-38, %v594
  %v596 = vsel %vm593, %v595, %v591
  %v597 = vmul.f32 1.0, %v596
  %v598 = vtanh.pop %v578
  %v599 = vmul.f32 %v597, 0.0
  %v601 = vrot.slane %v598, 2
  %v603 = vmul.f32 %v597, %v601
  %v605 = vrot.slane %v603, 7
  %v607 = vadd.f32 %v599, %v605
  %v608 = vtanh.pop %v607
  %v610 = vrot.slane %v608, 6
  %v612 = vmul.f32 %v597, %v610
  %v613 = vmul.f32 %v565, %v334
  %v614 = vperm.slane %v612, 3
  %v615 = vmul.f32 %v570, %v614
  %v616 = vadd.f32 %v613, %v615
  %v617 = vadd.f32 %v616, %v576
  %v618 = vxor.u32 %v617, 2147483648
  %v619 = vmul.f32 %v618, 1.442695
  %v620 = vpow.pop %v619
  %v621 = vadd.f32 %v620, 1.0
  %v622 = vrcp.pop %v621
  %v623 = vmul.f32 %v621, %v622
  %v624 = vsub.f32 1.0, %v623
  %v625 = vmul.f32 %v622, %v624
  %v626 = vadd.f32 %v622, %v625
  %vm627 = vweird.f32 %v621
  %vm628 = vweird.f32 %v622
  %vm629 = vmor %vm627, %vm628
  %v630 = vsel %vm629, %v622, %v626
  %v631 = vand.u32 2147483647, %v621
  %vm632 = vcmp.eq.f32.partialorder %v631, 8.507059e+37
  %v633 = vand.u32 %v621, 2147483648
  %v634 = vor.u32 1.1754944e-38, %v633
  %v635 = vsel %vm632, %v634, %v630
  %v636 = vmul.f32 1.0, %v635
  %v637 = vtanh.pop %v617
  %v638 = vmul.f32 %v636, %v607
  %v640 = vrot.slane %v637, 2
  %v642 = vmul.f32 %v636, %v640
  %v644 = vrot.slane %v642, 7
  %v646 = vadd.f32 %v638, %v644
  %v647 = vtanh.pop %v646
  %v649 = vrot.slane %v647, 6
  %v651 = vmul.f32 %v636, %v649
  %v652 = vmul.f32 %v565, %v372
  %v653 = vperm.slane %v651, 3
  %v654 = vmul.f32 %v570, %v653
  %v655 = vadd.f32 %v652, %v654
  %v656 = vadd.f32 %v655, %v576
  %v657 = vxor.u32 %v656, 2147483648
  %v658 = vmul.f32 %v657, 1.442695
  %v659 = vpow.pop %v658
  %v660 = vadd.f32 %v659, 1.0
  %v661 = vrcp.pop %v660
  %v662 = vmul.f32 %v660, %v661
  %v663 = vsub.f32 1.0, %v662
  %v664 = vmul.f32 %v661, %v663
  %v665 = vadd.f32 %v661, %v664
  %vm666 = vweird.f32 %v660
  %vm667 = vweird.f32 %v661
  %vm668 = vmor %vm666, %vm667
  %v669 = vsel %vm668, %v661, %v665
  %v670 = vand.u32 2147483647, %v660
  %vm671 = vcmp.eq.f32.partialorder %v670, 8.507059e+37
  %v672 = vand.u32 %v660, 2147483648
  %v673 = vor.u32 1.1754944e-38, %v672
  %v674 = vsel %vm671, %v673, %v669
  %v675 = vmul.f32 1.0, %v674
  %v676 = vtanh.pop %v656
  %v677 = vmul.f32 %v675, %v646
  %v679 = vrot.slane %v676, 2
  %v681 = vmul.f32 %v675, %v679
  %v683 = vrot.slane %v681, 7
  %v685 = vadd.f32 %v677, %v683
  %v686 = vtanh.pop %v685
  %v688 = vrot.slane %v686, 6
  %v690 = vmul.f32 %v675, %v688
  %v691 = vmul.f32 %v565, %v410
  %v692 = vperm.slane %v690, 3
  %v693 = vmul.f32 %v570, %v692
  %v694 = vadd.f32 %v691, %v693
  %v695 = vadd.f32 %v694, %v576
  %v696 = vxor.u32 %v695, 2147483648
  %v697 = vmul.f32 %v696, 1.442695
  %v698 = vpow.pop %v697
  %v699 = vadd.f32 %v698, 1.0
  %v700 = vrcp.pop %v699
  %v701 = vmul.f32 %v699, %v700
  %v702 = vsub.f32 1.0, %v701
  %v703 = vmul.f32 %v700, %v702
  %v704 = vadd.f32 %v700, %v703
  %vm705 = vweird.f32 %v699
  %vm706 = vweird.f32 %v700
  %vm707 = vmor %vm705, %vm706
  %v708 = vsel %vm707, %v700, %v704
  %v709 = vand.u32 2147483647, %v699
  %vm710 = vcmp.eq.f32.partialorder %v709, 8.507059e+37
  %v711 = vand.u32 %v699, 2147483648
  %v712 = vor.u32 1.1754944e-38, %v711
  %v713 = vsel %vm710, %v712, %v708
  %v714 = vmul.f32 1.0, %v713
  %v715 = vtanh.pop %v695
  %v716 = vmul.f32 %v714, %v685
  %v718 = vrot.slane %v715, 2
  %v720 = vmul.f32 %v714, %v718
  %v722 = vrot.slane %v720, 7
  %v724 = vadd.f32 %v716, %v722
  %v725 = vtanh.pop %v724
  %v727 = vrot.slane %v725, 6
  %v729 = vmul.f32 %v714, %v727
  %v730 = vmul.f32 %v565, %v448
  %v731 = vperm.slane %v729, 3
  %v732 = vmul.f32 %v570, %v731
  %v733 = vadd.f32 %v730, %v732
  %v734 = vadd.f32 %v733, %v576
  %v735 = vxor.u32 %v734, 2147483648
  %v736 = vmul.f32 %v735, 1.442695
  %v737 = vpow.pop %v736
  %v738 = vadd.f32 %v737, 1.0
  %v739 = vrcp.pop %v738
  %v740 = vmul.f32 %v738, %v739
  %v741 = vsub.f32 1.0, %v740
  %v742 = vmul.f32 %v739, %v741
  %v743 = vadd.f32 %v739, %v742
  %vm744 = vweird.f32 %v738
  %vm745 = vweird.f32 %v739
  %vm746 = vmor %vm744, %vm745
  %v747 = vsel %vm746, %v739, %v743
  %v748 = vand.u32 2147483647, %v738
  %vm749 = vcmp.eq.f32.partialorder %v748, 8.507059e+37
  %v750 = vand.u32 %v738, 2147483648
  %v751 = vor.u32 1.1754944e-38, %v750
  %v752 = vsel %vm749, %v751, %v747
  %v753 = vmul.f32 1.0, %v752
  %v754 = vtanh.pop %v734
  %v755 = vmul.f32 %v753, %v724
  %v757 = vrot.slane %v754, 2
  %v759 = vmul.f32 %v753, %v757
  %v761 = vrot.slane %v759, 7
  %v763 = vadd.f32 %v755, %v761
  %v764 = vtanh.pop %v763
  %v766 = vrot.slane %v764, 6
  %v768 = vmul.f32 %v753, %v766
  %v769 = vmul.f32 %v565, %v486
  %v770 = vperm.slane %v768, 3
  %v771 = vmul.f32 %v570, %v770
  %v772 = vadd.f32 %v769, %v771
  %v773 = vadd.f32 %v772, %v576
  %v774 = vxor.u32 %v773, 2147483648
  %v775 = vmul.f32 %v774, 1.442695
  %v776 = vpow.pop %v775
  %v777 = vadd.f32 %v776, 1.0
  %v778 = vrcp.pop %v777
  %v779 = vmul.f32 %v777, %v778
  %v780 = vsub.f32 1.0, %v779
  %v781 = vmul.f32 %v778, %v780
  %v782 = vadd.f32 %v778, %v781
  %vm783 = vweird.f32 %v777
  %vm784 = vweird.f32 %v778
  %vm785 = vmor %vm783, %vm784
  %v786 = vsel %vm785, %v778, %v782
  %v787 = vand.u32 2147483647, %v777
  %vm788 = vcmp.eq.f32.partialorder %v787, 8.507059e+37
  %v789 = vand.u32 %v777, 2147483648
  %v790 = vor.u32 1.1754944e-38, %v789
  %v791 = vsel %vm788, %v790, %v786
  %v792 = vmul.f32 1.0, %v791
  %v793 = vtanh.pop %v773
  %v794 = vmul.f32 %v792, %v763
  %v796 = vrot.slane %v793, 2
  %v798 = vmul.f32 %v792, %v796
  %v800 = vrot.slane %v798, 7
  %v802 = vadd.f32 %v794, %v800
  %v803 = vtanh.pop %v802
  %v805 = vrot.slane %v803, 6
  %v807 = vmul.f32 %v792, %v805
  %v808 = vmul.f32 %v565, %v524
  %v809 = vperm.slane %v807, 3
  %v810 = vmul.f32 %v570, %v809
  %v811 = vadd.f32 %v808, %v810
  %v812 = vadd.f32 %v811, %v576
  %v813 = vxor.u32 %v812, 2147483648
  %v814 = vmul.f32 %v813, 1.442695
  %v815 = vpow.pop %v814
  %v816 = vadd.f32 %v815, 1.0
  %v817 = vrcp.pop %v816
  %v818 = vmul.f32 %v816, %v817
  %v819 = vsub.f32 1.0, %v818
  %v820 = vmul.f32 %v817, %v819
  %v821 = vadd.f32 %v817, %v820
  %vm822 = vweird.f32 %v816
  %vm823 = vweird.f32 %v817
  %vm824 = vmor %vm822, %vm823
  %v825 = vsel %vm824, %v817, %v821
  %v826 = vand.u32 2147483647, %v816
  %vm827 = vcmp.eq.f32.partialorder %v826, 8.507059e+37
  %v828 = vand.u32 %v816, 2147483648
  %v829 = vor.u32 1.1754944e-38, %v828
  %v830 = vsel %vm827, %v829, %v825
  %v831 = vmul.f32 1.0, %v830
  %v832 = vtanh.pop %v812
  %v833 = vmul.f32 %v831, %v802
  %v835 = vrot.slane %v832, 2
  %v837 = vmul.f32 %v831, %v835
  %v839 = vrot.slane %v837, 7
  %v841 = vadd.f32 %v833, %v839
  %v842 = vtanh.pop %v841
  %v844 = vrot.slane %v842, 6
  %v846 = vmul.f32 %v831, %v844
  %v847 = vperm.slane %v561, 3
  %v848 = vmul.f32 %v565, %v847
  %v849 = vperm.slane %v846, 3
  %v850 = vmul.f32 %v570, %v849
  %v851 = vadd.f32 %v848, %v850
  %v852 = vadd.f32 %v851, %v576
  %v853 = vxor.u32 %v852, 2147483648
  %v854 = vmul.f32 %v853, 1.442695
  %v855 = vpow.pop %v854
  %v856 = vadd.f32 %v855, 1.0
  %v857 = vrcp.pop %v856
  %v858 = vmul.f32 %v856, %v857
  %v859 = vsub.f32 1.0, %v858
  %v860 = vmul.f32 %v857, %v859
  %v861 = vadd.f32 %v857, %v860
  %vm862 = vweird.f32 %v856
  %vm863 = vweird.f32 %v857
  %vm864 = vmor %vm862, %vm863
  %v865 = vsel %vm864, %v857, %v861
  %v866 = vand.u32 2147483647, %v856
  %vm867 = vcmp.eq.f32.partialorder %v866, 8.507059e+37
  %v868 = vand.u32 %v856, 2147483648
  %v869 = vor.u32 1.1754944e-38, %v868
  %v870 = vsel %vm867, %v869, %v865
  %v871 = vmul.f32 1.0, %v870
  %v872 = vtanh.pop %v852
  %v873 = vmul.f32 %v871, %v841
  %v875 = vrot.slane %v872, 2
  %v877 = vmul.f32 %v871, %v875
  %v879 = vrot.slane %v877, 7
  %v881 = vadd.f32 %v873, %v879
  %v882 = vtanh.pop %v881
  %v884 = vrot.slane %v882, 6
  %v886 = vmul.f32 %v871, %v884
  %887 = vset.pattern.permute.xlu0 1
  %888 = vperm.xlu0 %887, %v29
  %v889 = vpop.permute.xlu0 %888
  %v891 = vmul.f32 %v889, %v614
  %892 = vset.pattern.permute.xlu0 2
  %893 = vperm.xlu0 %892, %v30
  %v894 = vpop.permute.xlu0 %893
  %v896 = vmul.f32 %v894, 0.0
  %v897 = vadd.f32 %v891, %v896
  %898 = vset.pattern.permute.xlu0 2
  %899 = vperm.xlu0 %898, %v31
  %v900 = vpop.permute.xlu0 %899
  %v902 = vadd.f32 %v897, %v900
  %v903 = vxor.u32 %v902, 2147483648
  %v904 = vmul.f32 %v903, 1.442695
  %v905 = vpow.pop %v904
  %v906 = vadd.f32 %v905, 1.0
  %v907 = vrcp.pop %v906
  %v908 = vmul.f32 %v906, %v907
  %v909 = vsub.f32 1.0, %v908
  %v910 = vmul.f32 %v907, %v909
  %v911 = vadd.f32 %v907, %v910
  %vm912 = vweird.f32 %v906
  %vm913 = vweird.f32 %v907
  %vm914 = vmor %vm912, %vm913
  %v915 = vsel %vm914, %v907, %v911
  %v916 = vand.u32 2147483647, %v906
  %vm917 = vcmp.eq.f32.partialorder %v916, 8.507059e+37
  %v918 = vand.u32 %v906, 2147483648
  %v919 = vor.u32 1.1754944e-38, %v918
  %v920 = vsel %vm917, %v919, %v915
  %v921 = vmul.f32 1.0, %v920
  %v922 = vtanh.pop %v902
  %v923 = vmul.f32 %v921, 0.0
  %v925 = vrot.slane %v922, 2
  %v927 = vmul.f32 %v921, %v925
  %v929 = vrot.slane %v927, 7
  %v931 = vadd.f32 %v923, %v929
  %v932 = vtanh.pop %v931
  %v934 = vrot.slane %v932, 6
  %v936 = vmul.f32 %v921, %v934
  %v937 = vmul.f32 %v889, %v653
  %v938 = vperm.slane %v936, 3
  %v939 = vmul.f32 %v894, %v938
  %v940 = vadd.f32 %v937, %v939
  %v941 = vadd.f32 %v940, %v900
  %v942 = vxor.u32 %v941, 2147483648
  %v943 = vmul.f32 %v942, 1.442695
  %v944 = vpow.pop %v943
  %v945 = vadd.f32 %v944, 1.0
  %v946 = vrcp.pop %v945
  %v947 = vmul.f32 %v945, %v946
  %v948 = vsub.f32 1.0, %v947
  %v949 = vmul.f32 %v946, %v948
  %v950 = vadd.f32 %v946, %v949
  %vm951 = vweird.f32 %v945
  %vm952 = vweird.f32 %v946
  %vm953 = vmor %vm951, %vm952
  %v954 = vsel %vm953, %v946, %v950
  %v955 = vand.u32 2147483647, %v945
  %vm956 = vcmp.eq.f32.partialorder %v955, 8.507059e+37
  %v957 = vand.u32 %v945, 2147483648
  %v958 = vor.u32 1.1754944e-38, %v957
  %v959 = vsel %vm956, %v958, %v954
  %v960 = vmul.f32 1.0, %v959
  %v961 = vtanh.pop %v941
  %v962 = vmul.f32 %v960, %v931
  %v964 = vrot.slane %v961, 2
  %v966 = vmul.f32 %v960, %v964
  %v968 = vrot.slane %v966, 7
  %v970 = vadd.f32 %v962, %v968
  %v971 = vtanh.pop %v970
  %v973 = vrot.slane %v971, 6
  %v975 = vmul.f32 %v960, %v973
  %v976 = vmul.f32 %v889, %v692
  %v977 = vperm.slane %v975, 3
  %v978 = vmul.f32 %v894, %v977
  %v979 = vadd.f32 %v976, %v978
  %v980 = vadd.f32 %v979, %v900
  %v981 = vxor.u32 %v980, 2147483648
  %v982 = vmul.f32 %v981, 1.442695
  %v983 = vpow.pop %v982
  %v984 = vadd.f32 %v983, 1.0
  %v985 = vrcp.pop %v984
  %v986 = vmul.f32 %v984, %v985
  %v987 = vsub.f32 1.0, %v986
  %v988 = vmul.f32 %v985, %v987
  %v989 = vadd.f32 %v985, %v988
  %vm990 = vweird.f32 %v984
  %vm991 = vweird.f32 %v985
  %vm992 = vmor %vm990, %vm991
  %v993 = vsel %vm992, %v985, %v989
  %v994 = vand.u32 2147483647, %v984
  %vm995 = vcmp.eq.f32.partialorder %v994, 8.507059e+37
  %v996 = vand.u32 %v984, 2147483648
  %v997 = vor.u32 1.1754944e-38, %v996
  %v998 = vsel %vm995, %v997, %v993
  %v999 = vmul.f32 1.0, %v998
  %v1000 = vtanh.pop %v980
  %v1001 = vmul.f32 %v999, %v970
  %v1003 = vrot.slane %v1000, 2
  %v1005 = vmul.f32 %v999, %v1003
  %v1007 = vrot.slane %v1005, 7
  %v1009 = vadd.f32 %v1001, %v1007
  %v1010 = vtanh.pop %v1009
  %v1012 = vrot.slane %v1010, 6
  %v1014 = vmul.f32 %v999, %v1012
  %v1015 = vmul.f32 %v889, %v731
  %v1016 = vperm.slane %v1014, 3
  %v1017 = vmul.f32 %v894, %v1016
  %v1018 = vadd.f32 %v1015, %v1017
  %v1019 = vadd.f32 %v1018, %v900
  %v1020 = vxor.u32 %v1019, 2147483648
  %v1021 = vmul.f32 %v1020, 1.442695
  %v1022 = vpow.pop %v1021
  %v1023 = vadd.f32 %v1022, 1.0
  %v1024 = vrcp.pop %v1023
  %v1025 = vmul.f32 %v1023, %v1024
  %v1026 = vsub.f32 1.0, %v1025
  %v1027 = vmul.f32 %v1024, %v1026
  %v1028 = vadd.f32 %v1024, %v1027
  %vm1029 = vweird.f32 %v1023
  %vm1030 = vweird.f32 %v1024
  %vm1031 = vmor %vm1029, %vm1030
  %v1032 = vsel %vm1031, %v1024, %v1028
  %v1033 = vand.u32 2147483647, %v1023
  %vm1034 = vcmp.eq.f32.partialorder %v1033, 8.507059e+37
  %v1035 = vand.u32 %v1023, 2147483648
  %v1036 = vor.u32 1.1754944e-38, %v1035
  %v1037 = vsel %vm1034, %v1036, %v1032
  %v1038 = vmul.f32 1.0, %v1037
  %v1039 = vtanh.pop %v1019
  %v1040 = vmul.f32 %v1038, %v1009
  %v1042 = vrot.slane %v1039, 2
  %v1044 = vmul.f32 %v1038, %v1042
  %v1046 = vrot.slane %v1044, 7
  %v1048 = vadd.f32 %v1040, %v1046
  %v1049 = vtanh.pop %v1048
  %v1051 = vrot.slane %v1049, 6
  %v1053 = vmul.f32 %v1038, %v1051
  %v1054 = vmul.f32 %v889, %v770
  %v1055 = vperm.slane %v1053, 3
  %v1056 = vmul.f32 %v894, %v1055
  %v1057 = vadd.f32 %v1054, %v1056
  %v1058 = vadd.f32 %v1057, %v900
  %v1059 = vxor.u32 %v1058, 2147483648
  %v1060 = vmul.f32 %v1059, 1.442695
  %v1061 = vpow.pop %v1060
  %v1062 = vadd.f32 %v1061, 1.0
  %v1063 = vrcp.pop %v1062
  %v1064 = vmul.f32 %v1062, %v1063
  %v1065 = vsub.f32 1.0, %v1064
  %v1066 = vmul.f32 %v1063, %v1065
  %v1067 = vadd.f32 %v1063, %v1066
  %vm1068 = vweird.f32 %v1062
  %vm1069 = vweird.f32 %v1063
  %vm1070 = vmor %vm1068, %vm1069
  %v1071 = vsel %vm1070, %v1063, %v1067
  %v1072 = vand.u32 2147483647, %v1062
  %vm1073 = vcmp.eq.f32.partialorder %v1072, 8.507059e+37
  %v1074 = vand.u32 %v1062, 2147483648
  %v1075 = vor.u32 1.1754944e-38, %v1074
  %v1076 = vsel %vm1073, %v1075, %v1071
  %v1077 = vmul.f32 1.0, %v1076
  %v1078 = vtanh.pop %v1058
  %v1079 = vmul.f32 %v1077, %v1048
  %v1081 = vrot.slane %v1078, 2
  %v1083 = vmul.f32 %v1077, %v1081
  %v1085 = vrot.slane %v1083, 7
  %v1087 = vadd.f32 %v1079, %v1085
  %v1088 = vtanh.pop %v1087
  %v1090 = vrot.slane %v1088, 6
  %v1092 = vmul.f32 %v1077, %v1090
  %v1093 = vmul.f32 %v889, %v809
  %v1094 = vperm.slane %v1092, 3
  %v1095 = vmul.f32 %v894, %v1094
  %v1096 = vadd.f32 %v1093, %v1095
  %v1097 = vadd.f32 %v1096, %v900
  %v1098 = vxor.u32 %v1097, 2147483648
  %v1099 = vmul.f32 %v1098, 1.442695
  %v1100 = vpow.pop %v1099
  %v1101 = vadd.f32 %v1100, 1.0
  %v1102 = vrcp.pop %v1101
  %v1103 = vmul.f32 %v1101, %v1102
  %v1104 = vsub.f32 1.0, %v1103
  %v1105 = vmul.f32 %v1102, %v1104
  %v1106 = vadd.f32 %v1102, %v1105
  %vm1107 = vweird.f32 %v1101
  %vm1108 = vweird.f32 %v1102
  %vm1109 = vmor %vm1107, %vm1108
  %v1110 = vsel %vm1109, %v1102, %v1106
  %v1111 = vand.u32 2147483647, %v1101
  %vm1112 = vcmp.eq.f32.partialorder %v1111, 8.507059e+37
  %v1113 = vand.u32 %v1101, 2147483648
  %v1114 = vor.u32 1.1754944e-38, %v1113
  %v1115 = vsel %vm1112, %v1114, %v1110
  %v1116 = vmul.f32 1.0, %v1115
  %v1117 = vtanh.pop %v1097
  %v1118 = vmul.f32 %v1116, %v1087
  %v1120 = vrot.slane %v1117, 2
  %v1122 = vmul.f32 %v1116, %v1120
  %v1124 = vrot.slane %v1122, 7
  %v1126 = vadd.f32 %v1118, %v1124
  %v1127 = vtanh.pop %v1126
  %v1129 = vrot.slane %v1127, 6
  %v1131 = vmul.f32 %v1116, %v1129
  %v1132 = vmul.f32 %v889, %v849
  %v1133 = vperm.slane %v1131, 3
  %v1134 = vmul.f32 %v894, %v1133
  %v1135 = vadd.f32 %v1132, %v1134
  %v1136 = vadd.f32 %v1135, %v900
  %v1137 = vxor.u32 %v1136, 2147483648
  %v1138 = vmul.f32 %v1137, 1.442695
  %v1139 = vpow.pop %v1138
  %v1140 = vadd.f32 %v1139, 1.0
  %v1141 = vrcp.pop %v1140
  %v1142 = vmul.f32 %v1140, %v1141
  %v1143 = vsub.f32 1.0, %v1142
  %v1144 = vmul.f32 %v1141, %v1143
  %v1145 = vadd.f32 %v1141, %v1144
  %vm1146 = vweird.f32 %v1140
  %vm1147 = vweird.f32 %v1141
  %vm1148 = vmor %vm1146, %vm1147
  %v1149 = vsel %vm1148, %v1141, %v1145
  %v1150 = vand.u32 2147483647, %v1140
  %vm1151 = vcmp.eq.f32.partialorder %v1150, 8.507059e+37
  %v1152 = vand.u32 %v1140, 2147483648
  %v1153 = vor.u32 1.1754944e-38, %v1152
  %v1154 = vsel %vm1151, %v1153, %v1149
  %v1155 = vmul.f32 1.0, %v1154
  %v1156 = vtanh.pop %v1136
  %v1157 = vmul.f32 %v1155, %v1126
  %v1159 = vrot.slane %v1156, 2
  %v1161 = vmul.f32 %v1155, %v1159
  %v1163 = vrot.slane %v1161, 7
  %v1165 = vadd.f32 %v1157, %v1163
  %v1166 = vtanh.pop %v1165
  %v1168 = vrot.slane %v1166, 6
  %v1170 = vmul.f32 %v1155, %v1168
  %v1171 = vperm.slane %v886, 3
  %v1172 = vmul.f32 %v889, %v1171
  %v1173 = vperm.slane %v1170, 3
  %v1174 = vmul.f32 %v894, %v1173
  %v1175 = vadd.f32 %v1172, %v1174
  %v1176 = vadd.f32 %v1175, %v900
  %v1177 = vxor.u32 %v1176, 2147483648
  %v1178 = vmul.f32 %v1177, 1.442695
  %v1179 = vpow.pop %v1178
  %v1180 = vadd.f32 %v1179, 1.0
  %v1181 = vrcp.pop %v1180
  %v1182 = vmul.f32 %v1180, %v1181
  %v1183 = vsub.f32 1.0, %v1182
  %v1184 = vmul.f32 %v1181, %v1183
  %v1185 = vadd.f32 %v1181, %v1184
  %vm1186 = vweird.f32 %v1180
  %vm1187 = vweird.f32 %v1181
  %vm1188 = vmor %vm1186, %vm1187
  %v1189 = vsel %vm1188, %v1181, %v1185
  %v1190 = vand.u32 2147483647, %v1180
  %vm1191 = vcmp.eq.f32.partialorder %v1190, 8.507059e+37
  %v1192 = vand.u32 %v1180, 2147483648
  %v1193 = vor.u32 1.1754944e-38, %v1192
  %v1194 = vsel %vm1191, %v1193, %v1189
  %v1195 = vmul.f32 1.0, %v1194
  %v1196 = vtanh.pop %v1176
  %v1197 = vmul.f32 %v1195, %v1165
  %v1199 = vrot.slane %v1196, 2
  %v1201 = vmul.f32 %v1195, %v1199
  %v1203 = vrot.slane %v1201, 7
  %v1205 = vadd.f32 %v1197, %v1203
  %v1206 = vtanh.pop %v1205
  %v1208 = vrot.slane %v1206, 6
  %v1210 = vmul.f32 %v1195, %v1208
  %1211 = vset.pattern.permute.xlu0 2
  %1212 = vperm.xlu0 %1211, %v29
  %v1213 = vpop.permute.xlu0 %1212
  %v1215 = vmul.f32 %v1213, %v938
  %1216 = vset.pattern.permute.xlu0 3
  %1217 = vperm.xlu0 %1216, %v30
  %v1218 = vpop.permute.xlu0 %1217
  %v1220 = vmul.f32 %v1218, 0.0
  %v1221 = vadd.f32 %v1215, %v1220
  %1222 = vset.pattern.permute.xlu0 3
  %1223 = vperm.xlu0 %1222, %v31
  %v1224 = vpop.permute.xlu0 %1223
  %v1226 = vadd.f32 %v1221, %v1224
  %v1227 = vxor.u32 %v1226, 2147483648
  %v1228 = vmul.f32 %v1227, 1.442695
  %v1229 = vpow.pop %v1228
  %v1230 = vadd.f32 %v1229, 1.0
  %v1231 = vrcp.pop %v1230
  %v1232 = vmul.f32 %v1230, %v1231
  %v1233 = vsub.f32 1.0, %v1232
  %v1234 = vmul.f32 %v1231, %v1233
  %v1235 = vadd.f32 %v1231, %v1234
  %vm1236 = vweird.f32 %v1230
  %vm1237 = vweird.f32 %v1231
  %vm1238 = vmor %vm1236, %vm1237
  %v1239 = vsel %vm1238, %v1231, %v1235
  %v1240 = vand.u32 2147483647, %v1230
  %vm1241 = vcmp.eq.f32.partialorder %v1240, 8.507059e+37
  %v1242 = vand.u32 %v1230, 2147483648
  %v1243 = vor.u32 1.1754944e-38, %v1242
  %v1244 = vsel %vm1241, %v1243, %v1239
  %v1245 = vmul.f32 1.0, %v1244
  %v1246 = vtanh.pop %v1226
  %v1247 = vmul.f32 %v1245, 0.0
  %v1249 = vrot.slane %v1246, 2
  %v1251 = vmul.f32 %v1245, %v1249
  %v1253 = vrot.slane %v1251, 7
  %v1255 = vadd.f32 %v1247, %v1253
  %v1256 = vtanh.pop %v1255
  %v1258 = vrot.slane %v1256, 6
  %v1260 = vmul.f32 %v1245, %v1258
  %v1261 = vmul.f32 %v1213, %v977
  %v1262 = vperm.slane %v1260, 3
  %v1263 = vmul.f32 %v1218, %v1262
  %v1264 = vadd.f32 %v1261, %v1263
  %v1265 = vadd.f32 %v1264, %v1224
  %v1266 = vxor.u32 %v1265, 2147483648
  %v1267 = vmul.f32 %v1266, 1.442695
  %v1268 = vpow.pop %v1267
  %v1269 = vadd.f32 %v1268, 1.0
  %v1270 = vrcp.pop %v1269
  %v1271 = vmul.f32 %v1269, %v1270
  %v1272 = vsub.f32 1.0, %v1271
  %v1273 = vmul.f32 %v1270, %v1272
  %v1274 = vadd.f32 %v1270, %v1273
  %vm1275 = vweird.f32 %v1269
  %vm1276 = vweird.f32 %v1270
  %vm1277 = vmor %vm1275, %vm1276
  %v1278 = vsel %vm1277, %v1270, %v1274
  %v1279 = vand.u32 2147483647, %v1269
  %vm1280 = vcmp.eq.f32.partialorder %v1279, 8.507059e+37
  %v1281 = vand.u32 %v1269, 2147483648
  %v1282 = vor.u32 1.1754944e-38, %v1281
  %v1283 = vsel %vm1280, %v1282, %v1278
  %v1284 = vmul.f32 1.0, %v1283
  %v1285 = vtanh.pop %v1265
  %v1286 = vmul.f32 %v1284, %v1255
  %v1288 = vrot.slane %v1285, 2
  %v1290 = vmul.f32 %v1284, %v1288
  %v1292 = vrot.slane %v1290, 7
  %v1294 = vadd.f32 %v1286, %v1292
  %v1295 = vtanh.pop %v1294
  %v1297 = vrot.slane %v1295, 6
  %v1299 = vmul.f32 %v1284, %v1297
  %v1300 = vmul.f32 %v1213, %v1016
  %v1301 = vperm.slane %v1299, 3
  %v1302 = vmul.f32 %v1218, %v1301
  %v1303 = vadd.f32 %v1300, %v1302
  %v1304 = vadd.f32 %v1303, %v1224
  %v1305 = vxor.u32 %v1304, 2147483648
  %v1306 = vmul.f32 %v1305, 1.442695
  %v1307 = vpow.pop %v1306
  %v1308 = vadd.f32 %v1307, 1.0
  %v1309 = vrcp.pop %v1308
  %v1310 = vmul.f32 %v1308, %v1309
  %v1311 = vsub.f32 1.0, %v1310
  %v1312 = vmul.f32 %v1309, %v1311
  %v1313 = vadd.f32 %v1309, %v1312
  %vm1314 = vweird.f32 %v1308
  %vm1315 = vweird.f32 %v1309
  %vm1316 = vmor %vm1314, %vm1315
  %v1317 = vsel %vm1316, %v1309, %v1313
  %v1318 = vand.u32 2147483647, %v1308
  %vm1319 = vcmp.eq.f32.partialorder %v1318, 8.507059e+37
  %v1320 = vand.u32 %v1308, 2147483648
  %v1321 = vor.u32 1.1754944e-38, %v1320
  %v1322 = vsel %vm1319, %v1321, %v1317
  %v1323 = vmul.f32 1.0, %v1322
  %v1324 = vtanh.pop %v1304
  %v1325 = vmul.f32 %v1323, %v1294
  %v1327 = vrot.slane %v1324, 2
  %v1329 = vmul.f32 %v1323, %v1327
  %v1331 = vrot.slane %v1329, 7
  %v1333 = vadd.f32 %v1325, %v1331
  %v1334 = vtanh.pop %v1333
  %v1336 = vrot.slane %v1334, 6
  %v1338 = vmul.f32 %v1323, %v1336
  %v1339 = vmul.f32 %v1213, %v1055
  %v1340 = vperm.slane %v1338, 3
  %v1341 = vmul.f32 %v1218, %v1340
  %v1342 = vadd.f32 %v1339, %v1341
  %v1343 = vadd.f32 %v1342, %v1224
  %v1344 = vxor.u32 %v1343, 2147483648
  %v1345 = vmul.f32 %v1344, 1.442695
  %v1346 = vpow.pop %v1345
  %v1347 = vadd.f32 %v1346, 1.0
  %v1348 = vrcp.pop %v1347
  %v1349 = vmul.f32 %v1347, %v1348
  %v1350 = vsub.f32 1.0, %v1349
  %v1351 = vmul.f32 %v1348, %v1350
  %v1352 = vadd.f32 %v1348, %v1351
  %vm1353 = vweird.f32 %v1347
  %vm1354 = vweird.f32 %v1348
  %vm1355 = vmor %vm1353, %vm1354
  %v1356 = vsel %vm1355, %v1348, %v1352
  %v1357 = vand.u32 2147483647, %v1347
  %vm1358 = vcmp.eq.f32.partialorder %v1357, 8.507059e+37
  %v1359 = vand.u32 %v1347, 2147483648
  %v1360 = vor.u32 1.1754944e-38, %v1359
  %v1361 = vsel %vm1358, %v1360, %v1356
  %v1362 = vmul.f32 1.0, %v1361
  %v1363 = vtanh.pop %v1343
  %v1364 = vmul.f32 %v1362, %v1333
  %v1366 = vrot.slane %v1363, 2
  %v1368 = vmul.f32 %v1362, %v1366
  %v1370 = vrot.slane %v1368, 7
  %v1372 = vadd.f32 %v1364, %v1370
  %v1373 = vtanh.pop %v1372
  %v1375 = vrot.slane %v1373, 6
  %v1377 = vmul.f32 %v1362, %v1375
  %v1378 = vmul.f32 %v1213, %v1094
  %v1379 = vperm.slane %v1377, 3
  %v1380 = vmul.f32 %v1218, %v1379
  %v1381 = vadd.f32 %v1378, %v1380
  %v1382 = vadd.f32 %v1381, %v1224
  %v1383 = vxor.u32 %v1382, 2147483648
  %v1384 = vmul.f32 %v1383, 1.442695
  %v1385 = vpow.pop %v1384
  %v1386 = vadd.f32 %v1385, 1.0
  %v1387 = vrcp.pop %v1386
  %v1388 = vmul.f32 %v1386, %v1387
  %v1389 = vsub.f32 1.0, %v1388
  %v1390 = vmul.f32 %v1387, %v1389
  %v1391 = vadd.f32 %v1387, %v1390
  %vm1392 = vweird.f32 %v1386
  %vm1393 = vweird.f32 %v1387
  %vm1394 = vmor %vm1392, %vm1393
  %v1395 = vsel %vm1394, %v1387, %v1391
  %v1396 = vand.u32 2147483647, %v1386
  %vm1397 = vcmp.eq.f32.partialorder %v1396, 8.507059e+37
  %v1398 = vand.u32 %v1386, 2147483648
  %v1399 = vor.u32 1.1754944e-38, %v1398
  %v1400 = vsel %vm1397, %v1399, %v1395
  %v1401 = vmul.f32 1.0, %v1400
  %v1402 = vtanh.pop %v1382
  %v1403 = vmul.f32 %v1401, %v1372
  %v1405 = vrot.slane %v1402, 2
  %v1407 = vmul.f32 %v1401, %v1405
  %v1409 = vrot.slane %v1407, 7
  %v1411 = vadd.f32 %v1403, %v1409
  %v1412 = vtanh.pop %v1411
  %v1414 = vrot.slane %v1412, 6
  %v1416 = vmul.f32 %v1401, %v1414
  %v1417 = vmul.f32 %v1213, %v1133
  %v1418 = vperm.slane %v1416, 3
  %v1419 = vmul.f32 %v1218, %v1418
  %v1420 = vadd.f32 %v1417, %v1419
  %v1421 = vadd.f32 %v1420, %v1224
  %v1422 = vxor.u32 %v1421, 2147483648
  %v1423 = vmul.f32 %v1422, 1.442695
  %v1424 = vpow.pop %v1423
  %v1425 = vadd.f32 %v1424, 1.0
  %v1426 = vrcp.pop %v1425
  %v1427 = vmul.f32 %v1425, %v1426
  %v1428 = vsub.f32 1.0, %v1427
  %v1429 = vmul.f32 %v1426, %v1428
  %v1430 = vadd.f32 %v1426, %v1429
  %vm1431 = vweird.f32 %v1425
  %vm1432 = vweird.f32 %v1426
  %vm1433 = vmor %vm1431, %vm1432
  %v1434 = vsel %vm1433, %v1426, %v1430
  %v1435 = vand.u32 2147483647, %v1425
  %vm1436 = vcmp.eq.f32.partialorder %v1435, 8.507059e+37
  %v1437 = vand.u32 %v1425, 2147483648
  %v1438 = vor.u32 1.1754944e-38, %v1437
  %v1439 = vsel %vm1436, %v1438, %v1434
  %v1440 = vmul.f32 1.0, %v1439
  %v1441 = vtanh.pop %v1421
  %v1442 = vmul.f32 %v1440, %v1411
  %v1444 = vrot.slane %v1441, 2
  %v1446 = vmul.f32 %v1440, %v1444
  %v1448 = vrot.slane %v1446, 7
  %v1450 = vadd.f32 %v1442, %v1448
  %v1451 = vtanh.pop %v1450
  %v1453 = vrot.slane %v1451, 6
  %v1455 = vmul.f32 %v1440, %v1453
  %v1456 = vmul.f32 %v1213, %v1173
  %v1457 = vperm.slane %v1455, 3
  %v1458 = vmul.f32 %v1218, %v1457
  %v1459 = vadd.f32 %v1456, %v1458
  %v1460 = vadd.f32 %v1459, %v1224
  %v1461 = vxor.u32 %v1460, 2147483648
  %v1462 = vmul.f32 %v1461, 1.442695
  %v1463 = vpow.pop %v1462
  %v1464 = vadd.f32 %v1463, 1.0
  %v1465 = vrcp.pop %v1464
  %v1466 = vmul.f32 %v1464, %v1465
  %v1467 = vsub.f32 1.0, %v1466
  %v1468 = vmul.f32 %v1465, %v1467
  %v1469 = vadd.f32 %v1465, %v1468
  %vm1470 = vweird.f32 %v1464
  %vm1471 = vweird.f32 %v1465
  %vm1472 = vmor %vm1470, %vm1471
  %v1473 = vsel %vm1472, %v1465, %v1469
  %v1474 = vand.u32 2147483647, %v1464
  %vm1475 = vcmp.eq.f32.partialorder %v1474, 8.507059e+37
  %v1476 = vand.u32 %v1464, 2147483648
  %v1477 = vor.u32 1.1754944e-38, %v1476
  %v1478 = vsel %vm1475, %v1477, %v1473
  %v1479 = vmul.f32 1.0, %v1478
  %v1480 = vtanh.pop %v1460
  %v1481 = vmul.f32 %v1479, %v1450
  %v1483 = vrot.slane %v1480, 2
  %v1485 = vmul.f32 %v1479, %v1483
  %v1487 = vrot.slane %v1485, 7
  %v1489 = vadd.f32 %v1481, %v1487
  %v1490 = vtanh.pop %v1489
  %v1492 = vrot.slane %v1490, 6
  %v1494 = vmul.f32 %v1479, %v1492
  %v1495 = vperm.slane %v1210, 3
  %v1496 = vmul.f32 %v1213, %v1495
  %v1497 = vperm.slane %v1494, 3
  %v1498 = vmul.f32 %v1218, %v1497
  %v1499 = vadd.f32 %v1496, %v1498
  %v1500 = vadd.f32 %v1499, %v1224
  %v1501 = vxor.u32 %v1500, 2147483648
  %v1502 = vmul.f32 %v1501, 1.442695
  %v1503 = vpow.pop %v1502
  %v1504 = vadd.f32 %v1503, 1.0
  %v1505 = vrcp.pop %v1504
  %v1506 = vmul.f32 %v1504, %v1505
  %v1507 = vsub.f32 1.0, %v1506
  %v1508 = vmul.f32 %v1505, %v1507
  %v1509 = vadd.f32 %v1505, %v1508
  %vm1510 = vweird.f32 %v1504
  %vm1511 = vweird.f32 %v1505
  %vm1512 = vmor %vm1510, %vm1511
  %v1513 = vsel %vm1512, %v1505, %v1509
  %v1514 = vand.u32 2147483647, %v1504
  %vm1515 = vcmp.eq.f32.partialorder %v1514, 8.507059e+37
  %v1516 = vand.u32 %v1504, 2147483648
  %v1517 = vor.u32 1.1754944e-38, %v1516
  %v1518 = vsel %vm1515, %v1517, %v1513
  %v1519 = vmul.f32 1.0, %v1518
  %v1520 = vtanh.pop %v1500
  %v1521 = vmul.f32 %v1519, %v1489
  %v1523 = vrot.slane %v1520, 2
  %v1525 = vmul.f32 %v1519, %v1523
  %v1527 = vrot.slane %v1525, 7
  %v1529 = vadd.f32 %v1521, %v1527
  %v1530 = vtanh.pop %v1529
  %v1532 = vrot.slane %v1530, 6
  %v1534 = vmul.f32 %v1519, %v1532
  %1535 = vset.pattern.permute.xlu0 3
  %1536 = vperm.xlu0 %1535, %v29
  %v1537 = vpop.permute.xlu0 %1536
  %v1539 = vmul.f32 %v1537, %v1262
  %1540 = vset.pattern.permute.xlu0 4
  %1541 = vperm.xlu0 %1540, %v30
  %v1542 = vpop.permute.xlu0 %1541
  %v1544 = vmul.f32 %v1542, 0.0
  %v1545 = vadd.f32 %v1539, %v1544
  %1546 = vset.pattern.permute.xlu0 4
  %1547 = vperm.xlu0 %1546, %v31
  %v1548 = vpop.permute.xlu0 %1547
  %v1550 = vadd.f32 %v1545, %v1548
  %v1551 = vxor.u32 %v1550, 2147483648
  %v1552 = vmul.f32 %v1551, 1.442695
  %v1553 = vpow.pop %v1552
  %v1554 = vadd.f32 %v1553, 1.0
  %v1555 = vrcp.pop %v1554
  %v1556 = vmul.f32 %v1554, %v1555
  %v1557 = vsub.f32 1.0, %v1556
  %v1558 = vmul.f32 %v1555, %v1557
  %v1559 = vadd.f32 %v1555, %v1558
  %vm1560 = vweird.f32 %v1554
  %vm1561 = vweird.f32 %v1555
  %vm1562 = vmor %vm1560, %vm1561
  %v1563 = vsel %vm1562, %v1555, %v1559
  %v1564 = vand.u32 2147483647, %v1554
  %vm1565 = vcmp.eq.f32.partialorder %v1564, 8.507059e+37
  %v1566 = vand.u32 %v1554, 2147483648
  %v1567 = vor.u32 1.1754944e-38, %v1566
  %v1568 = vsel %vm1565, %v1567, %v1563
  %v1569 = vmul.f32 1.0, %v1568
  %v1570 = vtanh.pop %v1550
  %v1571 = vmul.f32 %v1569, 0.0
  %v1573 = vrot.slane %v1570, 2
  %v1575 = vmul.f32 %v1569, %v1573
  %v1577 = vrot.slane %v1575, 7
  %v1579 = vadd.f32 %v1571, %v1577
  %v1580 = vtanh.pop %v1579
  %v1582 = vrot.slane %v1580, 6
  %v1584 = vmul.f32 %v1569, %v1582
  %v1585 = vmul.f32 %v1537, %v1301
  %v1586 = vperm.slane %v1584, 3
  %v1587 = vmul.f32 %v1542, %v1586
  %v1588 = vadd.f32 %v1585, %v1587
  %v1589 = vadd.f32 %v1588, %v1548
  %v1590 = vxor.u32 %v1589, 2147483648
  %v1591 = vmul.f32 %v1590, 1.442695
  %v1592 = vpow.pop %v1591
  %v1593 = vadd.f32 %v1592, 1.0
  %v1594 = vrcp.pop %v1593
  %v1595 = vmul.f32 %v1593, %v1594
  %v1596 = vsub.f32 1.0, %v1595
  %v1597 = vmul.f32 %v1594, %v1596
  %v1598 = vadd.f32 %v1594, %v1597
  %vm1599 = vweird.f32 %v1593
  %vm1600 = vweird.f32 %v1594
  %vm1601 = vmor %vm1599, %vm1600
  %v1602 = vsel %vm1601, %v1594, %v1598
  %v1603 = vand.u32 2147483647, %v1593
  %vm1604 = vcmp.eq.f32.partialorder %v1603, 8.507059e+37
  %v1605 = vand.u32 %v1593, 2147483648
  %v1606 = vor.u32 1.1754944e-38, %v1605
  %v1607 = vsel %vm1604, %v1606, %v1602
  %v1608 = vmul.f32 1.0, %v1607
  %v1609 = vtanh.pop %v1589
  %v1610 = vmul.f32 %v1608, %v1579
  %v1612 = vrot.slane %v1609, 2
  %v1614 = vmul.f32 %v1608, %v1612
  %v1616 = vrot.slane %v1614, 7
  %v1618 = vadd.f32 %v1610, %v1616
  %v1619 = vtanh.pop %v1618
  %v1621 = vrot.slane %v1619, 6
  %v1623 = vmul.f32 %v1608, %v1621
  %v1624 = vmul.f32 %v1537, %v1340
  %v1625 = vperm.slane %v1623, 3
  %v1626 = vmul.f32 %v1542, %v1625
  %v1627 = vadd.f32 %v1624, %v1626
  %v1628 = vadd.f32 %v1627, %v1548
  %v1629 = vxor.u32 %v1628, 2147483648
  %v1630 = vmul.f32 %v1629, 1.442695
  %v1631 = vpow.pop %v1630
  %v1632 = vadd.f32 %v1631, 1.0
  %v1633 = vrcp.pop %v1632
  %v1634 = vmul.f32 %v1632, %v1633
  %v1635 = vsub.f32 1.0, %v1634
  %v1636 = vmul.f32 %v1633, %v1635
  %v1637 = vadd.f32 %v1633, %v1636
  %vm1638 = vweird.f32 %v1632
  %vm1639 = vweird.f32 %v1633
  %vm1640 = vmor %vm1638, %vm1639
  %v1641 = vsel %vm1640, %v1633, %v1637
  %v1642 = vand.u32 2147483647, %v1632
  %vm1643 = vcmp.eq.f32.partialorder %v1642, 8.507059e+37
  %v1644 = vand.u32 %v1632, 2147483648
  %v1645 = vor.u32 1.1754944e-38, %v1644
  %v1646 = vsel %vm1643, %v1645, %v1641
  %v1647 = vmul.f32 1.0, %v1646
  %v1648 = vtanh.pop %v1628
  %v1649 = vmul.f32 %v1647, %v1618
  %v1651 = vrot.slane %v1648, 2
  %v1653 = vmul.f32 %v1647, %v1651
  %v1655 = vrot.slane %v1653, 7
  %v1657 = vadd.f32 %v1649, %v1655
  %v1658 = vtanh.pop %v1657
  %v1660 = vrot.slane %v1658, 6
  %v1662 = vmul.f32 %v1647, %v1660
  %v1663 = vmul.f32 %v1537, %v1379
  %v1664 = vperm.slane %v1662, 3
  %v1665 = vmul.f32 %v1542, %v1664
  %v1666 = vadd.f32 %v1663, %v1665
  %v1667 = vadd.f32 %v1666, %v1548
  %v1668 = vxor.u32 %v1667, 2147483648
  %v1669 = vmul.f32 %v1668, 1.442695
  %v1670 = vpow.pop %v1669
  %v1671 = vadd.f32 %v1670, 1.0
  %v1672 = vrcp.pop %v1671
  %v1673 = vmul.f32 %v1671, %v1672
  %v1674 = vsub.f32 1.0, %v1673
  %v1675 = vmul.f32 %v1672, %v1674
  %v1676 = vadd.f32 %v1672, %v1675
  %vm1677 = vweird.f32 %v1671
  %vm1678 = vweird.f32 %v1672
  %vm1679 = vmor %vm1677, %vm1678
  %v1680 = vsel %vm1679, %v1672, %v1676
  %v1681 = vand.u32 2147483647, %v1671
  %vm1682 = vcmp.eq.f32.partialorder %v1681, 8.507059e+37
  %v1683 = vand.u32 %v1671, 2147483648
  %v1684 = vor.u32 1.1754944e-38, %v1683
  %v1685 = vsel %vm1682, %v1684, %v1680
  %v1686 = vmul.f32 1.0, %v1685
  %v1687 = vtanh.pop %v1667
  %v1688 = vmul.f32 %v1686, %v1657
  %v1690 = vrot.slane %v1687, 2
  %v1692 = vmul.f32 %v1686, %v1690
  %v1694 = vrot.slane %v1692, 7
  %v1696 = vadd.f32 %v1688, %v1694
  %v1697 = vtanh.pop %v1696
  %v1699 = vrot.slane %v1697, 6
  %v1701 = vmul.f32 %v1686, %v1699
  %v1702 = vmul.f32 %v1537, %v1418
  %v1703 = vperm.slane %v1701, 3
  %v1704 = vmul.f32 %v1542, %v1703
  %v1705 = vadd.f32 %v1702, %v1704
  %v1706 = vadd.f32 %v1705, %v1548
  %v1707 = vxor.u32 %v1706, 2147483648
  %v1708 = vmul.f32 %v1707, 1.442695
  %v1709 = vpow.pop %v1708
  %v1710 = vadd.f32 %v1709, 1.0
  %v1711 = vrcp.pop %v1710
  %v1712 = vmul.f32 %v1710, %v1711
  %v1713 = vsub.f32 1.0, %v1712
  %v1714 = vmul.f32 %v1711, %v1713
  %v1715 = vadd.f32 %v1711, %v1714
  %vm1716 = vweird.f32 %v1710
  %vm1717 = vweird.f32 %v1711
  %vm1718 = vmor %vm1716, %vm1717
  %v1719 = vsel %vm1718, %v1711, %v1715
  %v1720 = vand.u32 2147483647, %v1710
  %vm1721 = vcmp.eq.f32.partialorder %v1720, 8.507059e+37
  %v1722 = vand.u32 %v1710, 2147483648
  %v1723 = vor.u32 1.1754944e-38, %v1722
  %v1724 = vsel %vm1721, %v1723, %v1719
  %v1725 = vmul.f32 1.0, %v1724
  %v1726 = vtanh.pop %v1706
  %v1727 = vmul.f32 %v1725, %v1696
  %v1729 = vrot.slane %v1726, 2
  %v1731 = vmul.f32 %v1725, %v1729
  %v1733 = vrot.slane %v1731, 7
  %v1735 = vadd.f32 %v1727, %v1733
  %v1736 = vtanh.pop %v1735
  %v1738 = vrot.slane %v1736, 6
  %v1740 = vmul.f32 %v1725, %v1738
  %v1741 = vmul.f32 %v1537, %v1457
  %v1742 = vperm.slane %v1740, 3
  %v1743 = vmul.f32 %v1542, %v1742
  %v1744 = vadd.f32 %v1741, %v1743
  %v1745 = vadd.f32 %v1744, %v1548
  %v1746 = vxor.u32 %v1745, 2147483648
  %v1747 = vmul.f32 %v1746, 1.442695
  %v1748 = vpow.pop %v1747
  %v1749 = vadd.f32 %v1748, 1.0
  %v1750 = vrcp.pop %v1749
  %v1751 = vmul.f32 %v1749, %v1750
  %v1752 = vsub.f32 1.0, %v1751
  %v1753 = vmul.f32 %v1750, %v1752
  %v1754 = vadd.f32 %v1750, %v1753
  %vm1755 = vweird.f32 %v1749
  %vm1756 = vweird.f32 %v1750
  %vm1757 = vmor %vm1755, %vm1756
  %v1758 = vsel %vm1757, %v1750, %v1754
  %v1759 = vand.u32 2147483647, %v1749
  %vm1760 = vcmp.eq.f32.partialorder %v1759, 8.507059e+37
  %v1761 = vand.u32 %v1749, 2147483648
  %v1762 = vor.u32 1.1754944e-38, %v1761
  %v1763 = vsel %vm1760, %v1762, %v1758
  %v1764 = vmul.f32 1.0, %v1763
  %v1765 = vtanh.pop %v1745
  %v1766 = vmul.f32 %v1764, %v1735
  %v1768 = vrot.slane %v1765, 2
  %v1770 = vmul.f32 %v1764, %v1768
  %v1772 = vrot.slane %v1770, 7
  %v1774 = vadd.f32 %v1766, %v1772
  %v1775 = vtanh.pop %v1774
  %v1777 = vrot.slane %v1775, 6
  %v1779 = vmul.f32 %v1764, %v1777
  %v1780 = vmul.f32 %v1537, %v1497
  %v1781 = vperm.slane %v1779, 3
  %v1782 = vmul.f32 %v1542, %v1781
  %v1783 = vadd.f32 %v1780, %v1782
  %v1784 = vadd.f32 %v1783, %v1548
  %v1785 = vxor.u32 %v1784, 2147483648
  %v1786 = vmul.f32 %v1785, 1.442695
  %v1787 = vpow.pop %v1786
  %v1788 = vadd.f32 %v1787, 1.0
  %v1789 = vrcp.pop %v1788
  %v1790 = vmul.f32 %v1788, %v1789
  %v1791 = vsub.f32 1.0, %v1790
  %v1792 = vmul.f32 %v1789, %v1791
  %v1793 = vadd.f32 %v1789, %v1792
  %vm1794 = vweird.f32 %v1788
  %vm1795 = vweird.f32 %v1789
  %vm1796 = vmor %vm1794, %vm1795
  %v1797 = vsel %vm1796, %v1789, %v1793
  %v1798 = vand.u32 2147483647, %v1788
  %vm1799 = vcmp.eq.f32.partialorder %v1798, 8.507059e+37
  %v1800 = vand.u32 %v1788, 2147483648
  %v1801 = vor.u32 1.1754944e-38, %v1800
  %v1802 = vsel %vm1799, %v1801, %v1797
  %v1803 = vmul.f32 1.0, %v1802
  %v1804 = vtanh.pop %v1784
  %v1805 = vmul.f32 %v1803, %v1774
  %v1807 = vrot.slane %v1804, 2
  %v1809 = vmul.f32 %v1803, %v1807
  %v1811 = vrot.slane %v1809, 7
  %v1813 = vadd.f32 %v1805, %v1811
  %v1814 = vtanh.pop %v1813
  %v1816 = vrot.slane %v1814, 6
  %v1818 = vmul.f32 %v1803, %v1816
  %v1819 = vperm.slane %v1534, 3
  %v1820 = vmul.f32 %v1537, %v1819
  %v1821 = vperm.slane %v1818, 3
  %v1822 = vmul.f32 %v1542, %v1821
  %v1823 = vadd.f32 %v1820, %v1822
  %v1824 = vadd.f32 %v1823, %v1548
  %v1825 = vxor.u32 %v1824, 2147483648
  %v1826 = vmul.f32 %v1825, 1.442695
  %v1827 = vpow.pop %v1826
  %v1828 = vadd.f32 %v1827, 1.0
  %v1829 = vrcp.pop %v1828
  %v1830 = vmul.f32 %v1828, %v1829
  %v1831 = vsub.f32 1.0, %v1830
  %v1832 = vmul.f32 %v1829, %v1831
  %v1833 = vadd.f32 %v1829, %v1832
  %vm1834 = vweird.f32 %v1828
  %vm1835 = vweird.f32 %v1829
  %vm1836 = vmor %vm1834, %vm1835
  %v1837 = vsel %vm1836, %v1829, %v1833
  %v1838 = vand.u32 2147483647, %v1828
  %vm1839 = vcmp.eq.f32.partialorder %v1838, 8.507059e+37
  %v1840 = vand.u32 %v1828, 2147483648
  %v1841 = vor.u32 1.1754944e-38, %v1840
  %v1842 = vsel %vm1839, %v1841, %v1837
  %v1843 = vmul.f32 1.0, %v1842
  %v1844 = vtanh.pop %v1824
  %v1845 = vmul.f32 %v1843, %v1813
  %v1847 = vrot.slane %v1844, 2
  %v1849 = vmul.f32 %v1843, %v1847
  %v1851 = vrot.slane %v1849, 7
  %v1853 = vadd.f32 %v1845, %v1851
  %v1854 = vtanh.pop %v1853
  %v1856 = vrot.slane %v1854, 6
  %v1858 = vmul.f32 %v1843, %v1856
  %1859 = vset.pattern.permute.xlu0 4
  %1860 = vperm.xlu0 %1859, %v29
  %v1861 = vpop.permute.xlu0 %1860
  %v1863 = vmul.f32 %v1861, %v1586
  %1864 = vset.pattern.permute.xlu0 5
  %1865 = vperm.xlu0 %1864, %v30
  %v1866 = vpop.permute.xlu0 %1865
  %v1868 = vmul.f32 %v1866, 0.0
  %v1869 = vadd.f32 %v1863, %v1868
  %1870 = vset.pattern.permute.xlu0 5
  %1871 = vperm.xlu0 %1870, %v31
  %v1872 = vpop.permute.xlu0 %1871
  %v1874 = vadd.f32 %v1869, %v1872
  %v1875 = vxor.u32 %v1874, 2147483648
  %v1876 = vmul.f32 %v1875, 1.442695
  %v1877 = vpow.pop %v1876
  %v1878 = vadd.f32 %v1877, 1.0
  %v1879 = vrcp.pop %v1878
  %v1880 = vmul.f32 %v1878, %v1879
  %v1881 = vsub.f32 1.0, %v1880
  %v1882 = vmul.f32 %v1879, %v1881
  %v1883 = vadd.f32 %v1879, %v1882
  %vm1884 = vweird.f32 %v1878
  %vm1885 = vweird.f32 %v1879
  %vm1886 = vmor %vm1884, %vm1885
  %v1887 = vsel %vm1886, %v1879, %v1883
  %v1888 = vand.u32 2147483647, %v1878
  %vm1889 = vcmp.eq.f32.partialorder %v1888, 8.507059e+37
  %v1890 = vand.u32 %v1878, 2147483648
  %v1891 = vor.u32 1.1754944e-38, %v1890
  %v1892 = vsel %vm1889, %v1891, %v1887
  %v1893 = vmul.f32 1.0, %v1892
  %v1894 = vtanh.pop %v1874
  %v1895 = vmul.f32 %v1893, 0.0
  %v1897 = vrot.slane %v1894, 2
  %v1899 = vmul.f32 %v1893, %v1897
  %v1901 = vrot.slane %v1899, 7
  %v1903 = vadd.f32 %v1895, %v1901
  %v1904 = vtanh.pop %v1903
  %v1906 = vrot.slane %v1904, 6
  %v1908 = vmul.f32 %v1893, %v1906
  %v1909 = vmul.f32 %v1861, %v1625
  %v1910 = vperm.slane %v1908, 3
  %v1911 = vmul.f32 %v1866, %v1910
  %v1912 = vadd.f32 %v1909, %v1911
  %v1913 = vadd.f32 %v1912, %v1872
  %v1914 = vxor.u32 %v1913, 2147483648
  %v1915 = vmul.f32 %v1914, 1.442695
  %v1916 = vpow.pop %v1915
  %v1917 = vadd.f32 %v1916, 1.0
  %v1918 = vrcp.pop %v1917
  %v1919 = vmul.f32 %v1917, %v1918
  %v1920 = vsub.f32 1.0, %v1919
  %v1921 = vmul.f32 %v1918, %v1920
  %v1922 = vadd.f32 %v1918, %v1921
  %vm1923 = vweird.f32 %v1917
  %vm1924 = vweird.f32 %v1918
  %vm1925 = vmor %vm1923, %vm1924
  %v1926 = vsel %vm1925, %v1918, %v1922
  %v1927 = vand.u32 2147483647, %v1917
  %vm1928 = vcmp.eq.f32.partialorder %v1927, 8.507059e+37
  %v1929 = vand.u32 %v1917, 2147483648
  %v1930 = vor.u32 1.1754944e-38, %v1929
  %v1931 = vsel %vm1928, %v1930, %v1926
  %v1932 = vmul.f32 1.0, %v1931
  %v1933 = vtanh.pop %v1913
  %v1934 = vmul.f32 %v1932, %v1903
  %v1936 = vrot.slane %v1933, 2
  %v1938 = vmul.f32 %v1932, %v1936
  %v1940 = vrot.slane %v1938, 7
  %v1942 = vadd.f32 %v1934, %v1940
  %v1943 = vtanh.pop %v1942
  %v1945 = vrot.slane %v1943, 6
  %v1947 = vmul.f32 %v1932, %v1945
  %v1948 = vmul.f32 %v1861, %v1664
  %v1949 = vperm.slane %v1947, 3
  %v1950 = vmul.f32 %v1866, %v1949
  %v1951 = vadd.f32 %v1948, %v1950
  %v1952 = vadd.f32 %v1951, %v1872
  %v1953 = vxor.u32 %v1952, 2147483648
  %v1954 = vmul.f32 %v1953, 1.442695
  %v1955 = vpow.pop %v1954
  %v1956 = vadd.f32 %v1955, 1.0
  %v1957 = vrcp.pop %v1956
  %v1958 = vmul.f32 %v1956, %v1957
  %v1959 = vsub.f32 1.0, %v1958
  %v1960 = vmul.f32 %v1957, %v1959
  %v1961 = vadd.f32 %v1957, %v1960
  %vm1962 = vweird.f32 %v1956
  %vm1963 = vweird.f32 %v1957
  %vm1964 = vmor %vm1962, %vm1963
  %v1965 = vsel %vm1964, %v1957, %v1961
  %v1966 = vand.u32 2147483647, %v1956
  %vm1967 = vcmp.eq.f32.partialorder %v1966, 8.507059e+37
  %v1968 = vand.u32 %v1956, 2147483648
  %v1969 = vor.u32 1.1754944e-38, %v1968
  %v1970 = vsel %vm1967, %v1969, %v1965
  %v1971 = vmul.f32 1.0, %v1970
  %v1972 = vtanh.pop %v1952
  %v1973 = vmul.f32 %v1971, %v1942
  %v1975 = vrot.slane %v1972, 2
  %v1977 = vmul.f32 %v1971, %v1975
  %v1979 = vrot.slane %v1977, 7
  %v1981 = vadd.f32 %v1973, %v1979
  %v1982 = vtanh.pop %v1981
  %v1984 = vrot.slane %v1982, 6
  %v1986 = vmul.f32 %v1971, %v1984
  %v1987 = vmul.f32 %v1861, %v1703
  %v1988 = vperm.slane %v1986, 3
  %v1989 = vmul.f32 %v1866, %v1988
  %v1990 = vadd.f32 %v1987, %v1989
  %v1991 = vadd.f32 %v1990, %v1872
  %v1992 = vxor.u32 %v1991, 2147483648
  %v1993 = vmul.f32 %v1992, 1.442695
  %v1994 = vpow.pop %v1993
  %v1995 = vadd.f32 %v1994, 1.0
  %v1996 = vrcp.pop %v1995
  %v1997 = vmul.f32 %v1995, %v1996
  %v1998 = vsub.f32 1.0, %v1997
  %v1999 = vmul.f32 %v1996, %v1998
  %v2000 = vadd.f32 %v1996, %v1999
  %vm2001 = vweird.f32 %v1995
  %vm2002 = vweird.f32 %v1996
  %vm2003 = vmor %vm2001, %vm2002
  %v2004 = vsel %vm2003, %v1996, %v2000
  %v2005 = vand.u32 2147483647, %v1995
  %vm2006 = vcmp.eq.f32.partialorder %v2005, 8.507059e+37
  %v2007 = vand.u32 %v1995, 2147483648
  %v2008 = vor.u32 1.1754944e-38, %v2007
  %v2009 = vsel %vm2006, %v2008, %v2004
  %v2010 = vmul.f32 1.0, %v2009
  %v2011 = vtanh.pop %v1991
  %v2012 = vmul.f32 %v2010, %v1981
  %v2014 = vrot.slane %v2011, 2
  %v2016 = vmul.f32 %v2010, %v2014
  %v2018 = vrot.slane %v2016, 7
  %v2020 = vadd.f32 %v2012, %v2018
  %v2021 = vtanh.pop %v2020
  %v2023 = vrot.slane %v2021, 6
  %v2025 = vmul.f32 %v2010, %v2023
  %v2026 = vmul.f32 %v1861, %v1742
  %v2027 = vperm.slane %v2025, 3
  %v2028 = vmul.f32 %v1866, %v2027
  %v2029 = vadd.f32 %v2026, %v2028
  %v2030 = vadd.f32 %v2029, %v1872
  %v2031 = vxor.u32 %v2030, 2147483648
  %v2032 = vmul.f32 %v2031, 1.442695
  %v2033 = vpow.pop %v2032
  %v2034 = vadd.f32 %v2033, 1.0
  %v2035 = vrcp.pop %v2034
  %v2036 = vmul.f32 %v2034, %v2035
  %v2037 = vsub.f32 1.0, %v2036
  %v2038 = vmul.f32 %v2035, %v2037
  %v2039 = vadd.f32 %v2035, %v2038
  %vm2040 = vweird.f32 %v2034
  %vm2041 = vweird.f32 %v2035
  %vm2042 = vmor %vm2040, %vm2041
  %v2043 = vsel %vm2042, %v2035, %v2039
  %v2044 = vand.u32 2147483647, %v2034
  %vm2045 = vcmp.eq.f32.partialorder %v2044, 8.507059e+37
  %v2046 = vand.u32 %v2034, 2147483648
  %v2047 = vor.u32 1.1754944e-38, %v2046
  %v2048 = vsel %vm2045, %v2047, %v2043
  %v2049 = vmul.f32 1.0, %v2048
  %v2050 = vtanh.pop %v2030
  %v2051 = vmul.f32 %v2049, %v2020
  %v2053 = vrot.slane %v2050, 2
  %v2055 = vmul.f32 %v2049, %v2053
  %v2057 = vrot.slane %v2055, 7
  %v2059 = vadd.f32 %v2051, %v2057
  %v2060 = vtanh.pop %v2059
  %v2062 = vrot.slane %v2060, 6
  %v2064 = vmul.f32 %v2049, %v2062
  %v2065 = vmul.f32 %v1861, %v1781
  %v2066 = vperm.slane %v2064, 3
  %v2067 = vmul.f32 %v1866, %v2066
  %v2068 = vadd.f32 %v2065, %v2067
  %v2069 = vadd.f32 %v2068, %v1872
  %v2070 = vxor.u32 %v2069, 2147483648
  %v2071 = vmul.f32 %v2070, 1.442695
  %v2072 = vpow.pop %v2071
  %v2073 = vadd.f32 %v2072, 1.0
  %v2074 = vrcp.pop %v2073
  %v2075 = vmul.f32 %v2073, %v2074
  %v2076 = vsub.f32 1.0, %v2075
  %v2077 = vmul.f32 %v2074, %v2076
  %v2078 = vadd.f32 %v2074, %v2077
  %vm2079 = vweird.f32 %v2073
  %vm2080 = vweird.f32 %v2074
  %vm2081 = vmor %vm2079, %vm2080
  %v2082 = vsel %vm2081, %v2074, %v2078
  %v2083 = vand.u32 2147483647, %v2073
  %vm2084 = vcmp.eq.f32.partialorder %v2083, 8.507059e+37
  %v2085 = vand.u32 %v2073, 2147483648
  %v2086 = vor.u32 1.1754944e-38, %v2085
  %v2087 = vsel %vm2084, %v2086, %v2082
  %v2088 = vmul.f32 1.0, %v2087
  %v2089 = vtanh.pop %v2069
  %v2090 = vmul.f32 %v2088, %v2059
  %v2092 = vrot.slane %v2089, 2
  %v2094 = vmul.f32 %v2088, %v2092
  %v2096 = vrot.slane %v2094, 7
  %v2098 = vadd.f32 %v2090, %v2096
  %v2099 = vtanh.pop %v2098
  %v2101 = vrot.slane %v2099, 6
  %v2103 = vmul.f32 %v2088, %v2101
  %v2104 = vmul.f32 %v1861, %v1821
  %v2105 = vperm.slane %v2103, 3
  %v2106 = vmul.f32 %v1866, %v2105
  %v2107 = vadd.f32 %v2104, %v2106
  %v2108 = vadd.f32 %v2107, %v1872
  %v2109 = vxor.u32 %v2108, 2147483648
  %v2110 = vmul.f32 %v2109, 1.442695
  %v2111 = vpow.pop %v2110
  %v2112 = vadd.f32 %v2111, 1.0
  %v2113 = vrcp.pop %v2112
  %v2114 = vmul.f32 %v2112, %v2113
  %v2115 = vsub.f32 1.0, %v2114
  %v2116 = vmul.f32 %v2113, %v2115
  %v2117 = vadd.f32 %v2113, %v2116
  %vm2118 = vweird.f32 %v2112
  %vm2119 = vweird.f32 %v2113
  %vm2120 = vmor %vm2118, %vm2119
  %v2121 = vsel %vm2120, %v2113, %v2117
  %v2122 = vand.u32 2147483647, %v2112
  %vm2123 = vcmp.eq.f32.partialorder %v2122, 8.507059e+37
  %v2124 = vand.u32 %v2112, 2147483648
  %v2125 = vor.u32 1.1754944e-38, %v2124
  %v2126 = vsel %vm2123, %v2125, %v2121
  %v2127 = vmul.f32 1.0, %v2126
  %v2128 = vtanh.pop %v2108
  %v2129 = vmul.f32 %v2127, %v2098
  %v2131 = vrot.slane %v2128, 2
  %v2133 = vmul.f32 %v2127, %v2131
  %v2135 = vrot.slane %v2133, 7
  %v2137 = vadd.f32 %v2129, %v2135
  %v2138 = vtanh.pop %v2137
  %v2140 = vrot.slane %v2138, 6
  %v2142 = vmul.f32 %v2127, %v2140
  %v2143 = vperm.slane %v1858, 3
  %v2144 = vmul.f32 %v1861, %v2143
  %v2145 = vperm.slane %v2142, 3
  %v2146 = vmul.f32 %v1866, %v2145
  %v2147 = vadd.f32 %v2144, %v2146
  %v2148 = vadd.f32 %v2147, %v1872
  %v2149 = vxor.u32 %v2148, 2147483648
  %v2150 = vmul.f32 %v2149, 1.442695
  %v2151 = vpow.pop %v2150
  %v2152 = vadd.f32 %v2151, 1.0
  %v2153 = vrcp.pop %v2152
  %v2154 = vmul.f32 %v2152, %v2153
  %v2155 = vsub.f32 1.0, %v2154
  %v2156 = vmul.f32 %v2153, %v2155
  %v2157 = vadd.f32 %v2153, %v2156
  %vm2158 = vweird.f32 %v2152
  %vm2159 = vweird.f32 %v2153
  %vm2160 = vmor %vm2158, %vm2159
  %v2161 = vsel %vm2160, %v2153, %v2157
  %v2162 = vand.u32 2147483647, %v2152
  %vm2163 = vcmp.eq.f32.partialorder %v2162, 8.507059e+37
  %v2164 = vand.u32 %v2152, 2147483648
  %v2165 = vor.u32 1.1754944e-38, %v2164
  %v2166 = vsel %vm2163, %v2165, %v2161
  %v2167 = vmul.f32 1.0, %v2166
  %v2168 = vtanh.pop %v2148
  %v2169 = vmul.f32 %v2167, %v2137
  %v2171 = vrot.slane %v2168, 2
  %v2173 = vmul.f32 %v2167, %v2171
  %v2175 = vrot.slane %v2173, 7
  %v2177 = vadd.f32 %v2169, %v2175
  %v2178 = vtanh.pop %v2177
  %v2180 = vrot.slane %v2178, 6
  %v2182 = vmul.f32 %v2167, %v2180
  %2183 = vset.pattern.permute.xlu0 5
  %2184 = vperm.xlu0 %2183, %v29
  %v2185 = vpop.permute.xlu0 %2184
  %v2187 = vmul.f32 %v2185, %v1910
  %2188 = vset.pattern.permute.xlu0 6
  %2189 = vperm.xlu0 %2188, %v30
  %v2190 = vpop.permute.xlu0 %2189
  %v2192 = vmul.f32 %v2190, 0.0
  %v2193 = vadd.f32 %v2187, %v2192
  %2194 = vset.pattern.permute.xlu0 6
  %2195 = vperm.xlu0 %2194, %v31
  %v2196 = vpop.permute.xlu0 %2195
  %v2198 = vadd.f32 %v2193, %v2196
  %v2199 = vxor.u32 %v2198, 2147483648
  %v2200 = vmul.f32 %v2199, 1.442695
  %v2201 = vpow.pop %v2200
  %v2202 = vadd.f32 %v2201, 1.0
  %v2203 = vrcp.pop %v2202
  %v2204 = vmul.f32 %v2202, %v2203
  %v2205 = vsub.f32 1.0, %v2204
  %v2206 = vmul.f32 %v2203, %v2205
  %v2207 = vadd.f32 %v2203, %v2206
  %vm2208 = vweird.f32 %v2202
  %vm2209 = vweird.f32 %v2203
  %vm2210 = vmor %vm2208, %vm2209
  %v2211 = vsel %vm2210, %v2203, %v2207
  %v2212 = vand.u32 2147483647, %v2202
  %vm2213 = vcmp.eq.f32.partialorder %v2212, 8.507059e+37
  %v2214 = vand.u32 %v2202, 2147483648
  %v2215 = vor.u32 1.1754944e-38, %v2214
  %v2216 = vsel %vm2213, %v2215, %v2211
  %v2217 = vmul.f32 1.0, %v2216
  %v2218 = vtanh.pop %v2198
  %v2219 = vmul.f32 %v2217, 0.0
  %v2221 = vrot.slane %v2218, 2
  %v2223 = vmul.f32 %v2217, %v2221
  %v2225 = vrot.slane %v2223, 7
  %v2227 = vadd.f32 %v2219, %v2225
  %v2228 = vtanh.pop %v2227
  %v2230 = vrot.slane %v2228, 6
  %v2232 = vmul.f32 %v2217, %v2230
  %v2233 = vmul.f32 %v2185, %v1949
  %v2234 = vperm.slane %v2232, 3
  %v2235 = vmul.f32 %v2190, %v2234
  %v2236 = vadd.f32 %v2233, %v2235
  %v2237 = vadd.f32 %v2236, %v2196
  %v2238 = vxor.u32 %v2237, 2147483648
  %v2239 = vmul.f32 %v2238, 1.442695
  %v2240 = vpow.pop %v2239
  %v2241 = vadd.f32 %v2240, 1.0
  %v2242 = vrcp.pop %v2241
  %v2243 = vmul.f32 %v2241, %v2242
  %v2244 = vsub.f32 1.0, %v2243
  %v2245 = vmul.f32 %v2242, %v2244
  %v2246 = vadd.f32 %v2242, %v2245
  %vm2247 = vweird.f32 %v2241
  %vm2248 = vweird.f32 %v2242
  %vm2249 = vmor %vm2247, %vm2248
  %v2250 = vsel %vm2249, %v2242, %v2246
  %v2251 = vand.u32 2147483647, %v2241
  %vm2252 = vcmp.eq.f32.partialorder %v2251, 8.507059e+37
  %v2253 = vand.u32 %v2241, 2147483648
  %v2254 = vor.u32 1.1754944e-38, %v2253
  %v2255 = vsel %vm2252, %v2254, %v2250
  %v2256 = vmul.f32 1.0, %v2255
  %v2257 = vtanh.pop %v2237
  %v2258 = vmul.f32 %v2256, %v2227
  %v2260 = vrot.slane %v2257, 2
  %v2262 = vmul.f32 %v2256, %v2260
  %v2264 = vrot.slane %v2262, 7
  %v2266 = vadd.f32 %v2258, %v2264
  %v2267 = vtanh.pop %v2266
  %v2269 = vrot.slane %v2267, 6
  %v2271 = vmul.f32 %v2256, %v2269
  %v2272 = vmul.f32 %v2185, %v1988
  %v2273 = vperm.slane %v2271, 3
  %v2274 = vmul.f32 %v2190, %v2273
  %v2275 = vadd.f32 %v2272, %v2274
  %v2276 = vadd.f32 %v2275, %v2196
  %v2277 = vxor.u32 %v2276, 2147483648
  %v2278 = vmul.f32 %v2277, 1.442695
  %v2279 = vpow.pop %v2278
  %v2280 = vadd.f32 %v2279, 1.0
  %v2281 = vrcp.pop %v2280
  %v2282 = vmul.f32 %v2280, %v2281
  %v2283 = vsub.f32 1.0, %v2282
  %v2284 = vmul.f32 %v2281, %v2283
  %v2285 = vadd.f32 %v2281, %v2284
  %vm2286 = vweird.f32 %v2280
  %vm2287 = vweird.f32 %v2281
  %vm2288 = vmor %vm2286, %vm2287
  %v2289 = vsel %vm2288, %v2281, %v2285
  %v2290 = vand.u32 2147483647, %v2280
  %vm2291 = vcmp.eq.f32.partialorder %v2290, 8.507059e+37
  %v2292 = vand.u32 %v2280, 2147483648
  %v2293 = vor.u32 1.1754944e-38, %v2292
  %v2294 = vsel %vm2291, %v2293, %v2289
  %v2295 = vmul.f32 1.0, %v2294
  %v2296 = vtanh.pop %v2276
  %v2297 = vmul.f32 %v2295, %v2266
  %v2299 = vrot.slane %v2296, 2
  %v2301 = vmul.f32 %v2295, %v2299
  %v2303 = vrot.slane %v2301, 7
  %v2305 = vadd.f32 %v2297, %v2303
  %v2306 = vtanh.pop %v2305
  %v2308 = vrot.slane %v2306, 6
  %v2310 = vmul.f32 %v2295, %v2308
  %v2311 = vmul.f32 %v2185, %v2027
  %v2312 = vperm.slane %v2310, 3
  %v2313 = vmul.f32 %v2190, %v2312
  %v2314 = vadd.f32 %v2311, %v2313
  %v2315 = vadd.f32 %v2314, %v2196
  %v2316 = vxor.u32 %v2315, 2147483648
  %v2317 = vmul.f32 %v2316, 1.442695
  %v2318 = vpow.pop %v2317
  %v2319 = vadd.f32 %v2318, 1.0
  %v2320 = vrcp.pop %v2319
  %v2321 = vmul.f32 %v2319, %v2320
  %v2322 = vsub.f32 1.0, %v2321
  %v2323 = vmul.f32 %v2320, %v2322
  %v2324 = vadd.f32 %v2320, %v2323
  %vm2325 = vweird.f32 %v2319
  %vm2326 = vweird.f32 %v2320
  %vm2327 = vmor %vm2325, %vm2326
  %v2328 = vsel %vm2327, %v2320, %v2324
  %v2329 = vand.u32 2147483647, %v2319
  %vm2330 = vcmp.eq.f32.partialorder %v2329, 8.507059e+37
  %v2331 = vand.u32 %v2319, 2147483648
  %v2332 = vor.u32 1.1754944e-38, %v2331
  %v2333 = vsel %vm2330, %v2332, %v2328
  %v2334 = vmul.f32 1.0, %v2333
  %v2335 = vtanh.pop %v2315
  %v2336 = vmul.f32 %v2334, %v2305
  %v2338 = vrot.slane %v2335, 2
  %v2340 = vmul.f32 %v2334, %v2338
  %v2342 = vrot.slane %v2340, 7
  %v2344 = vadd.f32 %v2336, %v2342
  %v2345 = vtanh.pop %v2344
  %v2347 = vrot.slane %v2345, 6
  %v2349 = vmul.f32 %v2334, %v2347
  %v2350 = vmul.f32 %v2185, %v2066
  %v2351 = vperm.slane %v2349, 3
  %v2352 = vmul.f32 %v2190, %v2351
  %v2353 = vadd.f32 %v2350, %v2352
  %v2354 = vadd.f32 %v2353, %v2196
  %v2355 = vxor.u32 %v2354, 2147483648
  %v2356 = vmul.f32 %v2355, 1.442695
  %v2357 = vpow.pop %v2356
  %v2358 = vadd.f32 %v2357, 1.0
  %v2359 = vrcp.pop %v2358
  %v2360 = vmul.f32 %v2358, %v2359
  %v2361 = vsub.f32 1.0, %v2360
  %v2362 = vmul.f32 %v2359, %v2361
  %v2363 = vadd.f32 %v2359, %v2362
  %vm2364 = vweird.f32 %v2358
  %vm2365 = vweird.f32 %v2359
  %vm2366 = vmor %vm2364, %vm2365
  %v2367 = vsel %vm2366, %v2359, %v2363
  %v2368 = vand.u32 2147483647, %v2358
  %vm2369 = vcmp.eq.f32.partialorder %v2368, 8.507059e+37
  %v2370 = vand.u32 %v2358, 2147483648
  %v2371 = vor.u32 1.1754944e-38, %v2370
  %v2372 = vsel %vm2369, %v2371, %v2367
  %v2373 = vmul.f32 1.0, %v2372
  %v2374 = vtanh.pop %v2354
  %v2375 = vmul.f32 %v2373, %v2344
  %v2377 = vrot.slane %v2374, 2
  %v2379 = vmul.f32 %v2373, %v2377
  %v2381 = vrot.slane %v2379, 7
  %v2383 = vadd.f32 %v2375, %v2381
  %v2384 = vtanh.pop %v2383
  %v2386 = vrot.slane %v2384, 6
  %v2388 = vmul.f32 %v2373, %v2386
  %v2389 = vmul.f32 %v2185, %v2105
  %v2390 = vperm.slane %v2388, 3
  %v2391 = vmul.f32 %v2190, %v2390
  %v2392 = vadd.f32 %v2389, %v2391
  %v2393 = vadd.f32 %v2392, %v2196
  %v2394 = vxor.u32 %v2393, 2147483648
  %v2395 = vmul.f32 %v2394, 1.442695
  %v2396 = vpow.pop %v2395
  %v2397 = vadd.f32 %v2396, 1.0
  %v2398 = vrcp.pop %v2397
  %v2399 = vmul.f32 %v2397, %v2398
  %v2400 = vsub.f32 1.0, %v2399
  %v2401 = vmul.f32 %v2398, %v2400
  %v2402 = vadd.f32 %v2398, %v2401
  %vm2403 = vweird.f32 %v2397
  %vm2404 = vweird.f32 %v2398
  %vm2405 = vmor %vm2403, %vm2404
  %v2406 = vsel %vm2405, %v2398, %v2402
  %v2407 = vand.u32 2147483647, %v2397
  %vm2408 = vcmp.eq.f32.partialorder %v2407, 8.507059e+37
  %v2409 = vand.u32 %v2397, 2147483648
  %v2410 = vor.u32 1.1754944e-38, %v2409
  %v2411 = vsel %vm2408, %v2410, %v2406
  %v2412 = vmul.f32 1.0, %v2411
  %v2413 = vtanh.pop %v2393
  %v2414 = vmul.f32 %v2412, %v2383
  %v2416 = vrot.slane %v2413, 2
  %v2418 = vmul.f32 %v2412, %v2416
  %v2420 = vrot.slane %v2418, 7
  %v2422 = vadd.f32 %v2414, %v2420
  %v2423 = vtanh.pop %v2422
  %v2425 = vrot.slane %v2423, 6
  %v2427 = vmul.f32 %v2412, %v2425
  %v2428 = vmul.f32 %v2185, %v2145
  %v2429 = vperm.slane %v2427, 3
  %v2430 = vmul.f32 %v2190, %v2429
  %v2431 = vadd.f32 %v2428, %v2430
  %v2432 = vadd.f32 %v2431, %v2196
  %v2433 = vxor.u32 %v2432, 2147483648
  %v2434 = vmul.f32 %v2433, 1.442695
  %v2435 = vpow.pop %v2434
  %v2436 = vadd.f32 %v2435, 1.0
  %v2437 = vrcp.pop %v2436
  %v2438 = vmul.f32 %v2436, %v2437
  %v2439 = vsub.f32 1.0, %v2438
  %v2440 = vmul.f32 %v2437, %v2439
  %v2441 = vadd.f32 %v2437, %v2440
  %vm2442 = vweird.f32 %v2436
  %vm2443 = vweird.f32 %v2437
  %vm2444 = vmor %vm2442, %vm2443
  %v2445 = vsel %vm2444, %v2437, %v2441
  %v2446 = vand.u32 2147483647, %v2436
  %vm2447 = vcmp.eq.f32.partialorder %v2446, 8.507059e+37
  %v2448 = vand.u32 %v2436, 2147483648
  %v2449 = vor.u32 1.1754944e-38, %v2448
  %v2450 = vsel %vm2447, %v2449, %v2445
  %v2451 = vmul.f32 1.0, %v2450
  %v2452 = vtanh.pop %v2432
  %v2453 = vmul.f32 %v2451, %v2422
  %v2455 = vrot.slane %v2452, 2
  %v2457 = vmul.f32 %v2451, %v2455
  %v2459 = vrot.slane %v2457, 7
  %v2461 = vadd.f32 %v2453, %v2459
  %v2462 = vtanh.pop %v2461
  %v2464 = vrot.slane %v2462, 6
  %v2466 = vmul.f32 %v2451, %v2464
  %v2467 = vperm.slane %v2182, 3
  %v2468 = vmul.f32 %v2185, %v2467
  %v2469 = vperm.slane %v2466, 3
  %v2470 = vmul.f32 %v2190, %v2469
  %v2471 = vadd.f32 %v2468, %v2470
  %v2472 = vadd.f32 %v2471, %v2196
  %v2473 = vxor.u32 %v2472, 2147483648
  %v2474 = vmul.f32 %v2473, 1.442695
  %v2475 = vpow.pop %v2474
  %v2476 = vadd.f32 %v2475, 1.0
  %v2477 = vrcp.pop %v2476
  %v2478 = vmul.f32 %v2476, %v2477
  %v2479 = vsub.f32 1.0, %v2478
  %v2480 = vmul.f32 %v2477, %v2479
  %v2481 = vadd.f32 %v2477, %v2480
  %vm2482 = vweird.f32 %v2476
  %vm2483 = vweird.f32 %v2477
  %vm2484 = vmor %vm2482, %vm2483
  %v2485 = vsel %vm2484, %v2477, %v2481
  %v2486 = vand.u32 2147483647, %v2476
  %vm2487 = vcmp.eq.f32.partialorder %v2486, 8.507059e+37
  %v2488 = vand.u32 %v2476, 2147483648
  %v2489 = vor.u32 1.1754944e-38, %v2488
  %v2490 = vsel %vm2487, %v2489, %v2485
  %v2491 = vmul.f32 1.0, %v2490
  %v2492 = vtanh.pop %v2472
  %v2493 = vmul.f32 %v2491, %v2461
  %v2495 = vrot.slane %v2492, 2
  %v2497 = vmul.f32 %v2491, %v2495
  %v2499 = vrot.slane %v2497, 7
  %v2501 = vadd.f32 %v2493, %v2499
  %v2502 = vtanh.pop %v2501
  %v2504 = vrot.slane %v2502, 6
  %v2506 = vmul.f32 %v2491, %v2504
  %2507 = vset.pattern.permute.xlu0 6
  %2508 = vperm.xlu0 %2507, %v29
  %v2509 = vpop.permute.xlu0 %2508
  %v2511 = vmul.f32 %v2509, %v2234
  %2512 = vset.pattern.permute.xlu0 7
  %2513 = vperm.xlu0 %2512, %v30
  %v2514 = vpop.permute.xlu0 %2513
  %v2516 = vmul.f32 %v2514, 0.0
  %v2517 = vadd.f32 %v2511, %v2516
  %2518 = vset.pattern.permute.xlu0 7
  %2519 = vperm.xlu0 %2518, %v31
  %v2520 = vpop.permute.xlu0 %2519
  %v2522 = vadd.f32 %v2517, %v2520
  %v2523 = vxor.u32 %v2522, 2147483648
  %v2524 = vmul.f32 %v2523, 1.442695
  %v2525 = vpow.pop %v2524
  %v2526 = vadd.f32 %v2525, 1.0
  %v2527 = vrcp.pop %v2526
  %v2528 = vmul.f32 %v2526, %v2527
  %v2529 = vsub.f32 1.0, %v2528
  %v2530 = vmul.f32 %v2527, %v2529
  %v2531 = vadd.f32 %v2527, %v2530
  %vm2532 = vweird.f32 %v2526
  %vm2533 = vweird.f32 %v2527
  %vm2534 = vmor %vm2532, %vm2533
  %v2535 = vsel %vm2534, %v2527, %v2531
  %v2536 = vand.u32 2147483647, %v2526
  %vm2537 = vcmp.eq.f32.partialorder %v2536, 8.507059e+37
  %v2538 = vand.u32 %v2526, 2147483648
  %v2539 = vor.u32 1.1754944e-38, %v2538
  %v2540 = vsel %vm2537, %v2539, %v2535
  %v2541 = vmul.f32 1.0, %v2540
  %v2542 = vtanh.pop %v2522
  %v2543 = vmul.f32 %v2541, 0.0
  %v2545 = vrot.slane %v2542, 2
  %v2547 = vmul.f32 %v2541, %v2545
  %v2549 = vrot.slane %v2547, 7
  %v2551 = vadd.f32 %v2543, %v2549
  %v2552 = vtanh.pop %v2551
  %v2554 = vrot.slane %v2552, 6
  %v2556 = vmul.f32 %v2541, %v2554
  %v2557 = vmul.f32 %v2509, %v2273
  %v2558 = vperm.slane %v2556, 3
  %v2559 = vmul.f32 %v2514, %v2558
  %v2560 = vadd.f32 %v2557, %v2559
  %v2561 = vadd.f32 %v2560, %v2520
  %v2562 = vxor.u32 %v2561, 2147483648
  %v2563 = vmul.f32 %v2562, 1.442695
  %v2564 = vpow.pop %v2563
  %v2565 = vadd.f32 %v2564, 1.0
  %v2566 = vrcp.pop %v2565
  %v2567 = vmul.f32 %v2565, %v2566
  %v2568 = vsub.f32 1.0, %v2567
  %v2569 = vmul.f32 %v2566, %v2568
  %v2570 = vadd.f32 %v2566, %v2569
  %vm2571 = vweird.f32 %v2565
  %vm2572 = vweird.f32 %v2566
  %vm2573 = vmor %vm2571, %vm2572
  %v2574 = vsel %vm2573, %v2566, %v2570
  %v2575 = vand.u32 2147483647, %v2565
  %vm2576 = vcmp.eq.f32.partialorder %v2575, 8.507059e+37
  %v2577 = vand.u32 %v2565, 2147483648
  %v2578 = vor.u32 1.1754944e-38, %v2577
  %v2579 = vsel %vm2576, %v2578, %v2574
  %v2580 = vmul.f32 1.0, %v2579
  %v2581 = vtanh.pop %v2561
  %v2582 = vmul.f32 %v2580, %v2551
  %v2584 = vrot.slane %v2581, 2
  %v2586 = vmul.f32 %v2580, %v2584
  %v2588 = vrot.slane %v2586, 7
  %v2590 = vadd.f32 %v2582, %v2588
  %v2591 = vtanh.pop %v2590
  %v2593 = vrot.slane %v2591, 6
  %v2595 = vmul.f32 %v2580, %v2593
  %v2596 = vmul.f32 %v2509, %v2312
  %v2597 = vperm.slane %v2595, 3
  %v2598 = vmul.f32 %v2514, %v2597
  %v2599 = vadd.f32 %v2596, %v2598
  %v2600 = vadd.f32 %v2599, %v2520
  %v2601 = vxor.u32 %v2600, 2147483648
  %v2602 = vmul.f32 %v2601, 1.442695
  %v2603 = vpow.pop %v2602
  %v2604 = vadd.f32 %v2603, 1.0
  %v2605 = vrcp.pop %v2604
  %v2606 = vmul.f32 %v2604, %v2605
  %v2607 = vsub.f32 1.0, %v2606
  %v2608 = vmul.f32 %v2605, %v2607
  %v2609 = vadd.f32 %v2605, %v2608
  %vm2610 = vweird.f32 %v2604
  %vm2611 = vweird.f32 %v2605
  %vm2612 = vmor %vm2610, %vm2611
  %v2613 = vsel %vm2612, %v2605, %v2609
  %v2614 = vand.u32 2147483647, %v2604
  %vm2615 = vcmp.eq.f32.partialorder %v2614, 8.507059e+37
  %v2616 = vand.u32 %v2604, 2147483648
  %v2617 = vor.u32 1.1754944e-38, %v2616
  %v2618 = vsel %vm2615, %v2617, %v2613
  %v2619 = vmul.f32 1.0, %v2618
  %v2620 = vtanh.pop %v2600
  %v2621 = vmul.f32 %v2619, %v2590
  %v2623 = vrot.slane %v2620, 2
  %v2625 = vmul.f32 %v2619, %v2623
  %v2627 = vrot.slane %v2625, 7
  %v2629 = vadd.f32 %v2621, %v2627
  %v2630 = vtanh.pop %v2629
  %v2632 = vrot.slane %v2630, 6
  %v2634 = vmul.f32 %v2619, %v2632
  %v2635 = vmul.f32 %v2509, %v2351
  %v2636 = vperm.slane %v2634, 3
  %v2637 = vmul.f32 %v2514, %v2636
  %v2638 = vadd.f32 %v2635, %v2637
  %v2639 = vadd.f32 %v2638, %v2520
  %v2640 = vxor.u32 %v2639, 2147483648
  %v2641 = vmul.f32 %v2640, 1.442695
  %v2642 = vpow.pop %v2641
  %v2643 = vadd.f32 %v2642, 1.0
  %v2644 = vrcp.pop %v2643
  %v2645 = vmul.f32 %v2643, %v2644
  %v2646 = vsub.f32 1.0, %v2645
  %v2647 = vmul.f32 %v2644, %v2646
  %v2648 = vadd.f32 %v2644, %v2647
  %vm2649 = vweird.f32 %v2643
  %vm2650 = vweird.f32 %v2644
  %vm2651 = vmor %vm2649, %vm2650
  %v2652 = vsel %vm2651, %v2644, %v2648
  %v2653 = vand.u32 2147483647, %v2643
  %vm2654 = vcmp.eq.f32.partialorder %v2653, 8.507059e+37
  %v2655 = vand.u32 %v2643, 2147483648
  %v2656 = vor.u32 1.1754944e-38, %v2655
  %v2657 = vsel %vm2654, %v2656, %v2652
  %v2658 = vmul.f32 1.0, %v2657
  %v2659 = vtanh.pop %v2639
  %v2660 = vmul.f32 %v2658, %v2629
  %v2662 = vrot.slane %v2659, 2
  %v2664 = vmul.f32 %v2658, %v2662
  %v2666 = vrot.slane %v2664, 7
  %v2668 = vadd.f32 %v2660, %v2666
  %v2669 = vtanh.pop %v2668
  %v2671 = vrot.slane %v2669, 6
  %v2673 = vmul.f32 %v2658, %v2671
  %v2674 = vmul.f32 %v2509, %v2390
  %v2675 = vperm.slane %v2673, 3
  %v2676 = vmul.f32 %v2514, %v2675
  %v2677 = vadd.f32 %v2674, %v2676
  %v2678 = vadd.f32 %v2677, %v2520
  %v2679 = vxor.u32 %v2678, 2147483648
  %v2680 = vmul.f32 %v2679, 1.442695
  %v2681 = vpow.pop %v2680
  %v2682 = vadd.f32 %v2681, 1.0
  %v2683 = vrcp.pop %v2682
  %v2684 = vmul.f32 %v2682, %v2683
  %v2685 = vsub.f32 1.0, %v2684
  %v2686 = vmul.f32 %v2683, %v2685
  %v2687 = vadd.f32 %v2683, %v2686
  %vm2688 = vweird.f32 %v2682
  %vm2689 = vweird.f32 %v2683
  %vm2690 = vmor %vm2688, %vm2689
  %v2691 = vsel %vm2690, %v2683, %v2687
  %v2692 = vand.u32 2147483647, %v2682
  %vm2693 = vcmp.eq.f32.partialorder %v2692, 8.507059e+37
  %v2694 = vand.u32 %v2682, 2147483648
  %v2695 = vor.u32 1.1754944e-38, %v2694
  %v2696 = vsel %vm2693, %v2695, %v2691
  %v2697 = vmul.f32 1.0, %v2696
  %v2698 = vtanh.pop %v2678
  %v2699 = vmul.f32 %v2697, %v2668
  %v2701 = vrot.slane %v2698, 2
  %v2703 = vmul.f32 %v2697, %v2701
  %v2705 = vrot.slane %v2703, 7
  %v2707 = vadd.f32 %v2699, %v2705
  %v2708 = vtanh.pop %v2707
  %v2710 = vrot.slane %v2708, 6
  %v2712 = vmul.f32 %v2697, %v2710
  %v2713 = vmul.f32 %v2509, %v2429
  %v2714 = vperm.slane %v2712, 3
  %v2715 = vmul.f32 %v2514, %v2714
  %v2716 = vadd.f32 %v2713, %v2715
  %v2717 = vadd.f32 %v2716, %v2520
  %v2718 = vxor.u32 %v2717, 2147483648
  %v2719 = vmul.f32 %v2718, 1.442695
  %v2720 = vpow.pop %v2719
  %v2721 = vadd.f32 %v2720, 1.0
  %v2722 = vrcp.pop %v2721
  %v2723 = vmul.f32 %v2721, %v2722
  %v2724 = vsub.f32 1.0, %v2723
  %v2725 = vmul.f32 %v2722, %v2724
  %v2726 = vadd.f32 %v2722, %v2725
  %vm2727 = vweird.f32 %v2721
  %vm2728 = vweird.f32 %v2722
  %vm2729 = vmor %vm2727, %vm2728
  %v2730 = vsel %vm2729, %v2722, %v2726
  %v2731 = vand.u32 2147483647, %v2721
  %vm2732 = vcmp.eq.f32.partialorder %v2731, 8.507059e+37
  %v2733 = vand.u32 %v2721, 2147483648
  %v2734 = vor.u32 1.1754944e-38, %v2733
  %v2735 = vsel %vm2732, %v2734, %v2730
  %v2736 = vmul.f32 1.0, %v2735
  %v2737 = vtanh.pop %v2717
  %v2738 = vmul.f32 %v2736, %v2707
  %v2740 = vrot.slane %v2737, 2
  %v2742 = vmul.f32 %v2736, %v2740
  %v2744 = vrot.slane %v2742, 7
  %v2746 = vadd.f32 %v2738, %v2744
  %v2747 = vtanh.pop %v2746
  %v2749 = vrot.slane %v2747, 6
  %v2751 = vmul.f32 %v2736, %v2749
  %v2752 = vmul.f32 %v2509, %v2469
  %v2753 = vperm.slane %v2751, 3
  %v2754 = vmul.f32 %v2514, %v2753
  %v2755 = vadd.f32 %v2752, %v2754
  %v2756 = vadd.f32 %v2755, %v2520
  %v2757 = vxor.u32 %v2756, 2147483648
  %v2758 = vmul.f32 %v2757, 1.442695
  %v2759 = vpow.pop %v2758
  %v2760 = vadd.f32 %v2759, 1.0
  %v2761 = vrcp.pop %v2760
  %v2762 = vmul.f32 %v2760, %v2761
  %v2763 = vsub.f32 1.0, %v2762
  %v2764 = vmul.f32 %v2761, %v2763
  %v2765 = vadd.f32 %v2761, %v2764
  %vm2766 = vweird.f32 %v2760
  %vm2767 = vweird.f32 %v2761
  %vm2768 = vmor %vm2766, %vm2767
  %v2769 = vsel %vm2768, %v2761, %v2765
  %v2770 = vand.u32 2147483647, %v2760
  %vm2771 = vcmp.eq.f32.partialorder %v2770, 8.507059e+37
  %v2772 = vand.u32 %v2760, 2147483648
  %v2773 = vor.u32 1.1754944e-38, %v2772
  %v2774 = vsel %vm2771, %v2773, %v2769
  %v2775 = vmul.f32 1.0, %v2774
  %v2776 = vtanh.pop %v2756
  %v2777 = vmul.f32 %v2775, %v2746
  %v2779 = vrot.slane %v2776, 2
  %v2781 = vmul.f32 %v2775, %v2779
  %v2783 = vrot.slane %v2781, 7
  %v2785 = vadd.f32 %v2777, %v2783
  %v2786 = vtanh.pop %v2785
  %v2788 = vrot.slane %v2786, 6
  %v2790 = vmul.f32 %v2775, %v2788
  %v2791 = vperm.slane %v2506, 3
  %v2792 = vmul.f32 %v2509, %v2791
  %v2793 = vperm.slane %v2790, 3
  %v2794 = vmul.f32 %v2514, %v2793
  %v2795 = vadd.f32 %v2792, %v2794
  %v2796 = vadd.f32 %v2795, %v2520
  %v2797 = vxor.u32 %v2796, 2147483648
  %v2798 = vmul.f32 %v2797, 1.442695
  %v2799 = vpow.pop %v2798
  %v2800 = vadd.f32 %v2799, 1.0
  %v2801 = vrcp.pop %v2800
  %v2802 = vmul.f32 %v2800, %v2801
  %v2803 = vsub.f32 1.0, %v2802
  %v2804 = vmul.f32 %v2801, %v2803
  %v2805 = vadd.f32 %v2801, %v2804
  %vm2806 = vweird.f32 %v2800
  %vm2807 = vweird.f32 %v2801
  %vm2808 = vmor %vm2806, %vm2807
  %v2809 = vsel %vm2808, %v2801, %v2805
  %v2810 = vand.u32 2147483647, %v2800
  %vm2811 = vcmp.eq.f32.partialorder %v2810, 8.507059e+37
  %v2812 = vand.u32 %v2800, 2147483648
  %v2813 = vor.u32 1.1754944e-38, %v2812
  %v2814 = vsel %vm2811, %v2813, %v2809
  %v2815 = vmul.f32 1.0, %v2814
  %v2816 = vtanh.pop %v2796
  %v2817 = vmul.f32 %v2815, %v2785
  %v2819 = vrot.slane %v2816, 2
  %v2821 = vmul.f32 %v2815, %v2819
  %v2823 = vrot.slane %v2821, 7
  %v2825 = vadd.f32 %v2817, %v2823
  %v2826 = vtanh.pop %v2825
  %v2828 = vrot.slane %v2826, 6
  %v2830 = vmul.f32 %v2815, %v2828
  %2831 = vset.pattern.permute.xlu0 7
  %2832 = vperm.xlu0 %2831, %v29
  %v2833 = vpop.permute.xlu0 %2832
  %v2835 = vmul.f32 %v2833, %v2558
  %2836 = vset.pattern.permute.xlu0 8
  %2837 = vperm.xlu0 %2836, %v30
  %v2838 = vpop.permute.xlu0 %2837
  %v2840 = vmul.f32 %v2838, 0.0
  %v2841 = vadd.f32 %v2835, %v2840
  %2842 = vset.pattern.permute.xlu0 8
  %2843 = vperm.xlu0 %2842, %v31
  %v2844 = vpop.permute.xlu0 %2843
  %v2846 = vadd.f32 %v2841, %v2844
  %v2847 = vxor.u32 %v2846, 2147483648
  %v2848 = vmul.f32 %v2847, 1.442695
  %v2849 = vpow.pop %v2848
  %v2850 = vadd.f32 %v2849, 1.0
  %v2851 = vrcp.pop %v2850
  %v2852 = vmul.f32 %v2850, %v2851
  %v2853 = vsub.f32 1.0, %v2852
  %v2854 = vmul.f32 %v2851, %v2853
  %v2855 = vadd.f32 %v2851, %v2854
  %vm2856 = vweird.f32 %v2850
  %vm2857 = vweird.f32 %v2851
  %vm2858 = vmor %vm2856, %vm2857
  %v2859 = vsel %vm2858, %v2851, %v2855
  %v2860 = vand.u32 2147483647, %v2850
  %vm2861 = vcmp.eq.f32.partialorder %v2860, 8.507059e+37
  %v2862 = vand.u32 %v2850, 2147483648
  %v2863 = vor.u32 1.1754944e-38, %v2862
  %v2864 = vsel %vm2861, %v2863, %v2859
  %v2865 = vmul.f32 1.0, %v2864
  %v2866 = vtanh.pop %v2846
  %v2867 = vmul.f32 %v2865, 0.0
  %v2869 = vrot.slane %v2866, 2
  %v2871 = vmul.f32 %v2865, %v2869
  %v2873 = vrot.slane %v2871, 7
  %v2875 = vadd.f32 %v2867, %v2873
  %v2876 = vtanh.pop %v2875
  %v2878 = vrot.slane %v2876, 6
  %v2880 = vmul.f32 %v2865, %v2878
  %v2881 = vmul.f32 %v2833, %v2597
  %v2882 = vperm.slane %v2880, 3
  %v2883 = vmul.f32 %v2838, %v2882
  %v2884 = vadd.f32 %v2881, %v2883
  %v2885 = vadd.f32 %v2884, %v2844
  %v2886 = vxor.u32 %v2885, 2147483648
  %v2887 = vmul.f32 %v2886, 1.442695
  %v2888 = vpow.pop %v2887
  %v2889 = vadd.f32 %v2888, 1.0
  %v2890 = vrcp.pop %v2889
  %v2891 = vmul.f32 %v2889, %v2890
  %v2892 = vsub.f32 1.0, %v2891
  %v2893 = vmul.f32 %v2890, %v2892
  %v2894 = vadd.f32 %v2890, %v2893
  %vm2895 = vweird.f32 %v2889
  %vm2896 = vweird.f32 %v2890
  %vm2897 = vmor %vm2895, %vm2896
  %v2898 = vsel %vm2897, %v2890, %v2894
  %v2899 = vand.u32 2147483647, %v2889
  %vm2900 = vcmp.eq.f32.partialorder %v2899, 8.507059e+37
  %v2901 = vand.u32 %v2889, 2147483648
  %v2902 = vor.u32 1.1754944e-38, %v2901
  %v2903 = vsel %vm2900, %v2902, %v2898
  %v2904 = vmul.f32 1.0, %v2903
  %v2905 = vtanh.pop %v2885
  %v2906 = vmul.f32 %v2904, %v2875
  %v2908 = vrot.slane %v2905, 2
  %v2910 = vmul.f32 %v2904, %v2908
  %v2912 = vrot.slane %v2910, 7
  %v2914 = vadd.f32 %v2906, %v2912
  %v2915 = vtanh.pop %v2914
  %v2917 = vrot.slane %v2915, 6
  %v2919 = vmul.f32 %v2904, %v2917
  %v2920 = vmul.f32 %v2833, %v2636
  %v2921 = vperm.slane %v2919, 3
  %v2922 = vmul.f32 %v2838, %v2921
  %v2923 = vadd.f32 %v2920, %v2922
  %v2924 = vadd.f32 %v2923, %v2844
  %v2925 = vxor.u32 %v2924, 2147483648
  %v2926 = vmul.f32 %v2925, 1.442695
  %v2927 = vpow.pop %v2926
  %v2928 = vadd.f32 %v2927, 1.0
  %v2929 = vrcp.pop %v2928
  %v2930 = vmul.f32 %v2928, %v2929
  %v2931 = vsub.f32 1.0, %v2930
  %v2932 = vmul.f32 %v2929, %v2931
  %v2933 = vadd.f32 %v2929, %v2932
  %vm2934 = vweird.f32 %v2928
  %vm2935 = vweird.f32 %v2929
  %vm2936 = vmor %vm2934, %vm2935
  %v2937 = vsel %vm2936, %v2929, %v2933
  %v2938 = vand.u32 2147483647, %v2928
  %vm2939 = vcmp.eq.f32.partialorder %v2938, 8.507059e+37
  %v2940 = vand.u32 %v2928, 2147483648
  %v2941 = vor.u32 1.1754944e-38, %v2940
  %v2942 = vsel %vm2939, %v2941, %v2937
  %v2943 = vmul.f32 1.0, %v2942
  %v2944 = vtanh.pop %v2924
  %v2945 = vmul.f32 %v2943, %v2914
  %v2947 = vrot.slane %v2944, 2
  %v2949 = vmul.f32 %v2943, %v2947
  %v2951 = vrot.slane %v2949, 7
  %v2953 = vadd.f32 %v2945, %v2951
  %v2954 = vtanh.pop %v2953
  %v2956 = vrot.slane %v2954, 6
  %v2958 = vmul.f32 %v2943, %v2956
  %v2959 = vmul.f32 %v2833, %v2675
  %v2960 = vperm.slane %v2958, 3
  %v2961 = vmul.f32 %v2838, %v2960
  %v2962 = vadd.f32 %v2959, %v2961
  %v2963 = vadd.f32 %v2962, %v2844
  %v2964 = vxor.u32 %v2963, 2147483648
  %v2965 = vmul.f32 %v2964, 1.442695
  %v2966 = vpow.pop %v2965
  %v2967 = vadd.f32 %v2966, 1.0
  %v2968 = vrcp.pop %v2967
  %v2969 = vmul.f32 %v2967, %v2968
  %v2970 = vsub.f32 1.0, %v2969
  %v2971 = vmul.f32 %v2968, %v2970
  %v2972 = vadd.f32 %v2968, %v2971
  %vm2973 = vweird.f32 %v2967
  %vm2974 = vweird.f32 %v2968
  %vm2975 = vmor %vm2973, %vm2974
  %v2976 = vsel %vm2975, %v2968, %v2972
  %v2977 = vand.u32 2147483647, %v2967
  %vm2978 = vcmp.eq.f32.partialorder %v2977, 8.507059e+37
  %v2979 = vand.u32 %v2967, 2147483648
  %v2980 = vor.u32 1.1754944e-38, %v2979
  %v2981 = vsel %vm2978, %v2980, %v2976
  %v2982 = vmul.f32 1.0, %v2981
  %v2983 = vtanh.pop %v2963
  %v2984 = vmul.f32 %v2982, %v2953
  %v2986 = vrot.slane %v2983, 2
  %v2988 = vmul.f32 %v2982, %v2986
  %v2990 = vrot.slane %v2988, 7
  %v2992 = vadd.f32 %v2984, %v2990
  %v2993 = vtanh.pop %v2992
  %v2995 = vrot.slane %v2993, 6
  %v2997 = vmul.f32 %v2982, %v2995
  %v2998 = vmul.f32 %v2833, %v2714
  %v2999 = vperm.slane %v2997, 3
  %v3000 = vmul.f32 %v2838, %v2999
  %v3001 = vadd.f32 %v2998, %v3000
  %v3002 = vadd.f32 %v3001, %v2844
  %v3003 = vxor.u32 %v3002, 2147483648
  %v3004 = vmul.f32 %v3003, 1.442695
  %v3005 = vpow.pop %v3004
  %v3006 = vadd.f32 %v3005, 1.0
  %v3007 = vrcp.pop %v3006
  %v3008 = vmul.f32 %v3006, %v3007
  %v3009 = vsub.f32 1.0, %v3008
  %v3010 = vmul.f32 %v3007, %v3009
  %v3011 = vadd.f32 %v3007, %v3010
  %vm3012 = vweird.f32 %v3006
  %vm3013 = vweird.f32 %v3007
  %vm3014 = vmor %vm3012, %vm3013
  %v3015 = vsel %vm3014, %v3007, %v3011
  %v3016 = vand.u32 2147483647, %v3006
  %vm3017 = vcmp.eq.f32.partialorder %v3016, 8.507059e+37
  %v3018 = vand.u32 %v3006, 2147483648
  %v3019 = vor.u32 1.1754944e-38, %v3018
  %v3020 = vsel %vm3017, %v3019, %v3015
  %v3021 = vmul.f32 1.0, %v3020
  %v3022 = vtanh.pop %v3002
  %v3023 = vmul.f32 %v3021, %v2992
  %v3025 = vrot.slane %v3022, 2
  %v3027 = vmul.f32 %v3021, %v3025
  %v3029 = vrot.slane %v3027, 7
  %v3031 = vadd.f32 %v3023, %v3029
  %v3032 = vtanh.pop %v3031
  %v3034 = vrot.slane %v3032, 6
  %v3036 = vmul.f32 %v3021, %v3034
  %v3037 = vmul.f32 %v2833, %v2753
  %v3038 = vperm.slane %v3036, 3
  %v3039 = vmul.f32 %v2838, %v3038
  %v3040 = vadd.f32 %v3037, %v3039
  %v3041 = vadd.f32 %v3040, %v2844
  %v3042 = vxor.u32 %v3041, 2147483648
  %v3043 = vmul.f32 %v3042, 1.442695
  %v3044 = vpow.pop %v3043
  %v3045 = vadd.f32 %v3044, 1.0
  %v3046 = vrcp.pop %v3045
  %v3047 = vmul.f32 %v3045, %v3046
  %v3048 = vsub.f32 1.0, %v3047
  %v3049 = vmul.f32 %v3046, %v3048
  %v3050 = vadd.f32 %v3046, %v3049
  %vm3051 = vweird.f32 %v3045
  %vm3052 = vweird.f32 %v3046
  %vm3053 = vmor %vm3051, %vm3052
  %v3054 = vsel %vm3053, %v3046, %v3050
  %v3055 = vand.u32 2147483647, %v3045
  %vm3056 = vcmp.eq.f32.partialorder %v3055, 8.507059e+37
  %v3057 = vand.u32 %v3045, 2147483648
  %v3058 = vor.u32 1.1754944e-38, %v3057
  %v3059 = vsel %vm3056, %v3058, %v3054
  %v3060 = vmul.f32 1.0, %v3059
  %v3061 = vtanh.pop %v3041
  %v3062 = vmul.f32 %v3060, %v3031
  %v3064 = vrot.slane %v3061, 2
  %v3066 = vmul.f32 %v3060, %v3064
  %v3068 = vrot.slane %v3066, 7
  %v3070 = vadd.f32 %v3062, %v3068
  %v3071 = vtanh.pop %v3070
  %v3073 = vrot.slane %v3071, 6
  %v3075 = vmul.f32 %v3060, %v3073
  %v3076 = vmul.f32 %v2833, %v2793
  %v3077 = vperm.slane %v3075, 3
  %v3078 = vmul.f32 %v2838, %v3077
  %v3079 = vadd.f32 %v3076, %v3078
  %v3080 = vadd.f32 %v3079, %v2844
  %v3081 = vxor.u32 %v3080, 2147483648
  %v3082 = vmul.f32 %v3081, 1.442695
  %v3083 = vpow.pop %v3082
  %v3084 = vadd.f32 %v3083, 1.0
  %v3085 = vrcp.pop %v3084
  %v3086 = vmul.f32 %v3084, %v3085
  %v3087 = vsub.f32 1.0, %v3086
  %v3088 = vmul.f32 %v3085, %v3087
  %v3089 = vadd.f32 %v3085, %v3088
  %vm3090 = vweird.f32 %v3084
  %vm3091 = vweird.f32 %v3085
  %vm3092 = vmor %vm3090, %vm3091
  %v3093 = vsel %vm3092, %v3085, %v3089
  %v3094 = vand.u32 2147483647, %v3084
  %vm3095 = vcmp.eq.f32.partialorder %v3094, 8.507059e+37
  %v3096 = vand.u32 %v3084, 2147483648
  %v3097 = vor.u32 1.1754944e-38, %v3096
  %v3098 = vsel %vm3095, %v3097, %v3093
  %v3099 = vmul.f32 1.0, %v3098
  %v3100 = vtanh.pop %v3080
  %v3101 = vmul.f32 %v3099, %v3070
  %v3103 = vrot.slane %v3100, 2
  %v3105 = vmul.f32 %v3099, %v3103
  %v3107 = vrot.slane %v3105, 7
  %v3109 = vadd.f32 %v3101, %v3107
  %v3110 = vtanh.pop %v3109
  %v3112 = vrot.slane %v3110, 6
  %v3114 = vmul.f32 %v3099, %v3112
  %v3115 = vperm.slane %v2830, 3
  %v3116 = vmul.f32 %v2833, %v3115
  %v3117 = vperm.slane %v3114, 3
  %v3118 = vmul.f32 %v2838, %v3117
  %v3119 = vadd.f32 %v3116, %v3118
  %v3120 = vadd.f32 %v3119, %v2844
  %v3121 = vxor.u32 %v3120, 2147483648
  %v3122 = vmul.f32 %v3121, 1.442695
  %v3123 = vpow.pop %v3122
  %v3124 = vadd.f32 %v3123, 1.0
  %v3125 = vrcp.pop %v3124
  %v3126 = vmul.f32 %v3124, %v3125
  %v3127 = vsub.f32 1.0, %v3126
  %v3128 = vmul.f32 %v3125, %v3127
  %v3129 = vadd.f32 %v3125, %v3128
  %vm3130 = vweird.f32 %v3124
  %vm3131 = vweird.f32 %v3125
  %vm3132 = vmor %vm3130, %vm3131
  %v3133 = vsel %vm3132, %v3125, %v3129
  %v3134 = vand.u32 2147483647, %v3124
  %vm3135 = vcmp.eq.f32.partialorder %v3134, 8.507059e+37
  %v3136 = vand.u32 %v3124, 2147483648
  %v3137 = vor.u32 1.1754944e-38, %v3136
  %v3138 = vsel %vm3135, %v3137, %v3133
  %v3139 = vmul.f32 1.0, %v3138
  %v3140 = vtanh.pop %v3120
  %v3141 = vmul.f32 %v3139, %v3109
  %v3143 = vrot.slane %v3140, 2
  %v3145 = vmul.f32 %v3139, %v3143
  %v3147 = vrot.slane %v3145, 7
  %v3149 = vadd.f32 %v3141, %v3147
  %v3150 = vtanh.pop %v3149
  %v3152 = vrot.slane %v3150, 6
  %v3154 = vmul.f32 %v3139, %v3152
  %3155 = vset.pattern.permute.xlu0 8
  %3156 = vperm.xlu0 %3155, %v29
  %v3157 = vpop.permute.xlu0 %3156
  %v3159 = vmul.f32 %v3157, %v2882
  %3160 = vset.pattern.permute.xlu0 9
  %3161 = vperm.xlu0 %3160, %v30
  %v3162 = vpop.permute.xlu0 %3161
  %v3164 = vmul.f32 %v3162, 0.0
  %v3165 = vadd.f32 %v3159, %v3164
  %3166 = vset.pattern.permute.xlu0 9
  %3167 = vperm.xlu0 %3166, %v31
  %v3168 = vpop.permute.xlu0 %3167
  %v3170 = vadd.f32 %v3165, %v3168
  %v3171 = vxor.u32 %v3170, 2147483648
  %v3172 = vmul.f32 %v3171, 1.442695
  %v3173 = vpow.pop %v3172
  %v3174 = vadd.f32 %v3173, 1.0
  %v3175 = vrcp.pop %v3174
  %v3176 = vmul.f32 %v3174, %v3175
  %v3177 = vsub.f32 1.0, %v3176
  %v3178 = vmul.f32 %v3175, %v3177
  %v3179 = vadd.f32 %v3175, %v3178
  %vm3180 = vweird.f32 %v3174
  %vm3181 = vweird.f32 %v3175
  %vm3182 = vmor %vm3180, %vm3181
  %v3183 = vsel %vm3182, %v3175, %v3179
  %v3184 = vand.u32 2147483647, %v3174
  %vm3185 = vcmp.eq.f32.partialorder %v3184, 8.507059e+37
  %v3186 = vand.u32 %v3174, 2147483648
  %v3187 = vor.u32 1.1754944e-38, %v3186
  %v3188 = vsel %vm3185, %v3187, %v3183
  %v3189 = vmul.f32 1.0, %v3188
  %v3190 = vtanh.pop %v3170
  %v3191 = vmul.f32 %v3189, 0.0
  %v3193 = vrot.slane %v3190, 2
  %v3195 = vmul.f32 %v3189, %v3193
  %v3197 = vrot.slane %v3195, 7
  %v3199 = vadd.f32 %v3191, %v3197
  %v3200 = vtanh.pop %v3199
  %v3202 = vrot.slane %v3200, 6
  %v3204 = vmul.f32 %v3189, %v3202
  %v3205 = vmul.f32 %v3157, %v2921
  %v3206 = vperm.slane %v3204, 3
  %v3207 = vmul.f32 %v3162, %v3206
  %v3208 = vadd.f32 %v3205, %v3207
  %v3209 = vadd.f32 %v3208, %v3168
  %v3210 = vxor.u32 %v3209, 2147483648
  %v3211 = vmul.f32 %v3210, 1.442695
  %v3212 = vpow.pop %v3211
  %v3213 = vadd.f32 %v3212, 1.0
  %v3214 = vrcp.pop %v3213
  %v3215 = vmul.f32 %v3213, %v3214
  %v3216 = vsub.f32 1.0, %v3215
  %v3217 = vmul.f32 %v3214, %v3216
  %v3218 = vadd.f32 %v3214, %v3217
  %vm3219 = vweird.f32 %v3213
  %vm3220 = vweird.f32 %v3214
  %vm3221 = vmor %vm3219, %vm3220
  %v3222 = vsel %vm3221, %v3214, %v3218
  %v3223 = vand.u32 2147483647, %v3213
  %vm3224 = vcmp.eq.f32.partialorder %v3223, 8.507059e+37
  %v3225 = vand.u32 %v3213, 2147483648
  %v3226 = vor.u32 1.1754944e-38, %v3225
  %v3227 = vsel %vm3224, %v3226, %v3222
  %v3228 = vmul.f32 1.0, %v3227
  %v3229 = vtanh.pop %v3209
  %v3230 = vmul.f32 %v3228, %v3199
  %v3232 = vrot.slane %v3229, 2
  %v3234 = vmul.f32 %v3228, %v3232
  %v3236 = vrot.slane %v3234, 7
  %v3238 = vadd.f32 %v3230, %v3236
  %v3239 = vtanh.pop %v3238
  %v3241 = vrot.slane %v3239, 6
  %v3243 = vmul.f32 %v3228, %v3241
  %v3244 = vmul.f32 %v3157, %v2960
  %v3245 = vperm.slane %v3243, 3
  %v3246 = vmul.f32 %v3162, %v3245
  %v3247 = vadd.f32 %v3244, %v3246
  %v3248 = vadd.f32 %v3247, %v3168
  %v3249 = vxor.u32 %v3248, 2147483648
  %v3250 = vmul.f32 %v3249, 1.442695
  %v3251 = vpow.pop %v3250
  %v3252 = vadd.f32 %v3251, 1.0
  %v3253 = vrcp.pop %v3252
  %v3254 = vmul.f32 %v3252, %v3253
  %v3255 = vsub.f32 1.0, %v3254
  %v3256 = vmul.f32 %v3253, %v3255
  %v3257 = vadd.f32 %v3253, %v3256
  %vm3258 = vweird.f32 %v3252
  %vm3259 = vweird.f32 %v3253
  %vm3260 = vmor %vm3258, %vm3259
  %v3261 = vsel %vm3260, %v3253, %v3257
  %v3262 = vand.u32 2147483647, %v3252
  %vm3263 = vcmp.eq.f32.partialorder %v3262, 8.507059e+37
  %v3264 = vand.u32 %v3252, 2147483648
  %v3265 = vor.u32 1.1754944e-38, %v3264
  %v3266 = vsel %vm3263, %v3265, %v3261
  %v3267 = vmul.f32 1.0, %v3266
  %v3268 = vtanh.pop %v3248
  %v3269 = vmul.f32 %v3267, %v3238
  %v3271 = vrot.slane %v3268, 2
  %v3273 = vmul.f32 %v3267, %v3271
  %v3275 = vrot.slane %v3273, 7
  %v3277 = vadd.f32 %v3269, %v3275
  %v3278 = vtanh.pop %v3277
  %v3280 = vrot.slane %v3278, 6
  %v3282 = vmul.f32 %v3267, %v3280
  %v3283 = vmul.f32 %v3157, %v2999
  %v3284 = vperm.slane %v3282, 3
  %v3285 = vmul.f32 %v3162, %v3284
  %v3286 = vadd.f32 %v3283, %v3285
  %v3287 = vadd.f32 %v3286, %v3168
  %v3288 = vxor.u32 %v3287, 2147483648
  %v3289 = vmul.f32 %v3288, 1.442695
  %v3290 = vpow.pop %v3289
  %v3291 = vadd.f32 %v3290, 1.0
  %v3292 = vrcp.pop %v3291
  %v3293 = vmul.f32 %v3291, %v3292
  %v3294 = vsub.f32 1.0, %v3293
  %v3295 = vmul.f32 %v3292, %v3294
  %v3296 = vadd.f32 %v3292, %v3295
  %vm3297 = vweird.f32 %v3291
  %vm3298 = vweird.f32 %v3292
  %vm3299 = vmor %vm3297, %vm3298
  %v3300 = vsel %vm3299, %v3292, %v3296
  %v3301 = vand.u32 2147483647, %v3291
  %vm3302 = vcmp.eq.f32.partialorder %v3301, 8.507059e+37
  %v3303 = vand.u32 %v3291, 2147483648
  %v3304 = vor.u32 1.1754944e-38, %v3303
  %v3305 = vsel %vm3302, %v3304, %v3300
  %v3306 = vmul.f32 1.0, %v3305
  %v3307 = vtanh.pop %v3287
  %v3308 = vmul.f32 %v3306, %v3277
  %v3310 = vrot.slane %v3307, 2
  %v3312 = vmul.f32 %v3306, %v3310
  %v3314 = vrot.slane %v3312, 7
  %v3316 = vadd.f32 %v3308, %v3314
  %v3317 = vtanh.pop %v3316
  %v3319 = vrot.slane %v3317, 6
  %v3321 = vmul.f32 %v3306, %v3319
  %v3322 = vmul.f32 %v3157, %v3038
  %v3323 = vperm.slane %v3321, 3
  %v3324 = vmul.f32 %v3162, %v3323
  %v3325 = vadd.f32 %v3322, %v3324
  %v3326 = vadd.f32 %v3325, %v3168
  %v3327 = vxor.u32 %v3326, 2147483648
  %v3328 = vmul.f32 %v3327, 1.442695
  %v3329 = vpow.pop %v3328
  %v3330 = vadd.f32 %v3329, 1.0
  %v3331 = vrcp.pop %v3330
  %v3332 = vmul.f32 %v3330, %v3331
  %v3333 = vsub.f32 1.0, %v3332
  %v3334 = vmul.f32 %v3331, %v3333
  %v3335 = vadd.f32 %v3331, %v3334
  %vm3336 = vweird.f32 %v3330
  %vm3337 = vweird.f32 %v3331
  %vm3338 = vmor %vm3336, %vm3337
  %v3339 = vsel %vm3338, %v3331, %v3335
  %v3340 = vand.u32 2147483647, %v3330
  %vm3341 = vcmp.eq.f32.partialorder %v3340, 8.507059e+37
  %v3342 = vand.u32 %v3330, 2147483648
  %v3343 = vor.u32 1.1754944e-38, %v3342
  %v3344 = vsel %vm3341, %v3343, %v3339
  %v3345 = vmul.f32 1.0, %v3344
  %v3346 = vtanh.pop %v3326
  %v3347 = vmul.f32 %v3345, %v3316
  %v3349 = vrot.slane %v3346, 2
  %v3351 = vmul.f32 %v3345, %v3349
  %v3353 = vrot.slane %v3351, 7
  %v3355 = vadd.f32 %v3347, %v3353
  %v3356 = vtanh.pop %v3355
  %v3358 = vrot.slane %v3356, 6
  %v3360 = vmul.f32 %v3345, %v3358
  %v3361 = vmul.f32 %v3157, %v3077
  %v3362 = vperm.slane %v3360, 3
  %v3363 = vmul.f32 %v3162, %v3362
  %v3364 = vadd.f32 %v3361, %v3363
  %v3365 = vadd.f32 %v3364, %v3168
  %v3366 = vxor.u32 %v3365, 2147483648
  %v3367 = vmul.f32 %v3366, 1.442695
  %v3368 = vpow.pop %v3367
  %v3369 = vadd.f32 %v3368, 1.0
  %v3370 = vrcp.pop %v3369
  %v3371 = vmul.f32 %v3369, %v3370
  %v3372 = vsub.f32 1.0, %v3371
  %v3373 = vmul.f32 %v3370, %v3372
  %v3374 = vadd.f32 %v3370, %v3373
  %vm3375 = vweird.f32 %v3369
  %vm3376 = vweird.f32 %v3370
  %vm3377 = vmor %vm3375, %vm3376
  %v3378 = vsel %vm3377, %v3370, %v3374
  %v3379 = vand.u32 2147483647, %v3369
  %vm3380 = vcmp.eq.f32.partialorder %v3379, 8.507059e+37
  %v3381 = vand.u32 %v3369, 2147483648
  %v3382 = vor.u32 1.1754944e-38, %v3381
  %v3383 = vsel %vm3380, %v3382, %v3378
  %v3384 = vmul.f32 1.0, %v3383
  %v3385 = vtanh.pop %v3365
  %v3386 = vmul.f32 %v3384, %v3355
  %v3388 = vrot.slane %v3385, 2
  %v3390 = vmul.f32 %v3384, %v3388
  %v3392 = vrot.slane %v3390, 7
  %v3394 = vadd.f32 %v3386, %v3392
  %v3395 = vtanh.pop %v3394
  %v3397 = vrot.slane %v3395, 6
  %v3399 = vmul.f32 %v3384, %v3397
  %v3400 = vmul.f32 %v3157, %v3117
  %v3401 = vperm.slane %v3399, 3
  %v3402 = vmul.f32 %v3162, %v3401
  %v3403 = vadd.f32 %v3400, %v3402
  %v3404 = vadd.f32 %v3403, %v3168
  %v3405 = vxor.u32 %v3404, 2147483648
  %v3406 = vmul.f32 %v3405, 1.442695
  %v3407 = vpow.pop %v3406
  %v3408 = vadd.f32 %v3407, 1.0
  %v3409 = vrcp.pop %v3408
  %v3410 = vmul.f32 %v3408, %v3409
  %v3411 = vsub.f32 1.0, %v3410
  %v3412 = vmul.f32 %v3409, %v3411
  %v3413 = vadd.f32 %v3409, %v3412
  %vm3414 = vweird.f32 %v3408
  %vm3415 = vweird.f32 %v3409
  %vm3416 = vmor %vm3414, %vm3415
  %v3417 = vsel %vm3416, %v3409, %v3413
  %v3418 = vand.u32 2147483647, %v3408
  %vm3419 = vcmp.eq.f32.partialorder %v3418, 8.507059e+37
  %v3420 = vand.u32 %v3408, 2147483648
  %v3421 = vor.u32 1.1754944e-38, %v3420
  %v3422 = vsel %vm3419, %v3421, %v3417
  %v3423 = vmul.f32 1.0, %v3422
  %v3424 = vtanh.pop %v3404
  %v3425 = vmul.f32 %v3423, %v3394
  %v3427 = vrot.slane %v3424, 2
  %v3429 = vmul.f32 %v3423, %v3427
  %v3431 = vrot.slane %v3429, 7
  %v3433 = vadd.f32 %v3425, %v3431
  %v3434 = vtanh.pop %v3433
  %v3436 = vrot.slane %v3434, 6
  %v3438 = vmul.f32 %v3423, %v3436
  %v3439 = vperm.slane %v3154, 3
  %v3440 = vmul.f32 %v3157, %v3439
  %v3441 = vperm.slane %v3438, 3
  %v3442 = vmul.f32 %v3162, %v3441
  %v3443 = vadd.f32 %v3440, %v3442
  %v3444 = vadd.f32 %v3443, %v3168
  %v3445 = vxor.u32 %v3444, 2147483648
  %v3446 = vmul.f32 %v3445, 1.442695
  %v3447 = vpow.pop %v3446
  %v3448 = vadd.f32 %v3447, 1.0
  %v3449 = vrcp.pop %v3448
  %v3450 = vmul.f32 %v3448, %v3449
  %v3451 = vsub.f32 1.0, %v3450
  %v3452 = vmul.f32 %v3449, %v3451
  %v3453 = vadd.f32 %v3449, %v3452
  %vm3454 = vweird.f32 %v3448
  %vm3455 = vweird.f32 %v3449
  %vm3456 = vmor %vm3454, %vm3455
  %v3457 = vsel %vm3456, %v3449, %v3453
  %v3458 = vand.u32 2147483647, %v3448
  %vm3459 = vcmp.eq.f32.partialorder %v3458, 8.507059e+37
  %v3460 = vand.u32 %v3448, 2147483648
  %v3461 = vor.u32 1.1754944e-38, %v3460
  %v3462 = vsel %vm3459, %v3461, %v3457
  %v3463 = vmul.f32 1.0, %v3462
  %v3464 = vtanh.pop %v3444
  %v3465 = vmul.f32 %v3463, %v3433
  %v3467 = vrot.slane %v3464, 2
  %v3469 = vmul.f32 %v3463, %v3467
  %v3471 = vrot.slane %v3469, 7
  %v3473 = vadd.f32 %v3465, %v3471
  %v3474 = vtanh.pop %v3473
  %v3476 = vrot.slane %v3474, 6
  %v3478 = vmul.f32 %v3463, %v3476
  %v3480 = vrot.slane %v3204, 3
  %v3483 = vrot.slane %v3243, 2
  %v3486 = vrot.slane %v3282, 1
  %v3489 = vrot.slane %v3360, 7
  %v3492 = vrot.slane %v3399, 6
  %v3495 = vrot.slane %v3438, 5
  %v3498 = vrot.slane %v3478, 4
  %vm3500 = vcmask 1040384
  %v3501 = vsel %vm3500, %v3480, %v3483
  %vm3502 = vcmask 1041408
  %v3503 = vsel %vm3502, %v3501, %v3486
  %vm3504 = vcmask 1042432
  %v3505 = vsel %vm3504, %v3503, %v3321
  %vm3506 = vcmask 1043456
  %v3507 = vsel %vm3506, %v3505, %v3489
  %vm3508 = vcmask 1044480
  %v3509 = vsel %vm3508, %v3507, %v3492
  %vm3510 = vcmask 1045504
  %v3511 = vsel %vm3510, %v3509, %v3495
  %vm3512 = vcmask 1046528
  %v3513 = vsel %vm3512, %v3511, %v3498
  %v3514 = vxor.u32 %v3513, 2147483648
  %v3515 = vmul.f32 %v3514, 1.442695
  %v3516 = vpow.pop %v3515
  %v3517 = vadd.f32 %v3516, 1.0
  %v3518 = vrcp.pop %v3517
  %v3519 = vmul.f32 %v3517, %v3518
  %v3520 = vsub.f32 1.0, %v3519
  %v3521 = vmul.f32 %v3518, %v3520
  %v3522 = vadd.f32 %v3518, %v3521
  %vm3523 = vweird.f32 %v3517
  %vm3524 = vweird.f32 %v3518
  %vm3525 = vmor %vm3523, %vm3524
  %v3526 = vsel %vm3525, %v3518, %v3522
  %v3527 = vand.u32 2147483647, %v3517
  %vm3528 = vcmp.eq.f32.partialorder %v3527, 8.507059e+37
  %v3529 = vand.u32 %v3517, 2147483648
  %v3530 = vor.u32 1.1754944e-38, %v3529
  %v3531 = vsel %vm3528, %v3530, %v3526
  %v3532 = vmul.f32 1.0, %v3531
  %v3533 = vmul.f32 %v3532, 60.0
  %vm3534 = vcmask 15360
  %3535 = vst.msk [vmem:[%s5] sm:$0xff] %vm3534, %v3533
  // Predicated region
  $region22: #{tpu_custom_call.1} parent=0 // pred_check
    _
  $region23: #{tpu_custom_call.1} parent=0 // pred_check_branch
    %3537 = sbr.rel (0) target = $region25
  $region24: #{tpu_custom_call.1} parent=0 // pred_region
    _
  $region25: #{tpu_custom_call.1} parent=0 // pred_fallthru
    _
  // Predicated region
  $region26: #{tpu_custom_call.1} parent=0 // pred_check
    _
  $region27: #{tpu_custom_call.1} parent=0 // pred_check_branch
    %3539 = sbr.rel (0) target = $region29
  $region28: #{tpu_custom_call.1} parent=0 // pred_region
    _
  $region29: #{tpu_custom_call.1} parent=0 // pred_fallthru
    _

</llo_original>
